<compile_context>
chip_gen: v7x
topology: tpu7x:2x2x1
jax: 0.10.0
libtpu: 0.0.40
codegen_flags: <defaults>
</compile_context>

<pallas_src>
import functools

import jax
import jax.numpy as jnp
from jax import lax
from jax.experimental import pallas as pl
from jax.experimental.pallas import tpu as pltpu


# ----------------------------- fused block kernel ----------------------------

def _make_block_kernel(stride, has_shortcut, H, W, Cin, Cout):
    """Builds a fused WRN basic-block kernel (one batch element per grid step)."""
    s = stride
    Ho, Wo = H // s, W // s
    Hp, Wp = Ho + 2, Wo + 2          # per-phase padded scratch extent
    ssq = s * s

    # Map a 3x3 tap index k (0..2) to (phase, window offset) in the polyphase
    # padded scratch:  a_pad[s*i + k] == phase_p[off + i]  (zero on the border).
    def _tap(k):
        p = (k - 1) % s
        off = 1 + (k - 1 - p) // s
        return p, off

    taps = []
    for kh in range(3):
        ph, oh = _tap(kh)
        for kw in range(3):
            pw, ow = _tap(kw)
            taps.append((ph * s + pw, oh, ow))

    def kernel(*refs):
        if has_shortcut:
            (x_ref, s1_ref, b1_ref, w1_ref, s2_ref, b2_ref, w2_ref, wsc_ref,
             o_ref, apad_ref, hpad_ref) = refs
        else:
            (x_ref, s1_ref, b1_ref, w1_ref, s2_ref, b2_ref, w2_ref,
             o_ref, apad_ref, hpad_ref) = refs
            wsc_ref = None

        f32, bf16 = jnp.float32, jnp.bfloat16
        scale1, shift1 = s1_ref[...], b1_ref[...]           # (1, Cin)  f32
        scale2, shift2 = s2_ref[...], b2_ref[...]           # (1, Cout) f32

        # ---- BN1 + ReLU (fused), stored into the zero-padded polyphase scratch ---
        apad_ref[...] = jnp.zeros(apad_ref.shape, apad_ref.dtype)
        for p in range(ssq):
            xp = x_ref[0, p * Ho:(p + 1) * Ho, :, :]        # (Ho, Wo, Cin)
            a = jnp.maximum(xp * scale1 + shift1, 0.0)
            apad_ref[p * Hp + 1:p * Hp + 1 + Ho, 1:1 + Wo, :] = a

        # ---- conv1 (3x3, stride s) as a single im2col matmul (MXU, bf16 in / f32 acc)
        cols = []
        for (plane, oh, ow) in taps:
            r0 = plane * Hp + oh
            t = apad_ref[r0:r0 + Ho, ow:ow + Wo, :]         # (Ho, Wo, Cin)
            cols.append(t.reshape(Ho * Wo, Cin))
        pm1 = jnp.concatenate(cols, axis=1)                 # (Ho*Wo, 9*Cin) f32
        y1 = jnp.dot(pm1.astype(bf16), w1_ref[...],
                     preferred_element_type=f32)            # (Ho*Wo, Cout)  f32

        # ---- BN2 + ReLU (fused).  drop_rate == 0.0 -> dropout is identity. ----
        h = jnp.maximum(y1 * scale2 + shift2, 0.0)

        # ---- conv2 (3x3, stride 1) as a single im2col matmul ----
        hpad_ref[...] = jnp.zeros(hpad_ref.shape, hpad_ref.dtype)
        hpad_ref[1:1 + Ho, 1:1 + Wo, :] = h.reshape(Ho, Wo, Cout)
        cols = []
        for k in range(9):
            kh, kw = k // 3, k % 3
            t = hpad_ref[kh:kh + Ho, kw:kw + Wo, :]         # (Ho, Wo, Cout)
            cols.append(t.reshape(Ho * Wo, Cout))
        pm2 = jnp.concatenate(cols, axis=1)                 # (Ho*Wo, 9*Cout) f32
        y2 = jnp.dot(pm2.astype(bf16), w2_ref[...],
                     preferred_element_type=f32)            # (Ho*Wo, Cout)  f32

        # ---- residual (fused shortcut) ----
        if has_shortcut:
            # 1x1 stride-s shortcut conv on relu(bn1(x)) == phase (0,0) of `a`.
            a0 = apad_ref[1:1 + Ho, 1:1 + Wo, :].reshape(Ho * Wo, Cin)
            res = jnp.dot(a0.astype(bf16), wsc_ref[...],
                          preferred_element_type=f32)       # (Ho*Wo, Cout)
        else:
            # identity shortcut (in_planes == out_planes, stride 1): original x.
            res = x_ref[0].reshape(Ho * Wo, Cin)

        o_ref[0] = (y2 + res).reshape(Ho, Wo, Cout).astype(o_ref.dtype)

    return kernel


# ------------------------------ block wrapper --------------------------------

def wrn_basic_block(x, p, stride):
    """One fused WRN basic block. x: (N, H, W, Cin) NHWC -> (N, H/s, W/s, Cout)."""
    N, H, W, Cin = x.shape
    Cout = p["conv1_w"].shape[-1]
    equal = (Cin == Cout)                       # matches PyTorch self.equalInOut
    has_shortcut = not equal
    s = stride
    assert H % s == 0 and W % s == 0
    assert not (equal and s != 1), "identity shortcut with stride>1 unsupported (as in PyTorch)"
    Ho, Wo = H // s, W // s
    ssq = s * s
    bf16 = jnp.bfloat16

    # Polyphase decomposition so the strided conv is computed directly at output
    # resolution with only static unit-stride slices inside the kernel.
    if s == 1:
        xph = x                                                   # (N, H, W, Cin)
    else:
        xph = jnp.concatenate(
            [x[:, i::s, j::s, :] for i in range(s) for j in range(s)], axis=1
        )                                                         # (N, s*s*Ho, Wo, Cin)

    s1 = p["bn1_scale"].reshape(1, Cin)
    b1 = p["bn1_shift"].reshape(1, Cin)
    w1 = p["conv1_w"].reshape(9 * Cin, Cout).astype(bf16)         # im2col weight layout
    s2 = p["bn2_scale"].reshape(1, Cout)
    b2 = p["bn2_shift"].reshape(1, Cout)
    w2 = p["conv2_w"].reshape(9 * Cout, Cout).astype(bf16)

    args = [xph, s1, b1, w1, s2, b2, w2]
    in_specs = [
        pl.BlockSpec((1, ssq * Ho, Wo, Cin), lambda n: (n, 0, 0, 0)),
        pl.BlockSpec((1, Cin), lambda n: (0, 0)),
        pl.BlockSpec((1, Cin), lambda n: (0, 0)),
        pl.BlockSpec((9 * Cin, Cout), lambda n: (0, 0)),
        pl.BlockSpec((1, Cout), lambda n: (0, 0)),
        pl.BlockSpec((1, Cout), lambda n: (0, 0)),
        pl.BlockSpec((9 * Cout, Cout), lambda n: (0, 0)),
    ]
    if has_shortcut:
        args.append(p["shortcut_w"].astype(bf16))
        in_specs.append(pl.BlockSpec((Cin, Cout), lambda n: (0, 0)))

    kernel = _make_block_kernel(s, has_shortcut, H, W, Cin, Cout)

    # NOTE: for production WRN sizes, additionally tile H into halo'd row strips
    # (second "parallel" grid axis) so both v7x TensorCores get work and blocks
    # stay within its 64 MiB VMEM; at these demo sizes a whole image fits easily.
    return pl.pallas_call(
        kernel,
        grid=(N,),
        in_specs=in_specs,
        out_specs=pl.BlockSpec((1, Ho, Wo, Cout), lambda n: (n, 0, 0, 0)),
        out_shape=jax.ShapeDtypeStruct((N, Ho, Wo, Cout), x.dtype),
        scratch_shapes=[
            pltpu.VMEM((ssq * (Ho + 2), Wo + 2, Cin), jnp.float32),   # zero-padded a (polyphase)
            pltpu.VMEM((Ho + 2, Wo + 2, Cout), jnp.float32),          # zero-padded h
        ],
        compiler_params=pltpu.CompilerParams(
            dimension_semantics=("parallel",),
            vmem_limit_bytes=32 * 1024 * 1024,
        ),
    )(*args)


def wrn_network_block(x_nchw, params, stride):
    """x_nchw: (N, C, H, W) as in PyTorch. Returns NCHW output."""
    x = jnp.transpose(x_nchw, (0, 2, 3, 1))          # NCHW -> NHWC
    for i, p in enumerate(params):
        x = wrn_basic_block(x, p, stride if i == 0 else 1)
    return jnp.transpose(x, (0, 3, 1, 2))            # NHWC -> NCHW


# ----------------------- pure-XLA reference (same bf16 feeds) -----------------

def _ref_basic_block(x, p, stride):
    bf16, f32 = jnp.bfloat16, jnp.float32
    Cin, Cout = x.shape[-1], p["conv1_w"].shape[-1]
    dn = ("NHWC", "HWIO", "NHWC")
    a = jnp.maximum(x * p["bn1_scale"] + p["bn1_shift"], 0.0)
    y1 = lax.conv_general_dilated(a.astype(bf16), p["conv1_w"].astype(bf16),
                                  (stride, stride), ((1, 1), (1, 1)),
                                  dimension_numbers=dn, preferred_element_type=f32)
    h = jnp.maximum(y1 * p["bn2_scale"] + p["bn2_shift"], 0.0)
    y2 = lax.conv_general_dilated(h.astype(bf16), p["conv2_w"].astype(bf16),
                                  (1, 1), ((1, 1), (1, 1)),
                                  dimension_numbers=dn, preferred_element_type=f32)
    if Cin == Cout:
        res = x
    else:
        wsc = p["shortcut_w"].reshape(1, 1, Cin, Cout).astype(bf16)
        res = lax.conv_general_dilated(a.astype(bf16), wsc,
                                       (stride, stride), ((0, 0), (0, 0)),
                                       dimension_numbers=dn, preferred_element_type=f32)
    return y2 + res


def ref_network_block(x_nchw, params, stride):
    x = jnp.transpose(x_nchw, (0, 2, 3, 1))
    for i, p in enumerate(params):
        x = _ref_basic_block(x, p, stride if i == 0 else 1)
    return jnp.transpose(x, (0, 3, 1, 2))


# --------------------------- deterministic params ----------------------------

def _make_bn(key, c):
    k1, k2, k3, k4 = jax.random.split(key, 4)
    gamma = 1.0 + 0.1 * jax.random.normal(k1, (c,), jnp.float32)
    beta = 0.1 * jax.random.normal(k2, (c,), jnp.float32)
    mean = 0.1 * jax.random.normal(k3, (c,), jnp.float32)
    var = jax.random.uniform(k4, (c,), jnp.float32, 0.5, 1.5)
    eps = 1e-5
    scale = gamma / jnp.sqrt(var + eps)
    shift = beta - mean * scale
    return scale, shift


def _make_block_params(key, cin, cout):
    keys = jax.random.split(key, 5)
    p = {}
    p["bn1_scale"], p["bn1_shift"] = _make_bn(keys[0], cin)
    p["conv1_w"] = 0.1 * jax.random.normal(keys[1], (3, 3, cin, cout), jnp.float32)
    p["bn2_scale"], p["bn2_shift"] = _make_bn(keys[2], cout)
    p["conv2_w"] = 0.1 * jax.random.normal(keys[3], (3, 3, cout, cout), jnp.float32)
    if cin != cout:
        p["shortcut_w"] = 0.1 * jax.random.normal(keys[4], (cin, cout), jnp.float32)
    return p


def make_network_block_params(key, nb_layers, in_planes, out_planes):
    keys = jax.random.split(key, nb_layers)
    return [
        _make_block_params(keys[i], in_planes if i == 0 else out_planes, out_planes)
        for i in range(nb_layers)
    ]


# ----------------------------------- main ------------------------------------

if __name__ == "__main__":
    key = jax.random.PRNGKey(0)
    kx, kp = jax.random.split(key)

    # WRN_NetworkBlock(nb_layers=2, in_planes=8, out_planes=16, block=BasicBlock, stride=2)
    N, Cin, H, W = 2, 8, 16, 16
    Cout, nb_layers, stride = 16, 2, 2

    x = jax.random.normal(kx, (N, Cin, H, W), jnp.float32)   # NCHW like PyTorch
    params = make_network_block_params(kp, nb_layers, Cin, Cout)

    fwd = jax.jit(functools.partial(wrn_network_block, stride=stride))
    out = jax.block_until_ready(fwd(x, params))
    assert out.shape == (N, Cout, H // stride, W // stride), out.shape
    assert bool(jnp.all(jnp.isfinite(out)))

    # Cross-check against a pure-XLA reference that feeds the MXU the same bf16 operands.
    ref = jax.block_until_ready(ref_network_block(x, params, stride))
    max_err = float(jnp.max(jnp.abs(out - ref)))
    assert jnp.allclose(out, ref, atol=2e-2, rtol=2e-2), max_err

    print("KERNEL_OK")
</pallas_src>

<mosaic_0001>
module attributes {stable_mosaic.version = 11 : i64} {
  func.func @kernel(%arg0: i32, %arg1: memref<1x32x8x8xf32, #tpu.memory_space<vmem>>, %arg2: memref<1x8xf32, #tpu.memory_space<vmem>>, %arg3: memref<1x8xf32, #tpu.memory_space<vmem>>, %arg4: memref<72x16xbf16, #tpu.memory_space<vmem>>, %arg5: memref<1x16xf32, #tpu.memory_space<vmem>>, %arg6: memref<1x16xf32, #tpu.memory_space<vmem>>, %arg7: memref<144x16xbf16, #tpu.memory_space<vmem>>, %arg8: memref<8x16xbf16, #tpu.memory_space<vmem>>, %arg9: memref<1x8x8x16xf32, #tpu.memory_space<vmem>>, %arg10: memref<40x10x8xf32, #tpu.memory_space<vmem>>, %arg11: memref<10x10x16xf32, #tpu.memory_space<vmem>>) attributes {dimension_semantics = [#tpu.dimension_semantics<parallel>], iteration_bounds = array<i64: 2>, scalar_prefetch = 0 : i64, scratch_operands = 2 : i64, tpu.core_type = #tpu.core_type<tc>, window_params = [{transform_indices = @transform_0, window_bounds = array<i64: 1, 32, 8, 8>}, {pipeline_mode = #tpu.pipeline_mode<synchronous>, transform_indices = @transform_1, window_bounds = array<i64: 1, 8>}, {pipeline_mode = #tpu.pipeline_mode<synchronous>, transform_indices = @transform_2, window_bounds = array<i64: 1, 8>}, {pipeline_mode = #tpu.pipeline_mode<synchronous>, transform_indices = @transform_3, window_bounds = array<i64: 72, 16>}, {pipeline_mode = #tpu.pipeline_mode<synchronous>, transform_indices = @transform_4, window_bounds = array<i64: 1, 16>}, {pipeline_mode = #tpu.pipeline_mode<synchronous>, transform_indices = @transform_5, window_bounds = array<i64: 1, 16>}, {pipeline_mode = #tpu.pipeline_mode<synchronous>, transform_indices = @transform_6, window_bounds = array<i64: 144, 16>}, {pipeline_mode = #tpu.pipeline_mode<synchronous>, transform_indices = @transform_7, window_bounds = array<i64: 8, 16>}, {transform_indices = @transform_8, window_bounds = array<i64: 1, 8, 8, 16>}]} {
    %c0 = arith.constant 0 : index
    %c0_0 = arith.constant 0 : index
    %0 = vector.load %arg2[%c0, %c0_0] : memref<1x8xf32, #tpu.memory_space<vmem>>, vector<1x8xf32>
    %c0_1 = arith.constant 0 : index
    %c0_2 = arith.constant 0 : index
    %1 = vector.load %arg3[%c0_1, %c0_2] : memref<1x8xf32, #tpu.memory_space<vmem>>, vector<1x8xf32>
    %c0_3 = arith.constant 0 : index
    %c0_4 = arith.constant 0 : index
    %2 = vector.load %arg5[%c0_3, %c0_4] : memref<1x16xf32, #tpu.memory_space<vmem>>, vector<1x16xf32>
    %c0_5 = arith.constant 0 : index
    %c0_6 = arith.constant 0 : index
    %3 = vector.load %arg6[%c0_5, %c0_6] : memref<1x16xf32, #tpu.memory_space<vmem>>, vector<1x16xf32>
    %cst = arith.constant 0.000000e+00 : f32
    %4 = vector.broadcast %cst : f32 to vector<40x10x8xf32>
    %c0_7 = arith.constant 0 : index
    %c0_8 = arith.constant 0 : index
    %c0_9 = arith.constant 0 : index
    %5 = vector.load %arg10[%c0_7, %c0_8, %c0_9] : memref<40x10x8xf32, #tpu.memory_space<vmem>>, vector<40x10x8xf32>
    tpu.vector_store %arg10[%c0_7, %c0_8, %c0_9], %4 {strides = array<i32>} : memref<40x10x8xf32, #tpu.memory_space<vmem>>, vector<40x10x8xf32>,
    %c0_10 = arith.constant 0 : index
    %c0_11 = arith.constant 0 : index
    %c0_12 = arith.constant 0 : index
    %c0_13 = arith.constant 0 : index
    %6 = vector.load %arg1[%c0_10, %c0_11, %c0_12, %c0_13] : memref<1x32x8x8xf32, #tpu.memory_space<vmem>>, vector<1x8x8x8xf32>
    %7 = vector.shape_cast %6 : vector<1x8x8x8xf32> to vector<8x8x8xf32>
    %8 = vector.shape_cast %0 : vector<1x8xf32> to vector<1x1x8xf32>
    %9 = vector.broadcast %8 : vector<1x1x8xf32> to vector<8x8x8xf32>
    %10 = arith.mulf %7, %9 : vector<8x8x8xf32>
    %11 = vector.shape_cast %1 : vector<1x8xf32> to vector<1x1x8xf32>
    %12 = vector.broadcast %11 : vector<1x1x8xf32> to vector<8x8x8xf32>
    %13 = arith.addf %10, %12 : vector<8x8x8xf32>
    %cst_14 = arith.constant 0.000000e+00 : f32
    %14 = vector.broadcast %cst_14 : f32 to vector<8x8x8xf32>
    %15 = arith.maximumf %13, %14 : vector<8x8x8xf32>
    %c1 = arith.constant 1 : index
    %c1_15 = arith.constant 1 : index
    %c0_16 = arith.constant 0 : index
    %16 = vector.load %arg10[%c1, %c1_15, %c0_16] : memref<40x10x8xf32, #tpu.memory_space<vmem>>, vector<8x8x8xf32>
    tpu.vector_store %arg10[%c1, %c1_15, %c0_16], %15 {strides = array<i32>} : memref<40x10x8xf32, #tpu.memory_space<vmem>>, vector<8x8x8xf32>,
    %c0_17 = arith.constant 0 : index
    %c8 = arith.constant 8 : index
    %c0_18 = arith.constant 0 : index
    %c0_19 = arith.constant 0 : index
    %17 = vector.load %arg1[%c0_17, %c8, %c0_18, %c0_19] : memref<1x32x8x8xf32, #tpu.memory_space<vmem>>, vector<1x8x8x8xf32>
    %18 = vector.shape_cast %17 : vector<1x8x8x8xf32> to vector<8x8x8xf32>
    %19 = vector.shape_cast %0 : vector<1x8xf32> to vector<1x1x8xf32>
    %20 = vector.broadcast %19 : vector<1x1x8xf32> to vector<8x8x8xf32>
    %21 = arith.mulf %18, %20 : vector<8x8x8xf32>
    %22 = vector.shape_cast %1 : vector<1x8xf32> to vector<1x1x8xf32>
    %23 = vector.broadcast %22 : vector<1x1x8xf32> to vector<8x8x8xf32>
    %24 = arith.addf %21, %23 : vector<8x8x8xf32>
    %cst_20 = arith.constant 0.000000e+00 : f32
    %25 = vector.broadcast %cst_20 : f32 to vector<8x8x8xf32>
    %26 = arith.maximumf %24, %25 : vector<8x8x8xf32>
    %c11 = arith.constant 11 : index
    %c1_21 = arith.constant 1 : index
    %c0_22 = arith.constant 0 : index
    %27 = vector.load %arg10[%c11, %c1_21, %c0_22] : memref<40x10x8xf32, #tpu.memory_space<vmem>>, vector<8x8x8xf32>
    tpu.vector_store %arg10[%c11, %c1_21, %c0_22], %26 {strides = array<i32>} : memref<40x10x8xf32, #tpu.memory_space<vmem>>, vector<8x8x8xf32>,
    %c0_23 = arith.constant 0 : index
    %c16 = arith.constant 16 : index
    %c0_24 = arith.constant 0 : index
    %c0_25 = arith.constant 0 : index
    %28 = vector.load %arg1[%c0_23, %c16, %c0_24, %c0_25] : memref<1x32x8x8xf32, #tpu.memory_space<vmem>>, vector<1x8x8x8xf32>
    %29 = vector.shape_cast %28 : vector<1x8x8x8xf32> to vector<8x8x8xf32>
    %30 = vector.shape_cast %0 : vector<1x8xf32> to vector<1x1x8xf32>
    %31 = vector.broadcast %30 : vector<1x1x8xf32> to vector<8x8x8xf32>
    %32 = arith.mulf %29, %31 : vector<8x8x8xf32>
    %33 = vector.shape_cast %1 : vector<1x8xf32> to vector<1x1x8xf32>
    %34 = vector.broadcast %33 : vector<1x1x8xf32> to vector<8x8x8xf32>
    %35 = arith.addf %32, %34 : vector<8x8x8xf32>
    %cst_26 = arith.constant 0.000000e+00 : f32
    %36 = vector.broadcast %cst_26 : f32 to vector<8x8x8xf32>
    %37 = arith.maximumf %35, %36 : vector<8x8x8xf32>
    %c21 = arith.constant 21 : index
    %c1_27 = arith.constant 1 : index
    %c0_28 = arith.constant 0 : index
    %38 = vector.load %arg10[%c21, %c1_27, %c0_28] : memref<40x10x8xf32, #tpu.memory_space<vmem>>, vector<8x8x8xf32>
    tpu.vector_store %arg10[%c21, %c1_27, %c0_28], %37 {strides = array<i32>} : memref<40x10x8xf32, #tpu.memory_space<vmem>>, vector<8x8x8xf32>,
    %c0_29 = arith.constant 0 : index
    %c24 = arith.constant 24 : index
    %c0_30 = arith.constant 0 : index
    %c0_31 = arith.constant 0 : index
    %39 = vector.load %arg1[%c0_29, %c24, %c0_30, %c0_31] : memref<1x32x8x8xf32, #tpu.memory_space<vmem>>, vector<1x8x8x8xf32>
    %40 = vector.shape_cast %39 : vector<1x8x8x8xf32> to vector<8x8x8xf32>
    %41 = vector.shape_cast %0 : vector<1x8xf32> to vector<1x1x8xf32>
    %42 = vector.broadcast %41 : vector<1x1x8xf32> to vector<8x8x8xf32>
    %43 = arith.mulf %40, %42 : vector<8x8x8xf32>
    %44 = vector.shape_cast %1 : vector<1x8xf32> to vector<1x1x8xf32>
    %45 = vector.broadcast %44 : vector<1x1x8xf32> to vector<8x8x8xf32>
    %46 = arith.addf %43, %45 : vector<8x8x8xf32>
    %cst_32 = arith.constant 0.000000e+00 : f32
    %47 = vector.broadcast %cst_32 : f32 to vector<8x8x8xf32>
    %48 = arith.maximumf %46, %47 : vector<8x8x8xf32>
    %c31 = arith.constant 31 : index
    %c1_33 = arith.constant 1 : index
    %c0_34 = arith.constant 0 : index
    %49 = vector.load %arg10[%c31, %c1_33, %c0_34] : memref<40x10x8xf32, #tpu.memory_space<vmem>>, vector<8x8x8xf32>
    tpu.vector_store %arg10[%c31, %c1_33, %c0_34], %48 {strides = array<i32>} : memref<40x10x8xf32, #tpu.memory_space<vmem>>, vector<8x8x8xf32>,
    %c30 = arith.constant 30 : index
    %c0_35 = arith.constant 0 : index
    %c0_36 = arith.constant 0 : index
    %50 = vector.load %arg10[%c30, %c0_35, %c0_36] : memref<40x10x8xf32, #tpu.memory_space<vmem>>, vector<8x8x8xf32>
    %51 = vector.shape_cast %50 : vector<8x8x8xf32> to vector<64x8xf32>
    %c20 = arith.constant 20 : index
    %c1_37 = arith.constant 1 : index
    %c0_38 = arith.constant 0 : index
    %52 = vector.load %arg10[%c20, %c1_37, %c0_38] : memref<40x10x8xf32, #tpu.memory_space<vmem>>, vector<8x8x8xf32>
    %53 = vector.shape_cast %52 : vector<8x8x8xf32> to vector<64x8xf32>
    %c30_39 = arith.constant 30 : index
    %c1_40 = arith.constant 1 : index
    %c0_41 = arith.constant 0 : index
    %54 = vector.load %arg10[%c30_39, %c1_40, %c0_41] : memref<40x10x8xf32, #tpu.memory_space<vmem>>, vector<8x8x8xf32>
    %55 = vector.shape_cast %54 : vector<8x8x8xf32> to vector<64x8xf32>
    %c11_42 = arith.constant 11 : index
    %c0_43 = arith.constant 0 : index
    %c0_44 = arith.constant 0 : index
    %56 = vector.load %arg10[%c11_42, %c0_43, %c0_44] : memref<40x10x8xf32, #tpu.memory_space<vmem>>, vector<8x8x8xf32>
    %57 = vector.shape_cast %56 : vector<8x8x8xf32> to vector<64x8xf32>
    %c1_45 = arith.constant 1 : index
    %c1_46 = arith.constant 1 : index
    %c0_47 = arith.constant 0 : index
    %58 = vector.load %arg10[%c1_45, %c1_46, %c0_47] : memref<40x10x8xf32, #tpu.memory_space<vmem>>, vector<8x8x8xf32>
    %59 = vector.shape_cast %58 : vector<8x8x8xf32> to vector<64x8xf32>
    %c11_48 = arith.constant 11 : index
    %c1_49 = arith.constant 1 : index
    %c0_50 = arith.constant 0 : index
    %60 = vector.load %arg10[%c11_48, %c1_49, %c0_50] : memref<40x10x8xf32, #tpu.memory_space<vmem>>, vector<8x8x8xf32>
    %61 = vector.shape_cast %60 : vector<8x8x8xf32> to vector<64x8xf32>
    %c31_51 = arith.constant 31 : index
    %c0_52 = arith.constant 0 : index
    %c0_53 = arith.constant 0 : index
    %62 = vector.load %arg10[%c31_51, %c0_52, %c0_53] : memref<40x10x8xf32, #tpu.memory_space<vmem>>, vector<8x8x8xf32>
    %63 = vector.shape_cast %62 : vector<8x8x8xf32> to vector<64x8xf32>
    %c21_54 = arith.constant 21 : index
    %c1_55 = arith.constant 1 : index
    %c0_56 = arith.constant 0 : index
    %64 = vector.load %arg10[%c21_54, %c1_55, %c0_56] : memref<40x10x8xf32, #tpu.memory_space<vmem>>, vector<8x8x8xf32>
    %65 = vector.shape_cast %64 : vector<8x8x8xf32> to vector<64x8xf32>
    %c31_57 = arith.constant 31 : index
    %c1_58 = arith.constant 1 : index
    %c0_59 = arith.constant 0 : index
    %66 = vector.load %arg10[%c31_57, %c1_58, %c0_59] : memref<40x10x8xf32, #tpu.memory_space<vmem>>, vector<8x8x8xf32>
    %67 = vector.shape_cast %66 : vector<8x8x8xf32> to vector<64x8xf32>
    %68 = tpu.concatenate %51, %53, %55, %57, %59, %61, %63, %65, %67 in 1 : vector<64x8xf32>, vector<64x8xf32>, vector<64x8xf32>, vector<64x8xf32>, vector<64x8xf32>, vector<64x8xf32>, vector<64x8xf32>, vector<64x8xf32>, vector<64x8xf32> -> vector<64x72xf32>
    %69 = arith.truncf %68 : vector<64x72xf32> to vector<64x72xbf16>
    %c0_60 = arith.constant 0 : index
    %c0_61 = arith.constant 0 : index
    %70 = vector.load %arg4[%c0_60, %c0_61] : memref<72x16xbf16, #tpu.memory_space<vmem>>, vector<72x16xbf16>
    %cst_62 = arith.constant dense<0.000000e+00> : vector<64x16xf32>
    %71 = tpu.matmul %69, %70, %cst_62 {dimension_numbers = #tpu.dot_dimension_numbers<[1], [0], [0], [1], [0, 0, 1, 1], [], []>} : vector<64x72xbf16>, vector<72x16xbf16>, vector<64x16xf32> -> vector<64x16xf32>
    %72 = vector.broadcast %2 : vector<1x16xf32> to vector<64x16xf32>
    %73 = arith.mulf %71, %72 : vector<64x16xf32>
    %74 = vector.broadcast %3 : vector<1x16xf32> to vector<64x16xf32>
    %75 = arith.addf %73, %74 : vector<64x16xf32>
    %cst_63 = arith.constant 0.000000e+00 : f32
    %76 = vector.broadcast %cst_63 : f32 to vector<64x16xf32>
    %77 = arith.maximumf %75, %76 : vector<64x16xf32>
    %cst_64 = arith.constant 0.000000e+00 : f32
    %78 = vector.broadcast %cst_64 : f32 to vector<10x10x16xf32>
    %c0_65 = arith.constant 0 : index
    %c0_66 = arith.constant 0 : index
    %c0_67 = arith.constant 0 : index
    %79 = vector.load %arg11[%c0_65, %c0_66, %c0_67] : memref<10x10x16xf32, #tpu.memory_space<vmem>>, vector<10x10x16xf32>
    tpu.vector_store %arg11[%c0_65, %c0_66, %c0_67], %78 {strides = array<i32>} : memref<10x10x16xf32, #tpu.memory_space<vmem>>, vector<10x10x16xf32>,
    %80 = vector.shape_cast %77 : vector<64x16xf32> to vector<8x8x16xf32>
    %c1_68 = arith.constant 1 : index
    %c1_69 = arith.constant 1 : index
    %c0_70 = arith.constant 0 : index
    %81 = vector.load %arg11[%c1_68, %c1_69, %c0_70] : memref<10x10x16xf32, #tpu.memory_space<vmem>>, vector<8x8x16xf32>
    tpu.vector_store %arg11[%c1_68, %c1_69, %c0_70], %80 {strides = array<i32>} : memref<10x10x16xf32, #tpu.memory_space<vmem>>, vector<8x8x16xf32>,
    %c0_71 = arith.constant 0 : index
    %c0_72 = arith.constant 0 : index
    %c0_73 = arith.constant 0 : index
    %82 = vector.load %arg11[%c0_71, %c0_72, %c0_73] : memref<10x10x16xf32, #tpu.memory_space<vmem>>, vector<8x8x16xf32>
    %83 = vector.shape_cast %82 : vector<8x8x16xf32> to vector<64x16xf32>
    %c0_74 = arith.constant 0 : index
    %c1_75 = arith.constant 1 : index
    %c0_76 = arith.constant 0 : index
    %84 = vector.load %arg11[%c0_74, %c1_75, %c0_76] : memref<10x10x16xf32, #tpu.memory_space<vmem>>, vector<8x8x16xf32>
    %85 = vector.shape_cast %84 : vector<8x8x16xf32> to vector<64x16xf32>
    %c0_77 = arith.constant 0 : index
    %c2 = arith.constant 2 : index
    %c0_78 = arith.constant 0 : index
    %86 = vector.load %arg11[%c0_77, %c2, %c0_78] : memref<10x10x16xf32, #tpu.memory_space<vmem>>, vector<8x8x16xf32>
    %87 = vector.shape_cast %86 : vector<8x8x16xf32> to vector<64x16xf32>
    %c1_79 = arith.constant 1 : index
    %c0_80 = arith.constant 0 : index
    %c0_81 = arith.constant 0 : index
    %88 = vector.load %arg11[%c1_79, %c0_80, %c0_81] : memref<10x10x16xf32, #tpu.memory_space<vmem>>, vector<8x8x16xf32>
    %89 = vector.shape_cast %88 : vector<8x8x16xf32> to vector<64x16xf32>
    %c1_82 = arith.constant 1 : index
    %c1_83 = arith.constant 1 : index
    %c0_84 = arith.constant 0 : index
    %90 = vector.load %arg11[%c1_82, %c1_83, %c0_84] : memref<10x10x16xf32, #tpu.memory_space<vmem>>, vector<8x8x16xf32>
    %91 = vector.shape_cast %90 : vector<8x8x16xf32> to vector<64x16xf32>
    %c1_85 = arith.constant 1 : index
    %c2_86 = arith.constant 2 : index
    %c0_87 = arith.constant 0 : index
    %92 = vector.load %arg11[%c1_85, %c2_86, %c0_87] : memref<10x10x16xf32, #tpu.memory_space<vmem>>, vector<8x8x16xf32>
    %93 = vector.shape_cast %92 : vector<8x8x16xf32> to vector<64x16xf32>
    %c2_88 = arith.constant 2 : index
    %c0_89 = arith.constant 0 : index
    %c0_90 = arith.constant 0 : index
    %94 = vector.load %arg11[%c2_88, %c0_89, %c0_90] : memref<10x10x16xf32, #tpu.memory_space<vmem>>, vector<8x8x16xf32>
    %95 = vector.shape_cast %94 : vector<8x8x16xf32> to vector<64x16xf32>
    %c2_91 = arith.constant 2 : index
    %c1_92 = arith.constant 1 : index
    %c0_93 = arith.constant 0 : index
    %96 = vector.load %arg11[%c2_91, %c1_92, %c0_93] : memref<10x10x16xf32, #tpu.memory_space<vmem>>, vector<8x8x16xf32>
    %97 = vector.shape_cast %96 : vector<8x8x16xf32> to vector<64x16xf32>
    %c2_94 = arith.constant 2 : index
    %c2_95 = arith.constant 2 : index
    %c0_96 = arith.constant 0 : index
    %98 = vector.load %arg11[%c2_94, %c2_95, %c0_96] : memref<10x10x16xf32, #tpu.memory_space<vmem>>, vector<8x8x16xf32>
    %99 = vector.shape_cast %98 : vector<8x8x16xf32> to vector<64x16xf32>
    %100 = tpu.concatenate %83, %85, %87, %89, %91, %93, %95, %97, %99 in 1 : vector<64x16xf32>, vector<64x16xf32>, vector<64x16xf32>, vector<64x16xf32>, vector<64x16xf32>, vector<64x16xf32>, vector<64x16xf32>, vector<64x16xf32>, vector<64x16xf32> -> vector<64x144xf32>
    %101 = arith.truncf %100 : vector<64x144xf32> to vector<64x144xbf16>
    %c0_97 = arith.constant 0 : index
    %c0_98 = arith.constant 0 : index
    %102 = vector.load %arg7[%c0_97, %c0_98] : memref<144x16xbf16, #tpu.memory_space<vmem>>, vector<144x16xbf16>
    %cst_99 = arith.constant dense<0.000000e+00> : vector<64x16xf32>
    %103 = tpu.matmul %101, %102, %cst_99 {dimension_numbers = #tpu.dot_dimension_numbers<[1], [0], [0], [1], [0, 0, 1, 1], [], []>} : vector<64x144xbf16>, vector<144x16xbf16>, vector<64x16xf32> -> vector<64x16xf32>
    %c1_100 = arith.constant 1 : index
    %c1_101 = arith.constant 1 : index
    %c0_102 = arith.constant 0 : index
    %104 = vector.load %arg10[%c1_100, %c1_101, %c0_102] : memref<40x10x8xf32, #tpu.memory_space<vmem>>, vector<8x8x8xf32>
    %105 = vector.shape_cast %104 : vector<8x8x8xf32> to vector<64x8xf32>
    %106 = arith.truncf %105 : vector<64x8xf32> to vector<64x8xbf16>
    %c0_103 = arith.constant 0 : index
    %c0_104 = arith.constant 0 : index
    %107 = vector.load %arg8[%c0_103, %c0_104] : memref<8x16xbf16, #tpu.memory_space<vmem>>, vector<8x16xbf16>
    %cst_105 = arith.constant dense<0.000000e+00> : vector<64x16xf32>
    %108 = tpu.matmul %106, %107, %cst_105 {dimension_numbers = #tpu.dot_dimension_numbers<[1], [0], [0], [1], [0, 0, 1, 1], [], []>} : vector<64x8xbf16>, vector<8x16xbf16>, vector<64x16xf32> -> vector<64x16xf32>
    %109 = arith.addf %103, %108 : vector<64x16xf32>
    %110 = vector.shape_cast %109 : vector<64x16xf32> to vector<8x8x16xf32>
    %c0_106 = arith.constant 0 : index
    %c0_107 = arith.constant 0 : index
    %c0_108 = arith.constant 0 : index
    %c0_109 = arith.constant 0 : index
    %111 = vector.load %arg9[%c0_106, %c0_107, %c0_108, %c0_109] : memref<1x8x8x16xf32, #tpu.memory_space<vmem>>, vector<1x8x8x16xf32>
    %112 = vector.shape_cast %111 : vector<1x8x8x16xf32> to vector<8x8x16xf32>
    %113 = vector.shape_cast %110 : vector<8x8x16xf32> to vector<1x8x8x16xf32>
    tpu.vector_store %arg9[%c0_106, %c0_107, %c0_108, %c0_109], %113 {strides = array<i32>} : memref<1x8x8x16xf32, #tpu.memory_space<vmem>>, vector<1x8x8x16xf32>,
    return
  }
  func.func @transform_0(%arg0: i32) -> (i32, i32, i32, i32) {
    %c0_i32 = arith.constant 0 : i32
    %c0_i32_0 = arith.constant 0 : i32
    %c0_i32_1 = arith.constant 0 : i32
    %c0_i32_2 = arith.constant 0 : i32
    return %arg0, %c0_i32, %c0_i32_0, %c0_i32_1 : i32, i32, i32, i32
  }
  func.func @transform_1(%arg0: i32) -> (i32, i32) {
    %c0_i32 = arith.constant 0 : i32
    %c0_i32_0 = arith.constant 0 : i32
    %c0_i32_1 = arith.constant 0 : i32
    return %c0_i32, %c0_i32_0 : i32, i32
  }
  func.func @transform_2(%arg0: i32) -> (i32, i32) {
    %c0_i32 = arith.constant 0 : i32
    %c0_i32_0 = arith.constant 0 : i32
    %c0_i32_1 = arith.constant 0 : i32
    return %c0_i32, %c0_i32_0 : i32, i32
  }
  func.func @transform_3(%arg0: i32) -> (i32, i32) {
    %c0_i32 = arith.constant 0 : i32
    %c0_i32_0 = arith.constant 0 : i32
    %c0_i32_1 = arith.constant 0 : i32
    return %c0_i32, %c0_i32_0 : i32, i32
  }
  func.func @transform_4(%arg0: i32) -> (i32, i32) {
    %c0_i32 = arith.constant 0 : i32
    %c0_i32_0 = arith.constant 0 : i32
    %c0_i32_1 = arith.constant 0 : i32
    return %c0_i32, %c0_i32_0 : i32, i32
  }
  func.func @transform_5(%arg0: i32) -> (i32, i32) {
    %c0_i32 = arith.constant 0 : i32
    %c0_i32_0 = arith.constant 0 : i32
    %c0_i32_1 = arith.constant 0 : i32
    return %c0_i32, %c0_i32_0 : i32, i32
  }
  func.func @transform_6(%arg0: i32) -> (i32, i32) {
    %c0_i32 = arith.constant 0 : i32
    %c0_i32_0 = arith.constant 0 : i32
    %c0_i32_1 = arith.constant 0 : i32
    return %c0_i32, %c0_i32_0 : i32, i32
  }
  func.func @transform_7(%arg0: i32) -> (i32, i32) {
    %c0_i32 = arith.constant 0 : i32
    %c0_i32_0 = arith.constant 0 : i32
    %c0_i32_1 = arith.constant 0 : i32
    return %c0_i32, %c0_i32_0 : i32, i32
  }
  func.func @transform_8(%arg0: i32) -> (i32, i32, i32, i32) {
    %c0_i32 = arith.constant 0 : i32
    %c0_i32_0 = arith.constant 0 : i32
    %c0_i32_1 = arith.constant 0 : i32
    %c0_i32_2 = arith.constant 0 : i32
    return %arg0, %c0_i32, %c0_i32_0, %c0_i32_1 : i32, i32, i32, i32
  }
}

module attributes {stable_mosaic.version = 11 : i64} {
  func.func @kernel(%arg0: i32, %arg1: memref<1x8x8x16xf32, #tpu.memory_space<vmem>>, %arg2: memref<1x16xf32, #tpu.memory_space<vmem>>, %arg3: memref<1x16xf32, #tpu.memory_space<vmem>>, %arg4: memref<144x16xbf16, #tpu.memory_space<vmem>>, %arg5: memref<1x16xf32, #tpu.memory_space<vmem>>, %arg6: memref<1x16xf32, #tpu.memory_space<vmem>>, %arg7: memref<144x16xbf16, #tpu.memory_space<vmem>>, %arg8: memref<1x8x8x16xf32, #tpu.memory_space<vmem>>, %arg9: memref<10x10x16xf32, #tpu.memory_space<vmem>>, %arg10: memref<10x10x16xf32, #tpu.memory_space<vmem>>) attributes {dimension_semantics = [#tpu.dimension_semantics<parallel>], iteration_bounds = array<i64: 2>, scalar_prefetch = 0 : i64, scratch_operands = 2 : i64, tpu.core_type = #tpu.core_type<tc>, window_params = [{transform_indices = @transform_0, window_bounds = array<i64: 1, 8, 8, 16>}, {pipeline_mode = #tpu.pipeline_mode<synchronous>, transform_indices = @transform_1, window_bounds = array<i64: 1, 16>}, {pipeline_mode = #tpu.pipeline_mode<synchronous>, transform_indices = @transform_2, window_bounds = array<i64: 1, 16>}, {pipeline_mode = #tpu.pipeline_mode<synchronous>, transform_indices = @transform_3, window_bounds = array<i64: 144, 16>}, {pipeline_mode = #tpu.pipeline_mode<synchronous>, transform_indices = @transform_4, window_bounds = array<i64: 1, 16>}, {pipeline_mode = #tpu.pipeline_mode<synchronous>, transform_indices = @transform_5, window_bounds = array<i64: 1, 16>}, {pipeline_mode = #tpu.pipeline_mode<synchronous>, transform_indices = @transform_6, window_bounds = array<i64: 144, 16>}, {transform_indices = @transform_7, window_bounds = array<i64: 1, 8, 8, 16>}]} {
    %c0 = arith.constant 0 : index
    %c0_0 = arith.constant 0 : index
    %0 = vector.load %arg2[%c0, %c0_0] : memref<1x16xf32, #tpu.memory_space<vmem>>, vector<1x16xf32>
    %c0_1 = arith.constant 0 : index
    %c0_2 = arith.constant 0 : index
    %1 = vector.load %arg3[%c0_1, %c0_2] : memref<1x16xf32, #tpu.memory_space<vmem>>, vector<1x16xf32>
    %c0_3 = arith.constant 0 : index
    %c0_4 = arith.constant 0 : index
    %2 = vector.load %arg5[%c0_3, %c0_4] : memref<1x16xf32, #tpu.memory_space<vmem>>, vector<1x16xf32>
    %c0_5 = arith.constant 0 : index
    %c0_6 = arith.constant 0 : index
    %3 = vector.load %arg6[%c0_5, %c0_6] : memref<1x16xf32, #tpu.memory_space<vmem>>, vector<1x16xf32>
    %cst = arith.constant 0.000000e+00 : f32
    %4 = vector.broadcast %cst : f32 to vector<10x10x16xf32>
    %c0_7 = arith.constant 0 : index
    %c0_8 = arith.constant 0 : index
    %c0_9 = arith.constant 0 : index
    %5 = vector.load %arg9[%c0_7, %c0_8, %c0_9] : memref<10x10x16xf32, #tpu.memory_space<vmem>>, vector<10x10x16xf32>
    tpu.vector_store %arg9[%c0_7, %c0_8, %c0_9], %4 {strides = array<i32>} : memref<10x10x16xf32, #tpu.memory_space<vmem>>, vector<10x10x16xf32>,
    %c0_10 = arith.constant 0 : index
    %c0_11 = arith.constant 0 : index
    %c0_12 = arith.constant 0 : index
    %c0_13 = arith.constant 0 : index
    %6 = vector.load %arg1[%c0_10, %c0_11, %c0_12, %c0_13] : memref<1x8x8x16xf32, #tpu.memory_space<vmem>>, vector<1x8x8x16xf32>
    %7 = vector.shape_cast %6 : vector<1x8x8x16xf32> to vector<8x8x16xf32>
    %8 = vector.shape_cast %0 : vector<1x16xf32> to vector<1x1x16xf32>
    %9 = vector.broadcast %8 : vector<1x1x16xf32> to vector<8x8x16xf32>
    %10 = arith.mulf %7, %9 : vector<8x8x16xf32>
    %11 = vector.shape_cast %1 : vector<1x16xf32> to vector<1x1x16xf32>
    %12 = vector.broadcast %11 : vector<1x1x16xf32> to vector<8x8x16xf32>
    %13 = arith.addf %10, %12 : vector<8x8x16xf32>
    %cst_14 = arith.constant 0.000000e+00 : f32
    %14 = vector.broadcast %cst_14 : f32 to vector<8x8x16xf32>
    %15 = arith.maximumf %13, %14 : vector<8x8x16xf32>
    %c1 = arith.constant 1 : index
    %c1_15 = arith.constant 1 : index
    %c0_16 = arith.constant 0 : index
    %16 = vector.load %arg9[%c1, %c1_15, %c0_16] : memref<10x10x16xf32, #tpu.memory_space<vmem>>, vector<8x8x16xf32>
    tpu.vector_store %arg9[%c1, %c1_15, %c0_16], %15 {strides = array<i32>} : memref<10x10x16xf32, #tpu.memory_space<vmem>>, vector<8x8x16xf32>,
    %c0_17 = arith.constant 0 : index
    %c0_18 = arith.constant 0 : index
    %c0_19 = arith.constant 0 : index
    %17 = vector.load %arg9[%c0_17, %c0_18, %c0_19] : memref<10x10x16xf32, #tpu.memory_space<vmem>>, vector<8x8x16xf32>
    %18 = vector.shape_cast %17 : vector<8x8x16xf32> to vector<64x16xf32>
    %c0_20 = arith.constant 0 : index
    %c1_21 = arith.constant 1 : index
    %c0_22 = arith.constant 0 : index
    %19 = vector.load %arg9[%c0_20, %c1_21, %c0_22] : memref<10x10x16xf32, #tpu.memory_space<vmem>>, vector<8x8x16xf32>
    %20 = vector.shape_cast %19 : vector<8x8x16xf32> to vector<64x16xf32>
    %c0_23 = arith.constant 0 : index
    %c2 = arith.constant 2 : index
    %c0_24 = arith.constant 0 : index
    %21 = vector.load %arg9[%c0_23, %c2, %c0_24] : memref<10x10x16xf32, #tpu.memory_space<vmem>>, vector<8x8x16xf32>
    %22 = vector.shape_cast %21 : vector<8x8x16xf32> to vector<64x16xf32>
    %c1_25 = arith.constant 1 : index
    %c0_26 = arith.constant 0 : index
    %c0_27 = arith.constant 0 : index
    %23 = vector.load %arg9[%c1_25, %c0_26, %c0_27] : memref<10x10x16xf32, #tpu.memory_space<vmem>>, vector<8x8x16xf32>
    %24 = vector.shape_cast %23 : vector<8x8x16xf32> to vector<64x16xf32>
    %c1_28 = arith.constant 1 : index
    %c1_29 = arith.constant 1 : index
    %c0_30 = arith.constant 0 : index
    %25 = vector.load %arg9[%c1_28, %c1_29, %c0_30] : memref<10x10x16xf32, #tpu.memory_space<vmem>>, vector<8x8x16xf32>
    %26 = vector.shape_cast %25 : vector<8x8x16xf32> to vector<64x16xf32>
    %c1_31 = arith.constant 1 : index
    %c2_32 = arith.constant 2 : index
    %c0_33 = arith.constant 0 : index
    %27 = vector.load %arg9[%c1_31, %c2_32, %c0_33] : memref<10x10x16xf32, #tpu.memory_space<vmem>>, vector<8x8x16xf32>
    %28 = vector.shape_cast %27 : vector<8x8x16xf32> to vector<64x16xf32>
    %c2_34 = arith.constant 2 : index
    %c0_35 = arith.constant 0 : index
    %c0_36 = arith.constant 0 : index
    %29 = vector.load %arg9[%c2_34, %c0_35, %c0_36] : memref<10x10x16xf32, #tpu.memory_space<vmem>>, vector<8x8x16xf32>
    %30 = vector.shape_cast %29 : vector<8x8x16xf32> to vector<64x16xf32>
    %c2_37 = arith.constant 2 : index
    %c1_38 = arith.constant 1 : index
    %c0_39 = arith.constant 0 : index
    %31 = vector.load %arg9[%c2_37, %c1_38, %c0_39] : memref<10x10x16xf32, #tpu.memory_space<vmem>>, vector<8x8x16xf32>
    %32 = vector.shape_cast %31 : vector<8x8x16xf32> to vector<64x16xf32>
    %c2_40 = arith.constant 2 : index
    %c2_41 = arith.constant 2 : index
    %c0_42 = arith.constant 0 : index
    %33 = vector.load %arg9[%c2_40, %c2_41, %c0_42] : memref<10x10x16xf32, #tpu.memory_space<vmem>>, vector<8x8x16xf32>
    %34 = vector.shape_cast %33 : vector<8x8x16xf32> to vector<64x16xf32>
    %35 = tpu.concatenate %18, %20, %22, %24, %26, %28, %30, %32, %34 in 1 : vector<64x16xf32>, vector<64x16xf32>, vector<64x16xf32>, vector<64x16xf32>, vector<64x16xf32>, vector<64x16xf32>, vector<64x16xf32>, vector<64x16xf32>, vector<64x16xf32> -> vector<64x144xf32>
    %36 = arith.truncf %35 : vector<64x144xf32> to vector<64x144xbf16>
    %c0_43 = arith.constant 0 : index
    %c0_44 = arith.constant 0 : index
    %37 = vector.load %arg4[%c0_43, %c0_44] : memref<144x16xbf16, #tpu.memory_space<vmem>>, vector<144x16xbf16>
    %cst_45 = arith.constant dense<0.000000e+00> : vector<64x16xf32>
    %38 = tpu.matmul %36, %37, %cst_45 {dimension_numbers = #tpu.dot_dimension_numbers<[1], [0], [0], [1], [0, 0, 1, 1], [], []>} : vector<64x144xbf16>, vector<144x16xbf16>, vector<64x16xf32> -> vector<64x16xf32>
    %39 = vector.broadcast %2 : vector<1x16xf32> to vector<64x16xf32>
    %40 = arith.mulf %38, %39 : vector<64x16xf32>
    %41 = vector.broadcast %3 : vector<1x16xf32> to vector<64x16xf32>
    %42 = arith.addf %40, %41 : vector<64x16xf32>
    %cst_46 = arith.constant 0.000000e+00 : f32
    %43 = vector.broadcast %cst_46 : f32 to vector<64x16xf32>
    %44 = arith.maximumf %42, %43 : vector<64x16xf32>
    %cst_47 = arith.constant 0.000000e+00 : f32
    %45 = vector.broadcast %cst_47 : f32 to vector<10x10x16xf32>
    %c0_48 = arith.constant 0 : index
    %c0_49 = arith.constant 0 : index
    %c0_50 = arith.constant 0 : index
    %46 = vector.load %arg10[%c0_48, %c0_49, %c0_50] : memref<10x10x16xf32, #tpu.memory_space<vmem>>, vector<10x10x16xf32>
    tpu.vector_store %arg10[%c0_48, %c0_49, %c0_50], %45 {strides = array<i32>} : memref<10x10x16xf32, #tpu.memory_space<vmem>>, vector<10x10x16xf32>,
    %47 = vector.shape_cast %44 : vector<64x16xf32> to vector<8x8x16xf32>
    %c1_51 = arith.constant 1 : index
    %c1_52 = arith.constant 1 : index
    %c0_53 = arith.constant 0 : index
    %48 = vector.load %arg10[%c1_51, %c1_52, %c0_53] : memref<10x10x16xf32, #tpu.memory_space<vmem>>, vector<8x8x16xf32>
    tpu.vector_store %arg10[%c1_51, %c1_52, %c0_53], %47 {strides = array<i32>} : memref<10x10x16xf32, #tpu.memory_space<vmem>>, vector<8x8x16xf32>,
    %c0_54 = arith.constant 0 : index
    %c0_55 = arith.constant 0 : index
    %c0_56 = arith.constant 0 : index
    %49 = vector.load %arg10[%c0_54, %c0_55, %c0_56] : memref<10x10x16xf32, #tpu.memory_space<vmem>>, vector<8x8x16xf32>
    %50 = vector.shape_cast %49 : vector<8x8x16xf32> to vector<64x16xf32>
    %c0_57 = arith.constant 0 : index
    %c1_58 = arith.constant 1 : index
    %c0_59 = arith.constant 0 : index
    %51 = vector.load %arg10[%c0_57, %c1_58, %c0_59] : memref<10x10x16xf32, #tpu.memory_space<vmem>>, vector<8x8x16xf32>
    %52 = vector.shape_cast %51 : vector<8x8x16xf32> to vector<64x16xf32>
    %c0_60 = arith.constant 0 : index
    %c2_61 = arith.constant 2 : index
    %c0_62 = arith.constant 0 : index
    %53 = vector.load %arg10[%c0_60, %c2_61, %c0_62] : memref<10x10x16xf32, #tpu.memory_space<vmem>>, vector<8x8x16xf32>
    %54 = vector.shape_cast %53 : vector<8x8x16xf32> to vector<64x16xf32>
    %c1_63 = arith.constant 1 : index
    %c0_64 = arith.constant 0 : index
    %c0_65 = arith.constant 0 : index
    %55 = vector.load %arg10[%c1_63, %c0_64, %c0_65] : memref<10x10x16xf32, #tpu.memory_space<vmem>>, vector<8x8x16xf32>
    %56 = vector.shape_cast %55 : vector<8x8x16xf32> to vector<64x16xf32>
    %c1_66 = arith.constant 1 : index
    %c1_67 = arith.constant 1 : index
    %c0_68 = arith.constant 0 : index
    %57 = vector.load %arg10[%c1_66, %c1_67, %c0_68] : memref<10x10x16xf32, #tpu.memory_space<vmem>>, vector<8x8x16xf32>
    %58 = vector.shape_cast %57 : vector<8x8x16xf32> to vector<64x16xf32>
    %c1_69 = arith.constant 1 : index
    %c2_70 = arith.constant 2 : index
    %c0_71 = arith.constant 0 : index
    %59 = vector.load %arg10[%c1_69, %c2_70, %c0_71] : memref<10x10x16xf32, #tpu.memory_space<vmem>>, vector<8x8x16xf32>
    %60 = vector.shape_cast %59 : vector<8x8x16xf32> to vector<64x16xf32>
    %c2_72 = arith.constant 2 : index
    %c0_73 = arith.constant 0 : index
    %c0_74 = arith.constant 0 : index
    %61 = vector.load %arg10[%c2_72, %c0_73, %c0_74] : memref<10x10x16xf32, #tpu.memory_space<vmem>>, vector<8x8x16xf32>
    %62 = vector.shape_cast %61 : vector<8x8x16xf32> to vector<64x16xf32>
    %c2_75 = arith.constant 2 : index
    %c1_76 = arith.constant 1 : index
    %c0_77 = arith.constant 0 : index
    %63 = vector.load %arg10[%c2_75, %c1_76, %c0_77] : memref<10x10x16xf32, #tpu.memory_space<vmem>>, vector<8x8x16xf32>
    %64 = vector.shape_cast %63 : vector<8x8x16xf32> to vector<64x16xf32>
    %c2_78 = arith.constant 2 : index
    %c2_79 = arith.constant 2 : index
    %c0_80 = arith.constant 0 : index
    %65 = vector.load %arg10[%c2_78, %c2_79, %c0_80] : memref<10x10x16xf32, #tpu.memory_space<vmem>>, vector<8x8x16xf32>
    %66 = vector.shape_cast %65 : vector<8x8x16xf32> to vector<64x16xf32>
    %67 = tpu.concatenate %50, %52, %54, %56, %58, %60, %62, %64, %66 in 1 : vector<64x16xf32>, vector<64x16xf32>, vector<64x16xf32>, vector<64x16xf32>, vector<64x16xf32>, vector<64x16xf32>, vector<64x16xf32>, vector<64x16xf32>, vector<64x16xf32> -> vector<64x144xf32>
    %68 = arith.truncf %67 : vector<64x144xf32> to vector<64x144xbf16>
    %c0_81 = arith.constant 0 : index
    %c0_82 = arith.constant 0 : index
    %69 = vector.load %arg7[%c0_81, %c0_82] : memref<144x16xbf16, #tpu.memory_space<vmem>>, vector<144x16xbf16>
    %cst_83 = arith.constant dense<0.000000e+00> : vector<64x16xf32>
    %70 = tpu.matmul %68, %69, %cst_83 {dimension_numbers = #tpu.dot_dimension_numbers<[1], [0], [0], [1], [0, 0, 1, 1], [], []>} : vector<64x144xbf16>, vector<144x16xbf16>, vector<64x16xf32> -> vector<64x16xf32>
    %c0_84 = arith.constant 0 : index
    %c0_85 = arith.constant 0 : index
    %c0_86 = arith.constant 0 : index
    %c0_87 = arith.constant 0 : index
    %71 = vector.load %arg1[%c0_84, %c0_85, %c0_86, %c0_87] : memref<1x8x8x16xf32, #tpu.memory_space<vmem>>, vector<1x8x8x16xf32>
    %72 = vector.shape_cast %71 : vector<1x8x8x16xf32> to vector<8x8x16xf32>
    %73 = vector.shape_cast %72 : vector<8x8x16xf32> to vector<64x16xf32>
    %74 = arith.addf %70, %73 : vector<64x16xf32>
    %75 = vector.shape_cast %74 : vector<64x16xf32> to vector<8x8x16xf32>
    %c0_88 = arith.constant 0 : index
    %c0_89 = arith.constant 0 : index
    %c0_90 = arith.constant 0 : index
    %c0_91 = arith.constant 0 : index
    %76 = vector.load %arg8[%c0_88, %c0_89, %c0_90, %c0_91] : memref<1x8x8x16xf32, #tpu.memory_space<vmem>>, vector<1x8x8x16xf32>
    %77 = vector.shape_cast %76 : vector<1x8x8x16xf32> to vector<8x8x16xf32>
    %78 = vector.shape_cast %75 : vector<8x8x16xf32> to vector<1x8x8x16xf32>
    tpu.vector_store %arg8[%c0_88, %c0_89, %c0_90, %c0_91], %78 {strides = array<i32>} : memref<1x8x8x16xf32, #tpu.memory_space<vmem>>, vector<1x8x8x16xf32>,
    return
  }
  func.func @transform_0(%arg0: i32) -> (i32, i32, i32, i32) {
    %c0_i32 = arith.constant 0 : i32
    %c0_i32_0 = arith.constant 0 : i32
    %c0_i32_1 = arith.constant 0 : i32
    %c0_i32_2 = arith.constant 0 : i32
    return %arg0, %c0_i32, %c0_i32_0, %c0_i32_1 : i32, i32, i32, i32
  }
  func.func @transform_1(%arg0: i32) -> (i32, i32) {
    %c0_i32 = arith.constant 0 : i32
    %c0_i32_0 = arith.constant 0 : i32
    %c0_i32_1 = arith.constant 0 : i32
    return %c0_i32, %c0_i32_0 : i32, i32
  }
  func.func @transform_2(%arg0: i32) -> (i32, i32) {
    %c0_i32 = arith.constant 0 : i32
    %c0_i32_0 = arith.constant 0 : i32
    %c0_i32_1 = arith.constant 0 : i32
    return %c0_i32, %c0_i32_0 : i32, i32
  }
  func.func @transform_3(%arg0: i32) -> (i32, i32) {
    %c0_i32 = arith.constant 0 : i32
    %c0_i32_0 = arith.constant 0 : i32
    %c0_i32_1 = arith.constant 0 : i32
    return %c0_i32, %c0_i32_0 : i32, i32
  }
  func.func @transform_4(%arg0: i32) -> (i32, i32) {
    %c0_i32 = arith.constant 0 : i32
    %c0_i32_0 = arith.constant 0 : i32
    %c0_i32_1 = arith.constant 0 : i32
    return %c0_i32, %c0_i32_0 : i32, i32
  }
  func.func @transform_5(%arg0: i32) -> (i32, i32) {
    %c0_i32 = arith.constant 0 : i32
    %c0_i32_0 = arith.constant 0 : i32
    %c0_i32_1 = arith.constant 0 : i32
    return %c0_i32, %c0_i32_0 : i32, i32
  }
  func.func @transform_6(%arg0: i32) -> (i32, i32) {
    %c0_i32 = arith.constant 0 : i32
    %c0_i32_0 = arith.constant 0 : i32
    %c0_i32_1 = arith.constant 0 : i32
    return %c0_i32, %c0_i32_0 : i32, i32
  }
  func.func @transform_7(%arg0: i32) -> (i32, i32, i32, i32) {
    %c0_i32 = arith.constant 0 : i32
    %c0_i32_0 = arith.constant 0 : i32
    %c0_i32_1 = arith.constant 0 : i32
    %c0_i32_2 = arith.constant 0 : i32
    return %arg0, %c0_i32, %c0_i32_0, %c0_i32_1 : i32, i32, i32, i32
  }
}

</mosaic_0001>

<llo_original>
// kernel: wrn_network_block.2
$region0: #{wrn_network_block.2}
  #allocation0 [shape = 'u32[]', space=smem, size = 0x4, offset = 0x4, fixed_abs, tag = 'smem constant byte address 0x4 - core index']
  #allocation1 [shape = 'u32[144,128]{1,0:T(1,128)}', space=vmem, size = 0x12000, scoped, tag = 'internal scratch']
  #allocation2 [shape = 'f32[40,10,8]{2,1,0:T(8,128)}', space=vmem, size = 0x50000, scoped, tag = 'scratch operand']
  #allocation3 [shape = 'f32[10,10,16]{2,1,0:T(8,128)}', space=vmem, size = 0x14000, scoped, tag = 'scratch operand']
  %s0 = inlined_call_operand.vmem [shape: f32[2,32,8,8], index: 0, kind: input, shape index: {}]
  %s1 = inlined_call_operand.vmem [shape: f32[1,8], index: 1, kind: input, shape index: {}]
  %s2 = inlined_call_operand.vmem [shape: f32[1,8], index: 2, kind: input, shape index: {}]
  %s3 = inlined_call_operand.vmem [shape: bf16[72,16], index: 3, kind: input, shape index: {}]
  %s4 = inlined_call_operand.vmem [shape: f32[1,16], index: 4, kind: input, shape index: {}]
  %s5 = inlined_call_operand.vmem [shape: f32[1,16], index: 5, kind: input, shape index: {}]
  %s6 = inlined_call_operand.vmem [shape: bf16[144,16], index: 6, kind: input, shape index: {}]
  %s7 = inlined_call_operand.vmem [shape: bf16[8,16], index: 7, kind: input, shape index: {}]
  %s8 = inlined_call_operand.vmem [shape: f32[2,8,8,16], index: 8, kind: output, shape index: {}]
  %s9 = sld [smem:[#allocation0]]
  $region65: #{wrn_network_block.2} parent=0
    _
  %s11 = ssub.s32 1, %s9
  %s12 = scalar_select 0, %s11, %s9
  loop: start=0, step=1, limit=4
  $region2: #{wrn_network_block.2} parent=0 // loop_pre_header
    _
  $region3: #{wrn_network_block.2} parent=0 // loop_header
    %s14 = sphi 0, %s18
    %p15 = scmp.ge.s32.totalorder %s14, 4
    %s24 = sphi 0, %s26
    %s27 = sphi 0, %s24
    %s28 = sphi 0, %s27
    %s44 = sphi 0, %s28
    %s48 = sphi 0, %s48
    %s50 = sphi 0, %s48
    %s51 = sphi 0, %s50
    %s65 = sphi 0, %s51
    %s69 = sphi 0, %s69
    %s71 = sphi 0, %s69
    %s72 = sphi 0, %s71
    %s86 = sphi 0, %s72
    %s90 = sphi 0, %s90
    %s92 = sphi 0, %s90
    %s93 = sphi 0, %s92
    %s107 = sphi 0, %s93
    %s111 = sphi 0, %s111
    %s113 = sphi 0, %s111
    %s114 = sphi 0, %s113
    %s128 = sphi 0, %s114
    %s132 = sphi 0, %s132
    %s134 = sphi 0, %s132
    %s135 = sphi 0, %s134
    %s149 = sphi 0, %s135
    %s153 = sphi 0, %s153
    %s155 = sphi 0, %s153
    %s156 = sphi 0, %s155
    %s170 = sphi 0, %s156
    %s174 = sphi 0, %s174
    %s176 = sphi 0, %s174
    %s177 = sphi 0, %s176
    %s191 = sphi 0, %s177
    %s197 = sphi 0, %s199
    %s200 = sphi 0, %s197
    %s201 = sphi 0, %s200
    %s217 = sphi 0, %s201
  $region4: #{wrn_network_block.2} parent=0 // loop_header_branch
    %17 = sbr.rel (%p15) target = $region8
  $region5: #{wrn_network_block.2} parent=0 // loop_body
    %s19 = ssub.s32 %s14, 1
    %s20 = ssub.s32 %s14, 2
    %s21 = sadd.s32 %s14, 1
    %s22 = ssub.s32 %s14, %s21
    %p23 = scmp.eq.s32.totalorder %s22, 0
    %s25 = sadd.s32 %s24, 1
    %s26 = scalar_select %p23, %s24, %s25
    %p29 = pneg %p23
    %p30 = scmp.eq.s32.totalorder %s14, 1
    %p31 = por %p29, %p30
    %p32 = scmp.ne.s32.totalorder %s24, %s27
    %p33 = scmp.eq.s32.totalorder %s14, 0
    %p34 = por %p32, %p33
    %p35 = scmp.ne.s32.totalorder %s24, %s27
    %p36 = scmp.eq.s32.totalorder %s19, 1
    %p37 = por %p35, %p36
    %p38 = scmp.ne.s32.totalorder %s27, %s28
    %p39 = scmp.eq.s32.totalorder %s19, 0
    %p40 = por %p38, %p39
    %p41 = scmp.ne.s32.totalorder %s27, %s28
    %p42 = scmp.eq.s32.totalorder %s20, 1
    %p43 = por %p41, %p42
    %p45 = scmp.ne.s32.totalorder %s28, %s44
    %p46 = scmp.eq.s32.totalorder %s20, 0
    %p47 = por %p45, %p46
    %s49 = sadd.s32 %s48, 1
    %p52 = scmp.eq.s32.totalorder %s14, 1
    %p53 = scmp.ne.s32.totalorder %s48, %s50
    %p54 = scmp.eq.s32.totalorder %s14, 0
    %p55 = por %p53, %p54
    %p56 = scmp.ne.s32.totalorder %s48, %s50
    %p57 = scmp.eq.s32.totalorder %s19, 1
    %p58 = por %p56, %p57
    %p59 = scmp.ne.s32.totalorder %s50, %s51
    %p60 = scmp.eq.s32.totalorder %s19, 0
    %p61 = por %p59, %p60
    %p62 = scmp.ne.s32.totalorder %s50, %s51
    %p63 = scmp.eq.s32.totalorder %s20, 1
    %p64 = por %p62, %p63
    %p66 = scmp.ne.s32.totalorder %s51, %s65
    %p67 = scmp.eq.s32.totalorder %s20, 0
    %p68 = por %p66, %p67
    %s70 = sadd.s32 %s69, 1
    %p73 = scmp.eq.s32.totalorder %s14, 1
    %p74 = scmp.ne.s32.totalorder %s69, %s71
    %p75 = scmp.eq.s32.totalorder %s14, 0
    %p76 = por %p74, %p75
    %p77 = scmp.ne.s32.totalorder %s69, %s71
    %p78 = scmp.eq.s32.totalorder %s19, 1
    %p79 = por %p77, %p78
    %p80 = scmp.ne.s32.totalorder %s71, %s72
    %p81 = scmp.eq.s32.totalorder %s19, 0
    %p82 = por %p80, %p81
    %p83 = scmp.ne.s32.totalorder %s71, %s72
    %p84 = scmp.eq.s32.totalorder %s20, 1
    %p85 = por %p83, %p84
    %p87 = scmp.ne.s32.totalorder %s72, %s86
    %p88 = scmp.eq.s32.totalorder %s20, 0
    %p89 = por %p87, %p88
    %s91 = sadd.s32 %s90, 1
    %p94 = scmp.eq.s32.totalorder %s14, 1
    %p95 = scmp.ne.s32.totalorder %s90, %s92
    %p96 = scmp.eq.s32.totalorder %s14, 0
    %p97 = por %p95, %p96
    %p98 = scmp.ne.s32.totalorder %s90, %s92
    %p99 = scmp.eq.s32.totalorder %s19, 1
    %p100 = por %p98, %p99
    %p101 = scmp.ne.s32.totalorder %s92, %s93
    %p102 = scmp.eq.s32.totalorder %s19, 0
    %p103 = por %p101, %p102
    %p104 = scmp.ne.s32.totalorder %s92, %s93
    %p105 = scmp.eq.s32.totalorder %s20, 1
    %p106 = por %p104, %p105
    %p108 = scmp.ne.s32.totalorder %s93, %s107
    %p109 = scmp.eq.s32.totalorder %s20, 0
    %p110 = por %p108, %p109
    %s112 = sadd.s32 %s111, 1
    %p115 = scmp.eq.s32.totalorder %s14, 1
    %p116 = scmp.ne.s32.totalorder %s111, %s113
    %p117 = scmp.eq.s32.totalorder %s14, 0
    %p118 = por %p116, %p117
    %p119 = scmp.ne.s32.totalorder %s111, %s113
    %p120 = scmp.eq.s32.totalorder %s19, 1
    %p121 = por %p119, %p120
    %p122 = scmp.ne.s32.totalorder %s113, %s114
    %p123 = scmp.eq.s32.totalorder %s19, 0
    %p124 = por %p122, %p123
    %p125 = scmp.ne.s32.totalorder %s113, %s114
    %p126 = scmp.eq.s32.totalorder %s20, 1
    %p127 = por %p125, %p126
    %p129 = scmp.ne.s32.totalorder %s114, %s128
    %p130 = scmp.eq.s32.totalorder %s20, 0
    %p131 = por %p129, %p130
    %s133 = sadd.s32 %s132, 1
    %p136 = scmp.eq.s32.totalorder %s14, 1
    %p137 = scmp.ne.s32.totalorder %s132, %s134
    %p138 = scmp.eq.s32.totalorder %s14, 0
    %p139 = por %p137, %p138
    %p140 = scmp.ne.s32.totalorder %s132, %s134
    %p141 = scmp.eq.s32.totalorder %s19, 1
    %p142 = por %p140, %p141
    %p143 = scmp.ne.s32.totalorder %s134, %s135
    %p144 = scmp.eq.s32.totalorder %s19, 0
    %p145 = por %p143, %p144
    %p146 = scmp.ne.s32.totalorder %s134, %s135
    %p147 = scmp.eq.s32.totalorder %s20, 1
    %p148 = por %p146, %p147
    %p150 = scmp.ne.s32.totalorder %s135, %s149
    %p151 = scmp.eq.s32.totalorder %s20, 0
    %p152 = por %p150, %p151
    %s154 = sadd.s32 %s153, 1
    %p157 = scmp.eq.s32.totalorder %s14, 1
    %p158 = scmp.ne.s32.totalorder %s153, %s155
    %p159 = scmp.eq.s32.totalorder %s14, 0
    %p160 = por %p158, %p159
    %p161 = scmp.ne.s32.totalorder %s153, %s155
    %p162 = scmp.eq.s32.totalorder %s19, 1
    %p163 = por %p161, %p162
    %p164 = scmp.ne.s32.totalorder %s155, %s156
    %p165 = scmp.eq.s32.totalorder %s19, 0
    %p166 = por %p164, %p165
    %p167 = scmp.ne.s32.totalorder %s155, %s156
    %p168 = scmp.eq.s32.totalorder %s20, 1
    %p169 = por %p167, %p168
    %p171 = scmp.ne.s32.totalorder %s156, %s170
    %p172 = scmp.eq.s32.totalorder %s20, 0
    %p173 = por %p171, %p172
    %s175 = sadd.s32 %s174, 1
    %p178 = scmp.eq.s32.totalorder %s14, 1
    %p179 = scmp.ne.s32.totalorder %s174, %s176
    %p180 = scmp.eq.s32.totalorder %s14, 0
    %p181 = por %p179, %p180
    %p182 = scmp.ne.s32.totalorder %s174, %s176
    %p183 = scmp.eq.s32.totalorder %s19, 1
    %p184 = por %p182, %p183
    %p185 = scmp.ne.s32.totalorder %s176, %s177
    %p186 = scmp.eq.s32.totalorder %s19, 0
    %p187 = por %p185, %p186
    %p188 = scmp.ne.s32.totalorder %s176, %s177
    %p189 = scmp.eq.s32.totalorder %s20, 1
    %p190 = por %p188, %p189
    %p192 = scmp.ne.s32.totalorder %s177, %s191
    %p193 = scmp.eq.s32.totalorder %s20, 0
    %p194 = por %p192, %p193
    %s195 = ssub.s32 %s14, %s21
    %p196 = scmp.eq.s32.totalorder %s195, 0
    %s198 = sadd.s32 %s197, 1
    %s199 = scalar_select %p196, %s197, %s198
    %p202 = pneg %p196
    %p203 = scmp.eq.s32.totalorder %s14, 1
    %p204 = por %p202, %p203
    %p205 = scmp.ne.s32.totalorder %s197, %s200
    %p206 = scmp.eq.s32.totalorder %s14, 0
    %p207 = por %p205, %p206
    %p208 = scmp.ne.s32.totalorder %s197, %s200
    %p209 = scmp.eq.s32.totalorder %s19, 1
    %p210 = por %p208, %p209
    %p211 = scmp.ne.s32.totalorder %s200, %s201
    %p212 = scmp.eq.s32.totalorder %s19, 0
    %p213 = por %p211, %p212
    %p214 = scmp.ne.s32.totalorder %s200, %s201
    %p215 = scmp.eq.s32.totalorder %s20, 1
    %p216 = por %p214, %p215
    %p218 = scmp.ne.s32.totalorder %s201, %s217
    %p219 = scmp.eq.s32.totalorder %s20, 0
    %p220 = por %p218, %p219
    %p221 = scmp.le.s32.totalorder 1, %s14
    %p222 = scmp.lt.s32.totalorder %s14, 3
    %p223 = pnand %p221, %p222
    %p224 = pneg %p223
    // Predicated region
    $region9: #{wrn_network_block.2} parent=5 // pred_check
      _
    $region10: #{wrn_network_block.2} parent=5 // pred_check_branch
      %226 = sbr.rel (%p223) target = $region12
    $region11: #{wrn_network_block.2} parent=5 // pred_region
      %s227 = ssub.s32 %s14, 1
      // Predicated region
      $region13: #{wrn_network_block.2} parent=11 // pred_check
        %p228 = pneg %p61
      $region14: #{wrn_network_block.2} parent=11 // pred_check_branch
        %230 = sbr.rel (%p228) target = $region16
      $region15: #{wrn_network_block.2} parent=11 // pred_region
        _
      $region16: #{wrn_network_block.2} parent=11 // pred_fallthru
        _
      // Predicated region
      $region17: #{wrn_network_block.2} parent=11 // pred_check
        %p231 = pneg %p82
      $region18: #{wrn_network_block.2} parent=11 // pred_check_branch
        %233 = sbr.rel (%p231) target = $region20
      $region19: #{wrn_network_block.2} parent=11 // pred_region
        _
      $region20: #{wrn_network_block.2} parent=11 // pred_fallthru
        _
      // Predicated region
      $region21: #{wrn_network_block.2} parent=11 // pred_check
        %p234 = pneg %p103
      $region22: #{wrn_network_block.2} parent=11 // pred_check_branch
        %236 = sbr.rel (%p234) target = $region24
      $region23: #{wrn_network_block.2} parent=11 // pred_region
        _
      $region24: #{wrn_network_block.2} parent=11 // pred_fallthru
        _
      // Predicated region
      $region25: #{wrn_network_block.2} parent=11 // pred_check
        %p237 = pneg %p124
      $region26: #{wrn_network_block.2} parent=11 // pred_check_branch
        %239 = sbr.rel (%p237) target = $region28
      $region27: #{wrn_network_block.2} parent=11 // pred_region
        _
      $region28: #{wrn_network_block.2} parent=11 // pred_fallthru
        _
      // Predicated region
      $region29: #{wrn_network_block.2} parent=11 // pred_check
        %p240 = pneg %p145
      $region30: #{wrn_network_block.2} parent=11 // pred_check_branch
        %242 = sbr.rel (%p240) target = $region32
      $region31: #{wrn_network_block.2} parent=11 // pred_region
        _
      $region32: #{wrn_network_block.2} parent=11 // pred_fallthru
        _
      // Predicated region
      $region33: #{wrn_network_block.2} parent=11 // pred_check
        %p243 = pneg %p166
      $region34: #{wrn_network_block.2} parent=11 // pred_check_branch
        %245 = sbr.rel (%p243) target = $region36
      $region35: #{wrn_network_block.2} parent=11 // pred_region
        _
      $region36: #{wrn_network_block.2} parent=11 // pred_fallthru
        _
      // Predicated region
      $region37: #{wrn_network_block.2} parent=11 // pred_check
        %p246 = pneg %p187
      $region38: #{wrn_network_block.2} parent=11 // pred_check_branch
        %248 = sbr.rel (%p246) target = $region40
      $region39: #{wrn_network_block.2} parent=11 // pred_region
        _
      $region40: #{wrn_network_block.2} parent=11 // pred_fallthru
        _
    $region12: #{wrn_network_block.2} parent=5 // pred_fallthru
      _
    %p249 = scmp.lt.s32.totalorder %s14, 2
    // Predicated region
    $region41: #{wrn_network_block.2} parent=5 // pred_check
      %p250 = pneg %p249
    $region42: #{wrn_network_block.2} parent=5 // pred_check_branch
      %252 = sbr.rel (%p250) target = $region44
    $region43: #{wrn_network_block.2} parent=5 // pred_region
      // Predicated region
      $region45: #{wrn_network_block.2} parent=43 // pred_check
        %p253 = pneg %p34
      $region46: #{wrn_network_block.2} parent=43 // pred_check_branch
        %255 = sbr.rel (%p253) target = $region48
      $region47: #{wrn_network_block.2} parent=43 // pred_region
        %p256 = scmp.lt.s32.totalorder %s14, 1
        %s257 = scalar_select %p256, %s14, 1
        %s258 = smul.addr %s257, 32
        %s259 = smul.addr %s258, 8
        %s260 = scalar_lea.vmem %s0, %s259
      $region48: #{wrn_network_block.2} parent=43 // pred_fallthru
        _
    $region44: #{wrn_network_block.2} parent=5 // pred_fallthru
      _
    %p261 = scmp.le.s32.totalorder 1, %s14
    %p262 = scmp.lt.s32.totalorder %s14, 3
    %p263 = pnand %p261, %p262
    %p264 = pneg %p263
    // Predicated region
    $region49: #{wrn_network_block.2} parent=5 // pred_check
      _
    $region50: #{wrn_network_block.2} parent=5 // pred_check_branch
      %266 = sbr.rel (%p263) target = $region52
    $region51: #{wrn_network_block.2} parent=5 // pred_region
      %s267 = ssub.s32 %s14, 1
      %p268 = scmp.lt.s32.totalorder %s19, 1
      %s269 = scalar_select %p268, %s19, 1
      %s270 = smul.addr %s269, 32
      %s271 = smul.addr %s270, 8
      %s272 = scalar_lea.vmem %s0, %s271
      %p273 = pneg %p40
      %p274 = pneg %p37
      %p275 = pneg %p61
      %p276 = pneg %p58
      %p277 = pneg %p82
      %p278 = pneg %p79
      %p279 = pneg %p103
      %p280 = pneg %p100
      %p281 = pneg %p124
      %p282 = pneg %p121
      %p283 = pneg %p145
      %p284 = pneg %p142
      %p285 = pneg %p166
      %p286 = pneg %p163
      %p287 = pneg %p187
      %p288 = pneg %p184
      %p289 = pneg %p213
      %p290 = pneg %p210
      %p291 = scmp.lt.s32.totalorder %s19, 1
      %s292 = scalar_select %p291, %s19, 1
      %s293 = smul.addr %s292, 8
      %s294 = smul.addr %s293, 8
      %s295 = scalar_lea.vmem %s8, %s294
      %p296 = scmp.lt.s32.totalorder %s19, 1
      %s297 = scalar_select %p296, %s19, 1
      %s298 = smul.addr %s297, 32
      %s299 = smul.addr %s298, 8
      %s300 = scalar_lea.vmem %s0, %s299
      %p301 = scmp.lt.s32.totalorder %s19, 1
      %s302 = scalar_select %p301, %s19, 1
      %s303 = smul.addr %s302, 8
      %s304 = smul.addr %s303, 8
      %s305 = scalar_lea.vmem %s8, %s304
      %v307 = vld [vmem:[%s1] sm:$0x1]
      %v308 = vld [vmem:[%s2] sm:$0x1]
      %v309 = vld [vmem:[%s4] sm:$0x1]
      %v310 = vld [vmem:[%s5] sm:$0x1]
      %vm311 = vcmask 64512
      %312 = vst.msk [vmem:[#allocation2] sm:$0xff] %vm311, 0.0
      %vm313 = vcmask 58368
      %314 = vst.msk [vmem:[#allocation2 + $0x8] sm:$0x3] %vm313, 0.0
      %315 = vst.msk [vmem:[#allocation2 + $0x10] sm:$0xff] %vm311, 0.0
      %316 = vst.msk [vmem:[#allocation2 + $0x18] sm:$0x3] %vm313, 0.0
      %317 = vst.msk [vmem:[#allocation2 + $0x20] sm:$0xff] %vm311, 0.0
      %318 = vst.msk [vmem:[#allocation2 + $0x28] sm:$0x3] %vm313, 0.0
      %319 = vst.msk [vmem:[#allocation2 + $0x30] sm:$0xff] %vm311, 0.0
      %320 = vst.msk [vmem:[#allocation2 + $0x38] sm:$0x3] %vm313, 0.0
      %321 = vst.msk [vmem:[#allocation2 + $0x40] sm:$0xff] %vm311, 0.0
      %322 = vst.msk [vmem:[#allocation2 + $0x48] sm:$0x3] %vm313, 0.0
      %323 = vst.msk [vmem:[#allocation2 + $0x50] sm:$0xff] %vm311, 0.0
      %324 = vst.msk [vmem:[#allocation2 + $0x58] sm:$0x3] %vm313, 0.0
      %325 = vst.msk [vmem:[#allocation2 + $0x60] sm:$0xff] %vm311, 0.0
      %326 = vst.msk [vmem:[#allocation2 + $0x68] sm:$0x3] %vm313, 0.0
      %327 = vst.msk [vmem:[#allocation2 + $0x70] sm:$0xff] %vm311, 0.0
      %328 = vst.msk [vmem:[#allocation2 + $0x78] sm:$0x3] %vm313, 0.0
      %329 = vst.msk [vmem:[#allocation2 + $0x80] sm:$0xff] %vm311, 0.0
      %330 = vst.msk [vmem:[#allocation2 + $0x88] sm:$0x3] %vm313, 0.0
      %331 = vst.msk [vmem:[#allocation2 + $0x90] sm:$0xff] %vm311, 0.0
      %332 = vst.msk [vmem:[#allocation2 + $0x98] sm:$0x3] %vm313, 0.0
      %333 = vst.msk [vmem:[#allocation2 + $0xa0] sm:$0xff] %vm311, 0.0
      %334 = vst.msk [vmem:[#allocation2 + $0xa8] sm:$0x3] %vm313, 0.0
      %335 = vst.msk [vmem:[#allocation2 + $0xb0] sm:$0xff] %vm311, 0.0
      %336 = vst.msk [vmem:[#allocation2 + $0xb8] sm:$0x3] %vm313, 0.0
      %337 = vst.msk [vmem:[#allocation2 + $0xc0] sm:$0xff] %vm311, 0.0
      %338 = vst.msk [vmem:[#allocation2 + $0xc8] sm:$0x3] %vm313, 0.0
      %339 = vst.msk [vmem:[#allocation2 + $0xd0] sm:$0xff] %vm311, 0.0
      %340 = vst.msk [vmem:[#allocation2 + $0xd8] sm:$0x3] %vm313, 0.0
      %341 = vst.msk [vmem:[#allocation2 + $0xe0] sm:$0xff] %vm311, 0.0
      %342 = vst.msk [vmem:[#allocation2 + $0xe8] sm:$0x3] %vm313, 0.0
      %343 = vst.msk [vmem:[#allocation2 + $0xf0] sm:$0xff] %vm311, 0.0
      %344 = vst.msk [vmem:[#allocation2 + $0xf8] sm:$0x3] %vm313, 0.0
      %345 = vst.msk [vmem:[#allocation2 + $0x100] sm:$0xff] %vm311, 0.0
      %346 = vst.msk [vmem:[#allocation2 + $0x108] sm:$0x3] %vm313, 0.0
      %347 = vst.msk [vmem:[#allocation2 + $0x110] sm:$0xff] %vm311, 0.0
      %348 = vst.msk [vmem:[#allocation2 + $0x118] sm:$0x3] %vm313, 0.0
      %349 = vst.msk [vmem:[#allocation2 + $0x120] sm:$0xff] %vm311, 0.0
      %350 = vst.msk [vmem:[#allocation2 + $0x128] sm:$0x3] %vm313, 0.0
      %351 = vst.msk [vmem:[#allocation2 + $0x130] sm:$0xff] %vm311, 0.0
      %352 = vst.msk [vmem:[#allocation2 + $0x138] sm:$0x3] %vm313, 0.0
      %353 = vst.msk [vmem:[#allocation2 + $0x140] sm:$0xff] %vm311, 0.0
      %354 = vst.msk [vmem:[#allocation2 + $0x148] sm:$0x3] %vm313, 0.0
      %355 = vst.msk [vmem:[#allocation2 + $0x150] sm:$0xff] %vm311, 0.0
      %356 = vst.msk [vmem:[#allocation2 + $0x158] sm:$0x3] %vm313, 0.0
      %357 = vst.msk [vmem:[#allocation2 + $0x160] sm:$0xff] %vm311, 0.0
      %358 = vst.msk [vmem:[#allocation2 + $0x168] sm:$0x3] %vm313, 0.0
      %359 = vst.msk [vmem:[#allocation2 + $0x170] sm:$0xff] %vm311, 0.0
      %360 = vst.msk [vmem:[#allocation2 + $0x178] sm:$0x3] %vm313, 0.0
      %361 = vst.msk [vmem:[#allocation2 + $0x180] sm:$0xff] %vm311, 0.0
      %362 = vst.msk [vmem:[#allocation2 + $0x188] sm:$0x3] %vm313, 0.0
      %363 = vst.msk [vmem:[#allocation2 + $0x190] sm:$0xff] %vm311, 0.0
      %364 = vst.msk [vmem:[#allocation2 + $0x198] sm:$0x3] %vm313, 0.0
      %365 = vst.msk [vmem:[#allocation2 + $0x1a0] sm:$0xff] %vm311, 0.0
      %366 = vst.msk [vmem:[#allocation2 + $0x1a8] sm:$0x3] %vm313, 0.0
      %367 = vst.msk [vmem:[#allocation2 + $0x1b0] sm:$0xff] %vm311, 0.0
      %368 = vst.msk [vmem:[#allocation2 + $0x1b8] sm:$0x3] %vm313, 0.0
      %369 = vst.msk [vmem:[#allocation2 + $0x1c0] sm:$0xff] %vm311, 0.0
      %370 = vst.msk [vmem:[#allocation2 + $0x1c8] sm:$0x3] %vm313, 0.0
      %371 = vst.msk [vmem:[#allocation2 + $0x1d0] sm:$0xff] %vm311, 0.0
      %372 = vst.msk [vmem:[#allocation2 + $0x1d8] sm:$0x3] %vm313, 0.0
      %373 = vst.msk [vmem:[#allocation2 + $0x1e0] sm:$0xff] %vm311, 0.0
      %374 = vst.msk [vmem:[#allocation2 + $0x1e8] sm:$0x3] %vm313, 0.0
      %375 = vst.msk [vmem:[#allocation2 + $0x1f0] sm:$0xff] %vm311, 0.0
      %376 = vst.msk [vmem:[#allocation2 + $0x1f8] sm:$0x3] %vm313, 0.0
      %377 = vst.msk [vmem:[#allocation2 + $0x200] sm:$0xff] %vm311, 0.0
      %378 = vst.msk [vmem:[#allocation2 + $0x208] sm:$0x3] %vm313, 0.0
      %379 = vst.msk [vmem:[#allocation2 + $0x210] sm:$0xff] %vm311, 0.0
      %380 = vst.msk [vmem:[#allocation2 + $0x218] sm:$0x3] %vm313, 0.0
      %381 = vst.msk [vmem:[#allocation2 + $0x220] sm:$0xff] %vm311, 0.0
      %382 = vst.msk [vmem:[#allocation2 + $0x228] sm:$0x3] %vm313, 0.0
      %383 = vst.msk [vmem:[#allocation2 + $0x230] sm:$0xff] %vm311, 0.0
      %384 = vst.msk [vmem:[#allocation2 + $0x238] sm:$0x3] %vm313, 0.0
      %385 = vst.msk [vmem:[#allocation2 + $0x240] sm:$0xff] %vm311, 0.0
      %386 = vst.msk [vmem:[#allocation2 + $0x248] sm:$0x3] %vm313, 0.0
      %387 = vst.msk [vmem:[#allocation2 + $0x250] sm:$0xff] %vm311, 0.0
      %388 = vst.msk [vmem:[#allocation2 + $0x258] sm:$0x3] %vm313, 0.0
      %389 = vst.msk [vmem:[#allocation2 + $0x260] sm:$0xff] %vm311, 0.0
      %390 = vst.msk [vmem:[#allocation2 + $0x268] sm:$0x3] %vm313, 0.0
      %391 = vst.msk [vmem:[#allocation2 + $0x270] sm:$0xff] %vm311, 0.0
      %392 = vst.msk [vmem:[#allocation2 + $0x278] sm:$0x3] %vm313, 0.0
      %v393 = vld [vmem:[%s300] sm:$0xff]
      %v394 = vld [vmem:[%s300 + $0x8] sm:$0xff]
      %v395 = vld [vmem:[%s300 + $0x10] sm:$0xff]
      %v396 = vld [vmem:[%s300 + $0x18] sm:$0xff]
      %v397 = vld [vmem:[%s300 + $0x20] sm:$0xff]
      %v398 = vld [vmem:[%s300 + $0x28] sm:$0xff]
      %v399 = vld [vmem:[%s300 + $0x30] sm:$0xff]
      %v400 = vld [vmem:[%s300 + $0x38] sm:$0xff]
      %v402 = vlaneseq
      %v403 = vshrl.u32 %v402, 7
      %v404 = vsub.s32 0, %v403
      %v405 = vrot.slane %v307, %v404
      %v407 = vmul.f32 %v393, %v405
      %v408 = vmul.f32 %v394, %v405
      %v409 = vmul.f32 %v395, %v405
      %v410 = vmul.f32 %v396, %v405
      %v411 = vmul.f32 %v397, %v405
      %v412 = vmul.f32 %v398, %v405
      %v413 = vmul.f32 %v399, %v405
      %v414 = vmul.f32 %v400, %v405
      %v416 = vlaneseq
      %v417 = vshrl.u32 %v416, 7
      %v418 = vsub.s32 0, %v417
      %v419 = vrot.slane %v308, %v418
      %v421 = vadd.f32 %v407, %v419
      %v422 = vadd.f32 %v408, %v419
      %v423 = vadd.f32 %v409, %v419
      %v424 = vadd.f32 %v410, %v419
      %v425 = vadd.f32 %v411, %v419
      %v426 = vadd.f32 %v412, %v419
      %v427 = vadd.f32 %v413, %v419
      %v428 = vadd.f32 %v414, %v419
      %v429 = vmax.f32 %v421, 0.0
      %v430 = vmax.f32 %v422, 0.0
      %v431 = vmax.f32 %v423, 0.0
      %v432 = vmax.f32 %v424, 0.0
      %v433 = vmax.f32 %v425, 0.0
      %v434 = vmax.f32 %v426, 0.0
      %v435 = vmax.f32 %v427, 0.0
      %v436 = vmax.f32 %v428, 0.0
      %s437 = scalar_lea.vmem [#allocation2], 16
      %438 = vst.msk [vmem:[%s437 + $0x1] sm:$0xff] %vm311, %v429
      %439 = vst.msk [vmem:[%s437 + $0x11] sm:$0xff] %vm311, %v430
      %440 = vst.msk [vmem:[%s437 + $0x21] sm:$0xff] %vm311, %v431
      %441 = vst.msk [vmem:[%s437 + $0x31] sm:$0xff] %vm311, %v432
      %442 = vst.msk [vmem:[%s437 + $0x41] sm:$0xff] %vm311, %v433
      %443 = vst.msk [vmem:[%s437 + $0x51] sm:$0xff] %vm311, %v434
      %444 = vst.msk [vmem:[%s437 + $0x61] sm:$0xff] %vm311, %v435
      %445 = vst.msk [vmem:[%s437 + $0x71] sm:$0xff] %vm311, %v436
      %s446 = scalar_lea.vmem %s300, 64
      %v447 = vld [vmem:[%s446] sm:$0xff]
      %v448 = vld [vmem:[%s446 + $0x8] sm:$0xff]
      %v449 = vld [vmem:[%s446 + $0x10] sm:$0xff]
      %v450 = vld [vmem:[%s446 + $0x18] sm:$0xff]
      %v451 = vld [vmem:[%s446 + $0x20] sm:$0xff]
      %v452 = vld [vmem:[%s446 + $0x28] sm:$0xff]
      %v453 = vld [vmem:[%s446 + $0x30] sm:$0xff]
      %v454 = vld [vmem:[%s446 + $0x38] sm:$0xff]
      %v455 = vmul.f32 %v447, %v405
      %v456 = vmul.f32 %v448, %v405
      %v457 = vmul.f32 %v449, %v405
      %v458 = vmul.f32 %v450, %v405
      %v459 = vmul.f32 %v451, %v405
      %v460 = vmul.f32 %v452, %v405
      %v461 = vmul.f32 %v453, %v405
      %v462 = vmul.f32 %v454, %v405
      %v463 = vadd.f32 %v455, %v419
      %v464 = vadd.f32 %v456, %v419
      %v465 = vadd.f32 %v457, %v419
      %v466 = vadd.f32 %v458, %v419
      %v467 = vadd.f32 %v459, %v419
      %v468 = vadd.f32 %v460, %v419
      %v469 = vadd.f32 %v461, %v419
      %v470 = vadd.f32 %v462, %v419
      %v471 = vmax.f32 %v463, 0.0
      %v472 = vmax.f32 %v464, 0.0
      %v473 = vmax.f32 %v465, 0.0
      %v474 = vmax.f32 %v466, 0.0
      %v475 = vmax.f32 %v467, 0.0
      %v476 = vmax.f32 %v468, 0.0
      %v477 = vmax.f32 %v469, 0.0
      %v478 = vmax.f32 %v470, 0.0
      %s479 = scalar_lea.vmem [#allocation2], 176
      %480 = vst.msk [vmem:[%s479 + $0x1] sm:$0xff] %vm311, %v471
      %481 = vst.msk [vmem:[%s479 + $0x11] sm:$0xff] %vm311, %v472
      %482 = vst.msk [vmem:[%s479 + $0x21] sm:$0xff] %vm311, %v473
      %483 = vst.msk [vmem:[%s479 + $0x31] sm:$0xff] %vm311, %v474
      %484 = vst.msk [vmem:[%s479 + $0x41] sm:$0xff] %vm311, %v475
      %485 = vst.msk [vmem:[%s479 + $0x51] sm:$0xff] %vm311, %v476
      %486 = vst.msk [vmem:[%s479 + $0x61] sm:$0xff] %vm311, %v477
      %487 = vst.msk [vmem:[%s479 + $0x71] sm:$0xff] %vm311, %v478
      %s488 = scalar_lea.vmem %s300, 128
      %v489 = vld [vmem:[%s488] sm:$0xff]
      %v490 = vld [vmem:[%s488 + $0x8] sm:$0xff]
      %v491 = vld [vmem:[%s488 + $0x10] sm:$0xff]
      %v492 = vld [vmem:[%s488 + $0x18] sm:$0xff]
      %v493 = vld [vmem:[%s488 + $0x20] sm:$0xff]
      %v494 = vld [vmem:[%s488 + $0x28] sm:$0xff]
      %v495 = vld [vmem:[%s488 + $0x30] sm:$0xff]
      %v496 = vld [vmem:[%s488 + $0x38] sm:$0xff]
      %v497 = vmul.f32 %v489, %v405
      %v498 = vmul.f32 %v490, %v405
      %v499 = vmul.f32 %v491, %v405
      %v500 = vmul.f32 %v492, %v405
      %v501 = vmul.f32 %v493, %v405
      %v502 = vmul.f32 %v494, %v405
      %v503 = vmul.f32 %v495, %v405
      %v504 = vmul.f32 %v496, %v405
      %v505 = vadd.f32 %v497, %v419
      %v506 = vadd.f32 %v498, %v419
      %v507 = vadd.f32 %v499, %v419
      %v508 = vadd.f32 %v500, %v419
      %v509 = vadd.f32 %v501, %v419
      %v510 = vadd.f32 %v502, %v419
      %v511 = vadd.f32 %v503, %v419
      %v512 = vadd.f32 %v504, %v419
      %v513 = vmax.f32 %v505, 0.0
      %v514 = vmax.f32 %v506, 0.0
      %v515 = vmax.f32 %v507, 0.0
      %v516 = vmax.f32 %v508, 0.0
      %v517 = vmax.f32 %v509, 0.0
      %v518 = vmax.f32 %v510, 0.0
      %v519 = vmax.f32 %v511, 0.0
      %v520 = vmax.f32 %v512, 0.0
      %s521 = scalar_lea.vmem [#allocation2], 336
      %522 = vst.msk [vmem:[%s521 + $0x1] sm:$0xff] %vm311, %v513
      %523 = vst.msk [vmem:[%s521 + $0x11] sm:$0xff] %vm311, %v514
      %524 = vst.msk [vmem:[%s521 + $0x21] sm:$0xff] %vm311, %v515
      %525 = vst.msk [vmem:[%s521 + $0x31] sm:$0xff] %vm311, %v516
      %526 = vst.msk [vmem:[%s521 + $0x41] sm:$0xff] %vm311, %v517
      %527 = vst.msk [vmem:[%s521 + $0x51] sm:$0xff] %vm311, %v518
      %528 = vst.msk [vmem:[%s521 + $0x61] sm:$0xff] %vm311, %v519
      %529 = vst.msk [vmem:[%s521 + $0x71] sm:$0xff] %vm311, %v520
      %s530 = scalar_lea.vmem %s300, 192
      %v531 = vld [vmem:[%s530] sm:$0xff]
      %v532 = vld [vmem:[%s530 + $0x8] sm:$0xff]
      %v533 = vld [vmem:[%s530 + $0x10] sm:$0xff]
      %v534 = vld [vmem:[%s530 + $0x18] sm:$0xff]
      %v535 = vld [vmem:[%s530 + $0x20] sm:$0xff]
      %v536 = vld [vmem:[%s530 + $0x28] sm:$0xff]
      %v537 = vld [vmem:[%s530 + $0x30] sm:$0xff]
      %v538 = vld [vmem:[%s530 + $0x38] sm:$0xff]
      %v539 = vmul.f32 %v531, %v405
      %v540 = vmul.f32 %v532, %v405
      %v541 = vmul.f32 %v533, %v405
      %v542 = vmul.f32 %v534, %v405
      %v543 = vmul.f32 %v535, %v405
      %v544 = vmul.f32 %v536, %v405
      %v545 = vmul.f32 %v537, %v405
      %v546 = vmul.f32 %v538, %v405
      %v547 = vadd.f32 %v539, %v419
      %v548 = vadd.f32 %v540, %v419
      %v549 = vadd.f32 %v541, %v419
      %v550 = vadd.f32 %v542, %v419
      %v551 = vadd.f32 %v543, %v419
      %v552 = vadd.f32 %v544, %v419
      %v553 = vadd.f32 %v545, %v419
      %v554 = vadd.f32 %v546, %v419
      %v555 = vmax.f32 %v547, 0.0
      %v556 = vmax.f32 %v548, 0.0
      %v557 = vmax.f32 %v549, 0.0
      %v558 = vmax.f32 %v550, 0.0
      %v559 = vmax.f32 %v551, 0.0
      %v560 = vmax.f32 %v552, 0.0
      %v561 = vmax.f32 %v553, 0.0
      %v562 = vmax.f32 %v554, 0.0
      %s563 = scalar_lea.vmem [#allocation2], 496
      %564 = vst.msk [vmem:[%s563 + $0x1] sm:$0xff] %vm311, %v555
      %565 = vst.msk [vmem:[%s563 + $0x11] sm:$0xff] %vm311, %v556
      %566 = vst.msk [vmem:[%s563 + $0x21] sm:$0xff] %vm311, %v557
      %567 = vst.msk [vmem:[%s563 + $0x31] sm:$0xff] %vm311, %v558
      %568 = vst.msk [vmem:[%s563 + $0x41] sm:$0xff] %vm311, %v559
      %569 = vst.msk [vmem:[%s563 + $0x51] sm:$0xff] %vm311, %v560
      %570 = vst.msk [vmem:[%s563 + $0x61] sm:$0xff] %vm311, %v561
      %571 = vst.msk [vmem:[%s563 + $0x71] sm:$0xff] %vm311, %v562
      %s572 = scalar_lea.vmem [#allocation2], 480
      %v573 = vld [vmem:[%s572] sm:$0xff]
      %v574 = vld [vmem:[%s572 + $0x10] sm:$0xff]
      %v575 = vld [vmem:[%s572 + $0x20] sm:$0xff]
      %v576 = vld [vmem:[%s572 + $0x30] sm:$0xff]
      %v577 = vld [vmem:[%s572 + $0x40] sm:$0xff]
      %v578 = vld [vmem:[%s572 + $0x50] sm:$0xff]
      %v579 = vld [vmem:[%s572 + $0x60] sm:$0xff]
      %v580 = vld [vmem:[%s572 + $0x70] sm:$0xff]
      %s581 = scalar_lea.vmem [#allocation2], 320
      %v582 = vld [vmem:[%s581 + $0x1] sm:$0xff]
      %v583 = vld [vmem:[%s581 + $0x11] sm:$0xff]
      %v584 = vld [vmem:[%s581 + $0x21] sm:$0xff]
      %v585 = vld [vmem:[%s581 + $0x31] sm:$0xff]
      %v586 = vld [vmem:[%s581 + $0x41] sm:$0xff]
      %v587 = vld [vmem:[%s581 + $0x51] sm:$0xff]
      %v588 = vld [vmem:[%s581 + $0x61] sm:$0xff]
      %v589 = vld [vmem:[%s581 + $0x71] sm:$0xff]
      %v590 = vld [vmem:[%s572 + $0x1] sm:$0xff]
      %v591 = vld [vmem:[%s572 + $0x11] sm:$0xff]
      %v592 = vld [vmem:[%s572 + $0x21] sm:$0xff]
      %v593 = vld [vmem:[%s572 + $0x31] sm:$0xff]
      %v594 = vld [vmem:[%s572 + $0x41] sm:$0xff]
      %v595 = vld [vmem:[%s572 + $0x51] sm:$0xff]
      %v596 = vld [vmem:[%s572 + $0x61] sm:$0xff]
      %v597 = vld [vmem:[%s572 + $0x71] sm:$0xff]
      %v598 = vld [vmem:[%s479] sm:$0xff]
      %v599 = vld [vmem:[%s479 + $0x10] sm:$0xff]
      %v600 = vld [vmem:[%s479 + $0x20] sm:$0xff]
      %v601 = vld [vmem:[%s479 + $0x30] sm:$0xff]
      %v602 = vld [vmem:[%s479 + $0x40] sm:$0xff]
      %v603 = vld [vmem:[%s479 + $0x50] sm:$0xff]
      %v604 = vld [vmem:[%s479 + $0x60] sm:$0xff]
      %v605 = vld [vmem:[%s479 + $0x70] sm:$0xff]
      %v606 = vld [vmem:[%s437 + $0x1] sm:$0xff]
      %v607 = vld [vmem:[%s437 + $0x11] sm:$0xff]
      %v608 = vld [vmem:[%s437 + $0x21] sm:$0xff]
      %v609 = vld [vmem:[%s437 + $0x31] sm:$0xff]
      %v610 = vld [vmem:[%s437 + $0x41] sm:$0xff]
      %v611 = vld [vmem:[%s437 + $0x51] sm:$0xff]
      %v612 = vld [vmem:[%s437 + $0x61] sm:$0xff]
      %v613 = vld [vmem:[%s437 + $0x71] sm:$0xff]
      %v614 = vld [vmem:[%s479 + $0x1] sm:$0xff]
      %v615 = vld [vmem:[%s479 + $0x11] sm:$0xff]
      %v616 = vld [vmem:[%s479 + $0x21] sm:$0xff]
      %v617 = vld [vmem:[%s479 + $0x31] sm:$0xff]
      %v618 = vld [vmem:[%s479 + $0x41] sm:$0xff]
      %v619 = vld [vmem:[%s479 + $0x51] sm:$0xff]
      %v620 = vld [vmem:[%s479 + $0x61] sm:$0xff]
      %v621 = vld [vmem:[%s479 + $0x71] sm:$0xff]
      %v622 = vld [vmem:[%s563] sm:$0xff]
      %v623 = vld [vmem:[%s563 + $0x10] sm:$0xff]
      %v624 = vld [vmem:[%s563 + $0x20] sm:$0xff]
      %v625 = vld [vmem:[%s563 + $0x30] sm:$0xff]
      %v626 = vld [vmem:[%s563 + $0x40] sm:$0xff]
      %v627 = vld [vmem:[%s563 + $0x50] sm:$0xff]
      %v628 = vld [vmem:[%s563 + $0x60] sm:$0xff]
      %v629 = vld [vmem:[%s563 + $0x70] sm:$0xff]
      %v630 = vld [vmem:[%s521 + $0x1] sm:$0xff]
      %v631 = vld [vmem:[%s521 + $0x11] sm:$0xff]
      %v632 = vld [vmem:[%s521 + $0x21] sm:$0xff]
      %v633 = vld [vmem:[%s521 + $0x31] sm:$0xff]
      %v634 = vld [vmem:[%s521 + $0x41] sm:$0xff]
      %v635 = vld [vmem:[%s521 + $0x51] sm:$0xff]
      %v636 = vld [vmem:[%s521 + $0x61] sm:$0xff]
      %v637 = vld [vmem:[%s521 + $0x71] sm:$0xff]
      %v638 = vld [vmem:[%s563 + $0x1] sm:$0xff]
      %v639 = vld [vmem:[%s563 + $0x11] sm:$0xff]
      %v640 = vld [vmem:[%s563 + $0x21] sm:$0xff]
      %v641 = vld [vmem:[%s563 + $0x31] sm:$0xff]
      %v642 = vld [vmem:[%s563 + $0x41] sm:$0xff]
      %v643 = vld [vmem:[%s563 + $0x51] sm:$0xff]
      %v644 = vld [vmem:[%s563 + $0x61] sm:$0xff]
      %v645 = vld [vmem:[%s563 + $0x71] sm:$0xff]
      %654 = vrot.lane.b32.xlu0 %v582, 8
      %v655 = vpop.permute.xlu0 %654
      %656 = vrot.lane.b32.xlu0 %v583, 8
      %v657 = vpop.permute.xlu0 %656
      %658 = vrot.lane.b32.xlu0 %v584, 8
      %v659 = vpop.permute.xlu0 %658
      %660 = vrot.lane.b32.xlu0 %v585, 8
      %v661 = vpop.permute.xlu0 %660
      %662 = vrot.lane.b32.xlu0 %v586, 8
      %v663 = vpop.permute.xlu0 %662
      %664 = vrot.lane.b32.xlu0 %v587, 8
      %v665 = vpop.permute.xlu0 %664
      %666 = vrot.lane.b32.xlu0 %v588, 8
      %v667 = vpop.permute.xlu0 %666
      %668 = vrot.lane.b32.xlu0 %v589, 8
      %v669 = vpop.permute.xlu0 %668
      %686 = vrot.lane.b32.xlu0 %v590, 16
      %v687 = vpop.permute.xlu0 %686
      %688 = vrot.lane.b32.xlu0 %v591, 16
      %v689 = vpop.permute.xlu0 %688
      %690 = vrot.lane.b32.xlu0 %v592, 16
      %v691 = vpop.permute.xlu0 %690
      %692 = vrot.lane.b32.xlu0 %v593, 16
      %v693 = vpop.permute.xlu0 %692
      %694 = vrot.lane.b32.xlu0 %v594, 16
      %v695 = vpop.permute.xlu0 %694
      %696 = vrot.lane.b32.xlu0 %v595, 16
      %v697 = vpop.permute.xlu0 %696
      %698 = vrot.lane.b32.xlu0 %v596, 16
      %v699 = vpop.permute.xlu0 %698
      %700 = vrot.lane.b32.xlu0 %v597, 16
      %v701 = vpop.permute.xlu0 %700
      %718 = vrot.lane.b32.xlu0 %v598, 24
      %v719 = vpop.permute.xlu0 %718
      %720 = vrot.lane.b32.xlu0 %v599, 24
      %v721 = vpop.permute.xlu0 %720
      %722 = vrot.lane.b32.xlu0 %v600, 24
      %v723 = vpop.permute.xlu0 %722
      %724 = vrot.lane.b32.xlu0 %v601, 24
      %v725 = vpop.permute.xlu0 %724
      %726 = vrot.lane.b32.xlu0 %v602, 24
      %v727 = vpop.permute.xlu0 %726
      %728 = vrot.lane.b32.xlu0 %v603, 24
      %v729 = vpop.permute.xlu0 %728
      %730 = vrot.lane.b32.xlu0 %v604, 24
      %v731 = vpop.permute.xlu0 %730
      %732 = vrot.lane.b32.xlu0 %v605, 24
      %v733 = vpop.permute.xlu0 %732
      %750 = vrot.lane.b32.xlu0 %v606, 32
      %v751 = vpop.permute.xlu0 %750
      %752 = vrot.lane.b32.xlu0 %v607, 32
      %v753 = vpop.permute.xlu0 %752
      %754 = vrot.lane.b32.xlu0 %v608, 32
      %v755 = vpop.permute.xlu0 %754
      %756 = vrot.lane.b32.xlu0 %v609, 32
      %v757 = vpop.permute.xlu0 %756
      %758 = vrot.lane.b32.xlu0 %v610, 32
      %v759 = vpop.permute.xlu0 %758
      %760 = vrot.lane.b32.xlu0 %v611, 32
      %v761 = vpop.permute.xlu0 %760
      %762 = vrot.lane.b32.xlu0 %v612, 32
      %v763 = vpop.permute.xlu0 %762
      %764 = vrot.lane.b32.xlu0 %v613, 32
      %v765 = vpop.permute.xlu0 %764
      %782 = vrot.lane.b32.xlu0 %v614, 40
      %v783 = vpop.permute.xlu0 %782
      %784 = vrot.lane.b32.xlu0 %v615, 40
      %v785 = vpop.permute.xlu0 %784
      %786 = vrot.lane.b32.xlu0 %v616, 40
      %v787 = vpop.permute.xlu0 %786
      %788 = vrot.lane.b32.xlu0 %v617, 40
      %v789 = vpop.permute.xlu0 %788
      %790 = vrot.lane.b32.xlu0 %v618, 40
      %v791 = vpop.permute.xlu0 %790
      %792 = vrot.lane.b32.xlu0 %v619, 40
      %v793 = vpop.permute.xlu0 %792
      %794 = vrot.lane.b32.xlu0 %v620, 40
      %v795 = vpop.permute.xlu0 %794
      %796 = vrot.lane.b32.xlu0 %v621, 40
      %v797 = vpop.permute.xlu0 %796
      %814 = vrot.lane.b32.xlu0 %v622, 48
      %v815 = vpop.permute.xlu0 %814
      %816 = vrot.lane.b32.xlu0 %v623, 48
      %v817 = vpop.permute.xlu0 %816
      %818 = vrot.lane.b32.xlu0 %v624, 48
      %v819 = vpop.permute.xlu0 %818
      %820 = vrot.lane.b32.xlu0 %v625, 48
      %v821 = vpop.permute.xlu0 %820
      %822 = vrot.lane.b32.xlu0 %v626, 48
      %v823 = vpop.permute.xlu0 %822
      %824 = vrot.lane.b32.xlu0 %v627, 48
      %v825 = vpop.permute.xlu0 %824
      %826 = vrot.lane.b32.xlu0 %v628, 48
      %v827 = vpop.permute.xlu0 %826
      %828 = vrot.lane.b32.xlu0 %v629, 48
      %v829 = vpop.permute.xlu0 %828
      %846 = vrot.lane.b32.xlu0 %v630, 56
      %v847 = vpop.permute.xlu0 %846
      %848 = vrot.lane.b32.xlu0 %v631, 56
      %v849 = vpop.permute.xlu0 %848
      %850 = vrot.lane.b32.xlu0 %v632, 56
      %v851 = vpop.permute.xlu0 %850
      %852 = vrot.lane.b32.xlu0 %v633, 56
      %v853 = vpop.permute.xlu0 %852
      %854 = vrot.lane.b32.xlu0 %v634, 56
      %v855 = vpop.permute.xlu0 %854
      %856 = vrot.lane.b32.xlu0 %v635, 56
      %v857 = vpop.permute.xlu0 %856
      %858 = vrot.lane.b32.xlu0 %v636, 56
      %v859 = vpop.permute.xlu0 %858
      %860 = vrot.lane.b32.xlu0 %v637, 56
      %v861 = vpop.permute.xlu0 %860
      %878 = vrot.lane.b32.xlu0 %v638, 64
      %v879 = vpop.permute.xlu0 %878
      %880 = vrot.lane.b32.xlu0 %v639, 64
      %v881 = vpop.permute.xlu0 %880
      %882 = vrot.lane.b32.xlu0 %v640, 64
      %v883 = vpop.permute.xlu0 %882
      %884 = vrot.lane.b32.xlu0 %v641, 64
      %v885 = vpop.permute.xlu0 %884
      %886 = vrot.lane.b32.xlu0 %v642, 64
      %v887 = vpop.permute.xlu0 %886
      %888 = vrot.lane.b32.xlu0 %v643, 64
      %v889 = vpop.permute.xlu0 %888
      %890 = vrot.lane.b32.xlu0 %v644, 64
      %v891 = vpop.permute.xlu0 %890
      %892 = vrot.lane.b32.xlu0 %v645, 64
      %v893 = vpop.permute.xlu0 %892
      %v902 = vsel %vm311, %v573, %v655
      %v903 = vsel %vm311, %v574, %v657
      %v904 = vsel %vm311, %v575, %v659
      %v905 = vsel %vm311, %v576, %v661
      %v906 = vsel %vm311, %v577, %v663
      %v907 = vsel %vm311, %v578, %v665
      %v908 = vsel %vm311, %v579, %v667
      %v909 = vsel %vm311, %v580, %v669
      %vm910 = vcmask 130048
      %v911 = vsel %vm910, %v902, %v687
      %v912 = vsel %vm910, %v903, %v689
      %v913 = vsel %vm910, %v904, %v691
      %v914 = vsel %vm910, %v905, %v693
      %v915 = vsel %vm910, %v906, %v695
      %v916 = vsel %vm910, %v907, %v697
      %v917 = vsel %vm910, %v908, %v699
      %v918 = vsel %vm910, %v909, %v701
      %vm919 = vcmask 195584
      %v920 = vsel %vm919, %v911, %v719
      %v921 = vsel %vm919, %v912, %v721
      %v922 = vsel %vm919, %v913, %v723
      %v923 = vsel %vm919, %v914, %v725
      %v924 = vsel %vm919, %v915, %v727
      %v925 = vsel %vm919, %v916, %v729
      %v926 = vsel %vm919, %v917, %v731
      %v927 = vsel %vm919, %v918, %v733
      %vm928 = vcmask 261120
      %v929 = vsel %vm928, %v920, %v751
      %v930 = vsel %vm928, %v921, %v753
      %v931 = vsel %vm928, %v922, %v755
      %v932 = vsel %vm928, %v923, %v757
      %v933 = vsel %vm928, %v924, %v759
      %v934 = vsel %vm928, %v925, %v761
      %v935 = vsel %vm928, %v926, %v763
      %v936 = vsel %vm928, %v927, %v765
      %vm937 = vcmask 326656
      %v938 = vsel %vm937, %v929, %v783
      %v939 = vsel %vm937, %v930, %v785
      %v940 = vsel %vm937, %v931, %v787
      %v941 = vsel %vm937, %v932, %v789
      %v942 = vsel %vm937, %v933, %v791
      %v943 = vsel %vm937, %v934, %v793
      %v944 = vsel %vm937, %v935, %v795
      %v945 = vsel %vm937, %v936, %v797
      %vm946 = vcmask 392192
      %v947 = vsel %vm946, %v938, %v815
      %v948 = vsel %vm946, %v939, %v817
      %v949 = vsel %vm946, %v940, %v819
      %v950 = vsel %vm946, %v941, %v821
      %v951 = vsel %vm946, %v942, %v823
      %v952 = vsel %vm946, %v943, %v825
      %v953 = vsel %vm946, %v944, %v827
      %v954 = vsel %vm946, %v945, %v829
      %vm955 = vcmask 457728
      %v956 = vsel %vm955, %v947, %v847
      %v957 = vsel %vm955, %v948, %v849
      %v958 = vsel %vm955, %v949, %v851
      %v959 = vsel %vm955, %v950, %v853
      %v960 = vsel %vm955, %v951, %v855
      %v961 = vsel %vm955, %v952, %v857
      %v962 = vsel %vm955, %v953, %v859
      %v963 = vsel %vm955, %v954, %v861
      %vm964 = vcmask 523264
      %v965 = vsel %vm964, %v956, %v879
      %v966 = vsel %vm964, %v957, %v881
      %v967 = vsel %vm964, %v958, %v883
      %v968 = vsel %vm964, %v959, %v885
      %v969 = vsel %vm964, %v960, %v887
      %v970 = vsel %vm964, %v961, %v889
      %v971 = vsel %vm964, %v962, %v891
      %v972 = vsel %vm964, %v963, %v893
      %v973 = vpack.c.bf16 %v966, %v965
      %v974 = vpack.c.bf16 %v968, %v967
      %v975 = vpack.c.bf16 %v970, %v969
      %v976 = vpack.c.bf16 %v972, %v971
      %v977 = vld [vmem:[%s3] sm:$0xf]
      %v978 = vld [vmem:[%s3 + $0x4] sm:$0xf]
      %v979 = vld [vmem:[%s3 + $0x8] sm:$0xf]
      %v980 = vld [vmem:[%s3 + $0xc] sm:$0xf]
      %v981 = vld [vmem:[%s3 + $0x10] sm:$0xf]
      %v982 = vld [vmem:[%s3 + $0x14] sm:$0xf]
      %v983 = vld [vmem:[%s3 + $0x18] sm:$0xf]
      %v984 = vld [vmem:[%s3 + $0x1c] sm:$0xf]
      %v985 = vld [vmem:[%s3 + $0x20] sm:$0xf]
      %v995 = vunpack.c.l.b16 %v977
      %v996 = vunpack.c.l.b16 %v978
      %v997 = vunpack.c.l.b16 %v979
      %v998 = vunpack.c.l.b16 %v980
      %v999 = vunpack.c.l.b16 %v981
      %v1000 = vunpack.c.l.b16 %v982
      %v1001 = vunpack.c.l.b16 %v983
      %v1002 = vunpack.c.l.b16 %v984
      %v1003 = vunpack.c.l.b16 %v985
      %v1004 = vpack.c.b16 %v996, %v995
      %v1005 = vpack.c.b16 %v998, %v997
      %v1006 = vpack.c.b16 %v1000, %v999
      %v1007 = vpack.c.b16 %v1002, %v1001
      %v1008 = vpack.c.b16 %v1003, %v1003
      %vm1013 = vcmask 588800
      %v1015 = vsel %vm1013, %v973, 0
      %v1018 = vsel %vm1013, %v974, 0
      %v1021 = vsel %vm1013, %v975, 0
      %v1024 = vsel %vm1013, %v976, 0
      %vm1026 = vcmask 1043456
      %v1028 = vsel %vm1026, %v1008, 0
      %1030 = vmatprep.subr.bf16.mxu0 0
      %1031 = vmatpush1.bf16.msra.mxu0 %v1004
      %1032 = vmatprep.subr.bf16.mxu0 0
      %1033 = vmatpush1.bf16.msra.mxu0 %v1005
      %1034 = vmatprep.subr.bf16.mxu0 0
      %1035 = vmatpush1.bf16.msra.mxu0 %v1006
      %1036 = vmatprep.subr.bf16.mxu0 0
      %1037 = vmatpush1.bf16.msra.mxu0 %v1007
      %1038 = vmatprep.subr.bf16.mxu0 0
      %1039 = vmatpush1.bf16.msra.mxu0 %v1028
      %1040 = vmatprep.subr.bf16.mxu0 0
      %1041 = vmatpush1.bf16.msra.mxu0 0
      %1042 = vmatprep.subr.bf16.mxu0 0
      %1043 = vmatpush1.bf16.msra.mxu0 0
      %1044 = vmatprep.subr.bf16.mxu0 0
      %1045 = vmatpush1.bf16.msra.mxu0 0
      %1046 = vmatprep.subr.bf16.mxu0 0
      %1047 = vmatpush1.bf16.msra.mxu0 0
      %1048 = vmatprep.subr.bf16.mxu0 0
      %1049 = vmatpush1.bf16.msra.mxu0 0
      %1050 = vmatprep.subr.bf16.mxu0 0
      %1051 = vmatpush1.bf16.msra.mxu0 0
      %1052 = vmatprep.subr.bf16.mxu0 0
      %1053 = vmatpush1.bf16.msra.mxu0 0
      %1054 = vmatprep.subr.bf16.mxu0 0
      %1055 = vmatpush1.bf16.msra.mxu0 0
      %1056 = vmatprep.subr.bf16.mxu0 0
      %1057 = vmatpush1.bf16.msra.mxu0 0
      %1058 = vmatprep.subr.bf16.mxu0 0
      %1059 = vmatpush1.bf16.msra.mxu0 0
      %1060 = vmatprep.subr.bf16.mxu0 0
      %1061 = vmatpush1.bf16.msra.mxu0 0
      %1062 = vmatprep.mubr.bf16.mxu0 0
      %1063 = vmatmul.mubr.bf16.gmra.mrb[0].mxu0 %v1015
      %v1064 = vpop.f32.mrb[0].mxu0
      %v1065 = vadd.f32 0.0, %v1064
      %v1066 = vpop.f32.mrb[0].mxu0
      %v1067 = vpop.f32.mrb[0].mxu0
      %v1068 = vadd.f32 0.0, %v1067
      %v1069 = vpop.f32.mrb[0].mxu0
      %1070 = vmatprep.mubr.bf16.mxu0 0
      %1071 = vmatmul.mubr.bf16.gmra.mrb[0].mxu0 %v1018
      %v1072 = vpop.f32.mrb[0].mxu0
      %v1073 = vadd.f32 0.0, %v1072
      %v1074 = vpop.f32.mrb[0].mxu0
      %v1075 = vpop.f32.mrb[0].mxu0
      %v1076 = vadd.f32 0.0, %v1075
      %v1077 = vpop.f32.mrb[0].mxu0
      %1078 = vmatprep.mubr.bf16.mxu0 0
      %1079 = vmatmul.mubr.bf16.gmra.mrb[0].mxu0 %v1021
      %v1080 = vpop.f32.mrb[0].mxu0
      %v1081 = vadd.f32 0.0, %v1080
      %v1082 = vpop.f32.mrb[0].mxu0
      %v1083 = vpop.f32.mrb[0].mxu0
      %v1084 = vadd.f32 0.0, %v1083
      %v1085 = vpop.f32.mrb[0].mxu0
      %1086 = vmatprep.mubr.bf16.mxu0 0
      %1087 = vmatmul.mubr.bf16.gmra.mrb[0].mxu0 %v1024
      %v1088 = vpop.f32.mrb[0].mxu0
      %v1089 = vadd.f32 0.0, %v1088
      %v1090 = vpop.f32.mrb[0].mxu0
      %v1091 = vpop.f32.mrb[0].mxu0
      %v1092 = vadd.f32 0.0, %v1091
      %v1093 = vpop.f32.mrb[0].mxu0
      %1094 = vdwg.mxu0
      %v1096 = vlaneseq
      %v1097 = vshrl.u32 %v1096, 7
      %v1098 = vsub.s32 0, %v1097
      %v1099 = vrot.slane %v309, %v1098
      %v1101 = vmul.f32 %v1065, %v1099
      %v1102 = vmul.f32 %v1068, %v1099
      %v1103 = vmul.f32 %v1073, %v1099
      %v1104 = vmul.f32 %v1076, %v1099
      %v1105 = vmul.f32 %v1081, %v1099
      %v1106 = vmul.f32 %v1084, %v1099
      %v1107 = vmul.f32 %v1089, %v1099
      %v1108 = vmul.f32 %v1092, %v1099
      %v1110 = vlaneseq
      %v1111 = vshrl.u32 %v1110, 7
      %v1112 = vsub.s32 0, %v1111
      %v1113 = vrot.slane %v310, %v1112
      %v1115 = vadd.f32 %v1101, %v1113
      %v1116 = vadd.f32 %v1102, %v1113
      %v1117 = vadd.f32 %v1103, %v1113
      %v1118 = vadd.f32 %v1104, %v1113
      %v1119 = vadd.f32 %v1105, %v1113
      %v1120 = vadd.f32 %v1106, %v1113
      %v1121 = vadd.f32 %v1107, %v1113
      %v1122 = vadd.f32 %v1108, %v1113
      %v1123 = vmax.f32 %v1115, 0.0
      %v1124 = vmax.f32 %v1116, 0.0
      %v1125 = vmax.f32 %v1117, 0.0
      %v1126 = vmax.f32 %v1118, 0.0
      %v1127 = vmax.f32 %v1119, 0.0
      %v1128 = vmax.f32 %v1120, 0.0
      %v1129 = vmax.f32 %v1121, 0.0
      %v1130 = vmax.f32 %v1122, 0.0
      %1131 = vst.msk [vmem:[#allocation3] sm:$0xff] %vm910, 0.0
      %vm1132 = vcmask 123904
      %1133 = vst.msk [vmem:[#allocation3 + $0x8] sm:$0x3] %vm1132, 0.0
      %1134 = vst.msk [vmem:[#allocation3 + $0x10] sm:$0xff] %vm910, 0.0
      %1135 = vst.msk [vmem:[#allocation3 + $0x18] sm:$0x3] %vm1132, 0.0
      %1136 = vst.msk [vmem:[#allocation3 + $0x20] sm:$0xff] %vm910, 0.0
      %1137 = vst.msk [vmem:[#allocation3 + $0x28] sm:$0x3] %vm1132, 0.0
      %1138 = vst.msk [vmem:[#allocation3 + $0x30] sm:$0xff] %vm910, 0.0
      %1139 = vst.msk [vmem:[#allocation3 + $0x38] sm:$0x3] %vm1132, 0.0
      %1140 = vst.msk [vmem:[#allocation3 + $0x40] sm:$0xff] %vm910, 0.0
      %1141 = vst.msk [vmem:[#allocation3 + $0x48] sm:$0x3] %vm1132, 0.0
      %1142 = vst.msk [vmem:[#allocation3 + $0x50] sm:$0xff] %vm910, 0.0
      %1143 = vst.msk [vmem:[#allocation3 + $0x58] sm:$0x3] %vm1132, 0.0
      %1144 = vst.msk [vmem:[#allocation3 + $0x60] sm:$0xff] %vm910, 0.0
      %1145 = vst.msk [vmem:[#allocation3 + $0x68] sm:$0x3] %vm1132, 0.0
      %1146 = vst.msk [vmem:[#allocation3 + $0x70] sm:$0xff] %vm910, 0.0
      %1147 = vst.msk [vmem:[#allocation3 + $0x78] sm:$0x3] %vm1132, 0.0
      %1148 = vst.msk [vmem:[#allocation3 + $0x80] sm:$0xff] %vm910, 0.0
      %1149 = vst.msk [vmem:[#allocation3 + $0x88] sm:$0x3] %vm1132, 0.0
      %1150 = vst.msk [vmem:[#allocation3 + $0x90] sm:$0xff] %vm910, 0.0
      %1151 = vst.msk [vmem:[#allocation3 + $0x98] sm:$0x3] %vm1132, 0.0
      %s1152 = scalar_lea.vmem [#allocation3], 16
      %1153 = vst.msk [vmem:[%s1152 + $0x1] sm:$0xff] %vm910, %v1123
      %1154 = vst.msk [vmem:[%s1152 + $0x11] sm:$0xff] %vm910, %v1124
      %1155 = vst.msk [vmem:[%s1152 + $0x21] sm:$0xff] %vm910, %v1125
      %1156 = vst.msk [vmem:[%s1152 + $0x31] sm:$0xff] %vm910, %v1126
      %1157 = vst.msk [vmem:[%s1152 + $0x41] sm:$0xff] %vm910, %v1127
      %1158 = vst.msk [vmem:[%s1152 + $0x51] sm:$0xff] %vm910, %v1128
      %1159 = vst.msk [vmem:[%s1152 + $0x61] sm:$0xff] %vm910, %v1129
      %1160 = vst.msk [vmem:[%s1152 + $0x71] sm:$0xff] %vm910, %v1130
      %v1161 = vld [vmem:[#allocation3] sm:$0xff]
      %v1162 = vld [vmem:[#allocation3 + $0x10] sm:$0xff]
      %v1163 = vld [vmem:[#allocation3 + $0x20] sm:$0xff]
      %v1164 = vld [vmem:[#allocation3 + $0x30] sm:$0xff]
      %v1165 = vld [vmem:[#allocation3 + $0x40] sm:$0xff]
      %v1166 = vld [vmem:[#allocation3 + $0x50] sm:$0xff]
      %v1167 = vld [vmem:[#allocation3 + $0x60] sm:$0xff]
      %v1168 = vld [vmem:[#allocation3 + $0x70] sm:$0xff]
      %v1169 = vld [vmem:[#allocation3 + $0x1] sm:$0xff]
      %v1170 = vld [vmem:[#allocation3 + $0x11] sm:$0xff]
      %v1171 = vld [vmem:[#allocation3 + $0x21] sm:$0xff]
      %v1172 = vld [vmem:[#allocation3 + $0x31] sm:$0xff]
      %v1173 = vld [vmem:[#allocation3 + $0x41] sm:$0xff]
      %v1174 = vld [vmem:[#allocation3 + $0x51] sm:$0xff]
      %v1175 = vld [vmem:[#allocation3 + $0x61] sm:$0xff]
      %v1176 = vld [vmem:[#allocation3 + $0x71] sm:$0xff]
      %v1177 = vld [vmem:[#allocation3 + $0x2] sm:$0xff]
      %v1178 = vld [vmem:[#allocation3 + $0x12] sm:$0xff]
      %v1179 = vld [vmem:[#allocation3 + $0x22] sm:$0xff]
      %v1180 = vld [vmem:[#allocation3 + $0x32] sm:$0xff]
      %v1181 = vld [vmem:[#allocation3 + $0x42] sm:$0xff]
      %v1182 = vld [vmem:[#allocation3 + $0x52] sm:$0xff]
      %v1183 = vld [vmem:[#allocation3 + $0x62] sm:$0xff]
      %v1184 = vld [vmem:[#allocation3 + $0x72] sm:$0xff]
      %v1185 = vld [vmem:[%s1152] sm:$0xff]
      %v1186 = vld [vmem:[%s1152 + $0x10] sm:$0xff]
      %v1187 = vld [vmem:[%s1152 + $0x20] sm:$0xff]
      %v1188 = vld [vmem:[%s1152 + $0x30] sm:$0xff]
      %v1189 = vld [vmem:[%s1152 + $0x40] sm:$0xff]
      %v1190 = vld [vmem:[%s1152 + $0x50] sm:$0xff]
      %v1191 = vld [vmem:[%s1152 + $0x60] sm:$0xff]
      %v1192 = vld [vmem:[%s1152 + $0x70] sm:$0xff]
      %v1193 = vld [vmem:[%s1152 + $0x1] sm:$0xff]
      %v1194 = vld [vmem:[%s1152 + $0x11] sm:$0xff]
      %v1195 = vld [vmem:[%s1152 + $0x21] sm:$0xff]
      %v1196 = vld [vmem:[%s1152 + $0x31] sm:$0xff]
      %v1197 = vld [vmem:[%s1152 + $0x41] sm:$0xff]
      %v1198 = vld [vmem:[%s1152 + $0x51] sm:$0xff]
      %v1199 = vld [vmem:[%s1152 + $0x61] sm:$0xff]
      %v1200 = vld [vmem:[%s1152 + $0x71] sm:$0xff]
      %v1201 = vld [vmem:[%s1152 + $0x2] sm:$0xff]
      %v1202 = vld [vmem:[%s1152 + $0x12] sm:$0xff]
      %v1203 = vld [vmem:[%s1152 + $0x22] sm:$0xff]
      %v1204 = vld [vmem:[%s1152 + $0x32] sm:$0xff]
      %v1205 = vld [vmem:[%s1152 + $0x42] sm:$0xff]
      %v1206 = vld [vmem:[%s1152 + $0x52] sm:$0xff]
      %v1207 = vld [vmem:[%s1152 + $0x62] sm:$0xff]
      %v1208 = vld [vmem:[%s1152 + $0x72] sm:$0xff]
      %s1209 = scalar_lea.vmem [#allocation3], 32
      %v1210 = vld [vmem:[%s1209] sm:$0xff]
      %v1211 = vld [vmem:[%s1209 + $0x10] sm:$0xff]
      %v1212 = vld [vmem:[%s1209 + $0x20] sm:$0xff]
      %v1213 = vld [vmem:[%s1209 + $0x30] sm:$0xff]
      %v1214 = vld [vmem:[%s1209 + $0x40] sm:$0xff]
      %v1215 = vld [vmem:[%s1209 + $0x50] sm:$0xff]
      %v1216 = vld [vmem:[%s1209 + $0x60] sm:$0xff]
      %v1217 = vld [vmem:[%s1209 + $0x70] sm:$0xff]
      %v1218 = vld [vmem:[%s1209 + $0x1] sm:$0xff]
      %v1219 = vld [vmem:[%s1209 + $0x11] sm:$0xff]
      %v1220 = vld [vmem:[%s1209 + $0x21] sm:$0xff]
      %v1221 = vld [vmem:[%s1209 + $0x31] sm:$0xff]
      %v1222 = vld [vmem:[%s1209 + $0x41] sm:$0xff]
      %v1223 = vld [vmem:[%s1209 + $0x51] sm:$0xff]
      %v1224 = vld [vmem:[%s1209 + $0x61] sm:$0xff]
      %v1225 = vld [vmem:[%s1209 + $0x71] sm:$0xff]
      %v1226 = vld [vmem:[%s1209 + $0x2] sm:$0xff]
      %v1227 = vld [vmem:[%s1209 + $0x12] sm:$0xff]
      %v1228 = vld [vmem:[%s1209 + $0x22] sm:$0xff]
      %v1229 = vld [vmem:[%s1209 + $0x32] sm:$0xff]
      %v1230 = vld [vmem:[%s1209 + $0x42] sm:$0xff]
      %v1231 = vld [vmem:[%s1209 + $0x52] sm:$0xff]
      %v1232 = vld [vmem:[%s1209 + $0x62] sm:$0xff]
      %v1233 = vld [vmem:[%s1209 + $0x72] sm:$0xff]
      %1242 = vrot.lane.b32.xlu0 %v1169, 16
      %v1243 = vpop.permute.xlu0 %1242
      %1244 = vrot.lane.b32.xlu0 %v1170, 16
      %v1245 = vpop.permute.xlu0 %1244
      %1246 = vrot.lane.b32.xlu0 %v1171, 16
      %v1247 = vpop.permute.xlu0 %1246
      %1248 = vrot.lane.b32.xlu0 %v1172, 16
      %v1249 = vpop.permute.xlu0 %1248
      %1250 = vrot.lane.b32.xlu0 %v1173, 16
      %v1251 = vpop.permute.xlu0 %1250
      %1252 = vrot.lane.b32.xlu0 %v1174, 16
      %v1253 = vpop.permute.xlu0 %1252
      %1254 = vrot.lane.b32.xlu0 %v1175, 16
      %v1255 = vpop.permute.xlu0 %1254
      %1256 = vrot.lane.b32.xlu0 %v1176, 16
      %v1257 = vpop.permute.xlu0 %1256
      %1274 = vrot.lane.b32.xlu0 %v1177, 32
      %v1275 = vpop.permute.xlu0 %1274
      %1276 = vrot.lane.b32.xlu0 %v1178, 32
      %v1277 = vpop.permute.xlu0 %1276
      %1278 = vrot.lane.b32.xlu0 %v1179, 32
      %v1279 = vpop.permute.xlu0 %1278
      %1280 = vrot.lane.b32.xlu0 %v1180, 32
      %v1281 = vpop.permute.xlu0 %1280
      %1282 = vrot.lane.b32.xlu0 %v1181, 32
      %v1283 = vpop.permute.xlu0 %1282
      %1284 = vrot.lane.b32.xlu0 %v1182, 32
      %v1285 = vpop.permute.xlu0 %1284
      %1286 = vrot.lane.b32.xlu0 %v1183, 32
      %v1287 = vpop.permute.xlu0 %1286
      %1288 = vrot.lane.b32.xlu0 %v1184, 32
      %v1289 = vpop.permute.xlu0 %1288
      %1306 = vrot.lane.b32.xlu0 %v1185, 48
      %v1307 = vpop.permute.xlu0 %1306
      %1308 = vrot.lane.b32.xlu0 %v1186, 48
      %v1309 = vpop.permute.xlu0 %1308
      %1310 = vrot.lane.b32.xlu0 %v1187, 48
      %v1311 = vpop.permute.xlu0 %1310
      %1312 = vrot.lane.b32.xlu0 %v1188, 48
      %v1313 = vpop.permute.xlu0 %1312
      %1314 = vrot.lane.b32.xlu0 %v1189, 48
      %v1315 = vpop.permute.xlu0 %1314
      %1316 = vrot.lane.b32.xlu0 %v1190, 48
      %v1317 = vpop.permute.xlu0 %1316
      %1318 = vrot.lane.b32.xlu0 %v1191, 48
      %v1319 = vpop.permute.xlu0 %1318
      %1320 = vrot.lane.b32.xlu0 %v1192, 48
      %v1321 = vpop.permute.xlu0 %1320
      %1338 = vrot.lane.b32.xlu0 %v1193, 64
      %v1339 = vpop.permute.xlu0 %1338
      %1340 = vrot.lane.b32.xlu0 %v1194, 64
      %v1341 = vpop.permute.xlu0 %1340
      %1342 = vrot.lane.b32.xlu0 %v1195, 64
      %v1343 = vpop.permute.xlu0 %1342
      %1344 = vrot.lane.b32.xlu0 %v1196, 64
      %v1345 = vpop.permute.xlu0 %1344
      %1346 = vrot.lane.b32.xlu0 %v1197, 64
      %v1347 = vpop.permute.xlu0 %1346
      %1348 = vrot.lane.b32.xlu0 %v1198, 64
      %v1349 = vpop.permute.xlu0 %1348
      %1350 = vrot.lane.b32.xlu0 %v1199, 64
      %v1351 = vpop.permute.xlu0 %1350
      %1352 = vrot.lane.b32.xlu0 %v1200, 64
      %v1353 = vpop.permute.xlu0 %1352
      %1370 = vrot.lane.b32.xlu0 %v1201, 80
      %v1371 = vpop.permute.xlu0 %1370
      %1372 = vrot.lane.b32.xlu0 %v1202, 80
      %v1373 = vpop.permute.xlu0 %1372
      %1374 = vrot.lane.b32.xlu0 %v1203, 80
      %v1375 = vpop.permute.xlu0 %1374
      %1376 = vrot.lane.b32.xlu0 %v1204, 80
      %v1377 = vpop.permute.xlu0 %1376
      %1378 = vrot.lane.b32.xlu0 %v1205, 80
      %v1379 = vpop.permute.xlu0 %1378
      %1380 = vrot.lane.b32.xlu0 %v1206, 80
      %v1381 = vpop.permute.xlu0 %1380
      %1382 = vrot.lane.b32.xlu0 %v1207, 80
      %v1383 = vpop.permute.xlu0 %1382
      %1384 = vrot.lane.b32.xlu0 %v1208, 80
      %v1385 = vpop.permute.xlu0 %1384
      %1402 = vrot.lane.b32.xlu0 %v1210, 96
      %v1403 = vpop.permute.xlu0 %1402
      %1404 = vrot.lane.b32.xlu0 %v1211, 96
      %v1405 = vpop.permute.xlu0 %1404
      %1406 = vrot.lane.b32.xlu0 %v1212, 96
      %v1407 = vpop.permute.xlu0 %1406
      %1408 = vrot.lane.b32.xlu0 %v1213, 96
      %v1409 = vpop.permute.xlu0 %1408
      %1410 = vrot.lane.b32.xlu0 %v1214, 96
      %v1411 = vpop.permute.xlu0 %1410
      %1412 = vrot.lane.b32.xlu0 %v1215, 96
      %v1413 = vpop.permute.xlu0 %1412
      %1414 = vrot.lane.b32.xlu0 %v1216, 96
      %v1415 = vpop.permute.xlu0 %1414
      %1416 = vrot.lane.b32.xlu0 %v1217, 96
      %v1417 = vpop.permute.xlu0 %1416
      %1434 = vrot.lane.b32.xlu0 %v1218, 112
      %v1435 = vpop.permute.xlu0 %1434
      %1436 = vrot.lane.b32.xlu0 %v1219, 112
      %v1437 = vpop.permute.xlu0 %1436
      %1438 = vrot.lane.b32.xlu0 %v1220, 112
      %v1439 = vpop.permute.xlu0 %1438
      %1440 = vrot.lane.b32.xlu0 %v1221, 112
      %v1441 = vpop.permute.xlu0 %1440
      %1442 = vrot.lane.b32.xlu0 %v1222, 112
      %v1443 = vpop.permute.xlu0 %1442
      %1444 = vrot.lane.b32.xlu0 %v1223, 112
      %v1445 = vpop.permute.xlu0 %1444
      %1446 = vrot.lane.b32.xlu0 %v1224, 112
      %v1447 = vpop.permute.xlu0 %1446
      %1448 = vrot.lane.b32.xlu0 %v1225, 112
      %v1449 = vpop.permute.xlu0 %1448
      %v1458 = vsel %vm910, %v1161, %v1243
      %v1459 = vsel %vm910, %v1162, %v1245
      %v1460 = vsel %vm910, %v1163, %v1247
      %v1461 = vsel %vm910, %v1164, %v1249
      %v1462 = vsel %vm910, %v1165, %v1251
      %v1463 = vsel %vm910, %v1166, %v1253
      %v1464 = vsel %vm910, %v1167, %v1255
      %v1465 = vsel %vm910, %v1168, %v1257
      %v1466 = vsel %vm928, %v1458, %v1275
      %v1467 = vsel %vm928, %v1459, %v1277
      %v1468 = vsel %vm928, %v1460, %v1279
      %v1469 = vsel %vm928, %v1461, %v1281
      %v1470 = vsel %vm928, %v1462, %v1283
      %v1471 = vsel %vm928, %v1463, %v1285
      %v1472 = vsel %vm928, %v1464, %v1287
      %v1473 = vsel %vm928, %v1465, %v1289
      %v1474 = vsel %vm946, %v1466, %v1307
      %v1475 = vsel %vm946, %v1467, %v1309
      %v1476 = vsel %vm946, %v1468, %v1311
      %v1477 = vsel %vm946, %v1469, %v1313
      %v1478 = vsel %vm946, %v1470, %v1315
      %v1479 = vsel %vm946, %v1471, %v1317
      %v1480 = vsel %vm946, %v1472, %v1319
      %v1481 = vsel %vm946, %v1473, %v1321
      %v1482 = vsel %vm964, %v1474, %v1339
      %v1483 = vsel %vm964, %v1475, %v1341
      %v1484 = vsel %vm964, %v1476, %v1343
      %v1485 = vsel %vm964, %v1477, %v1345
      %v1486 = vsel %vm964, %v1478, %v1347
      %v1487 = vsel %vm964, %v1479, %v1349
      %v1488 = vsel %vm964, %v1480, %v1351
      %v1489 = vsel %vm964, %v1481, %v1353
      %vm1490 = vcmask 654336
      %v1491 = vsel %vm1490, %v1482, %v1371
      %v1492 = vsel %vm1490, %v1483, %v1373
      %v1493 = vsel %vm1490, %v1484, %v1375
      %v1494 = vsel %vm1490, %v1485, %v1377
      %v1495 = vsel %vm1490, %v1486, %v1379
      %v1496 = vsel %vm1490, %v1487, %v1381
      %v1497 = vsel %vm1490, %v1488, %v1383
      %v1498 = vsel %vm1490, %v1489, %v1385
      %vm1499 = vcmask 785408
      %v1500 = vsel %vm1499, %v1491, %v1403
      %v1501 = vsel %vm1499, %v1492, %v1405
      %v1502 = vsel %vm1499, %v1493, %v1407
      %v1503 = vsel %vm1499, %v1494, %v1409
      %v1504 = vsel %vm1499, %v1495, %v1411
      %v1505 = vsel %vm1499, %v1496, %v1413
      %v1506 = vsel %vm1499, %v1497, %v1415
      %v1507 = vsel %vm1499, %v1498, %v1417
      %vm1508 = vcmask 916480
      %v1509 = vsel %vm1508, %v1500, %v1435
      %v1510 = vsel %vm1508, %v1501, %v1437
      %v1511 = vsel %vm1508, %v1502, %v1439
      %v1512 = vsel %vm1508, %v1503, %v1441
      %v1513 = vsel %vm1508, %v1504, %v1443
      %v1514 = vsel %vm1508, %v1505, %v1445
      %v1515 = vsel %vm1508, %v1506, %v1447
      %v1516 = vsel %vm1508, %v1507, %v1449
      %v1517 = vpack.c.bf16 %v1510, %v1509
      %v1518 = vpack.c.bf16 %v1227, %v1226
      %v1519 = vpack.c.bf16 %v1512, %v1511
      %v1520 = vpack.c.bf16 %v1229, %v1228
      %v1521 = vpack.c.bf16 %v1514, %v1513
      %v1522 = vpack.c.bf16 %v1231, %v1230
      %v1523 = vpack.c.bf16 %v1516, %v1515
      %v1524 = vpack.c.bf16 %v1233, %v1232
      %v1525 = vld [vmem:[%s6] sm:$0xf]
      %v1526 = vld [vmem:[%s6 + $0x4] sm:$0xf]
      %v1527 = vld [vmem:[%s6 + $0x8] sm:$0xf]
      %v1528 = vld [vmem:[%s6 + $0xc] sm:$0xf]
      %v1529 = vld [vmem:[%s6 + $0x10] sm:$0xf]
      %v1530 = vld [vmem:[%s6 + $0x14] sm:$0xf]
      %v1531 = vld [vmem:[%s6 + $0x18] sm:$0xf]
      %v1532 = vld [vmem:[%s6 + $0x1c] sm:$0xf]
      %v1533 = vld [vmem:[%s6 + $0x20] sm:$0xf]
      %v1534 = vld [vmem:[%s6 + $0x24] sm:$0xf]
      %v1535 = vld [vmem:[%s6 + $0x28] sm:$0xf]
      %v1536 = vld [vmem:[%s6 + $0x2c] sm:$0xf]
      %v1537 = vld [vmem:[%s6 + $0x30] sm:$0xf]
      %v1538 = vld [vmem:[%s6 + $0x34] sm:$0xf]
      %v1539 = vld [vmem:[%s6 + $0x38] sm:$0xf]
      %v1540 = vld [vmem:[%s6 + $0x3c] sm:$0xf]
      %v1541 = vld [vmem:[%s6 + $0x40] sm:$0xf]
      %v1542 = vld [vmem:[%s6 + $0x44] sm:$0xf]
      %v1543 = vld [vmem:[%s437 + $0x1] sm:$0xff]
      %v1544 = vld [vmem:[%s437 + $0x11] sm:$0xff]
      %v1545 = vld [vmem:[%s437 + $0x21] sm:$0xff]
      %v1546 = vld [vmem:[%s437 + $0x31] sm:$0xff]
      %v1547 = vld [vmem:[%s437 + $0x41] sm:$0xff]
      %v1548 = vld [vmem:[%s437 + $0x51] sm:$0xff]
      %v1549 = vld [vmem:[%s437 + $0x61] sm:$0xff]
      %v1550 = vld [vmem:[%s437 + $0x71] sm:$0xff]
      %v1551 = vpack.c.bf16 %v1544, %v1543
      %v1552 = vpack.c.bf16 %v1546, %v1545
      %v1553 = vpack.c.bf16 %v1548, %v1547
      %v1554 = vpack.c.bf16 %v1550, %v1549
      %v1555 = vld [vmem:[%s7] sm:$0xf]
      %v1557 = vsel %vm311, %v1551, 0
      %v1560 = vsel %vm311, %v1552, 0
      %v1563 = vsel %vm311, %v1553, 0
      %v1566 = vsel %vm311, %v1554, 0
      %v1569 = vsel %vm1026, %v1555, 0
      %1571 = vmatprep.subr.bf16.mxu0 0
      %1572 = vmatpush1.bf16.msra.mxu0 %v1569
      %1573 = vmatprep.subr.bf16.mxu0 0
      %1574 = vmatpush1.bf16.msra.mxu0 0
      %1575 = vmatprep.subr.bf16.mxu0 0
      %1576 = vmatpush1.bf16.msra.mxu0 0
      %1577 = vmatprep.subr.bf16.mxu0 0
      %1578 = vmatpush1.bf16.msra.mxu0 0
      %1579 = vmatprep.subr.bf16.mxu0 0
      %1580 = vmatpush1.bf16.msra.mxu0 0
      %1581 = vmatprep.subr.bf16.mxu0 0
      %1582 = vmatpush1.bf16.msra.mxu0 0
      %1583 = vmatprep.subr.bf16.mxu0 0
      %1584 = vmatpush1.bf16.msra.mxu0 0
      %1585 = vmatprep.subr.bf16.mxu0 0
      %1586 = vmatpush1.bf16.msra.mxu0 0
      %1587 = vmatprep.subr.bf16.mxu0 0
      %1588 = vmatpush1.bf16.msra.mxu0 0
      %1589 = vmatprep.subr.bf16.mxu0 0
      %1590 = vmatpush1.bf16.msra.mxu0 0
      %1591 = vmatprep.subr.bf16.mxu0 0
      %1592 = vmatpush1.bf16.msra.mxu0 0
      %1593 = vmatprep.subr.bf16.mxu0 0
      %1594 = vmatpush1.bf16.msra.mxu0 0
      %1595 = vmatprep.subr.bf16.mxu0 0
      %1596 = vmatpush1.bf16.msra.mxu0 0
      %1597 = vmatprep.subr.bf16.mxu0 0
      %1598 = vmatpush1.bf16.msra.mxu0 0
      %1599 = vmatprep.subr.bf16.mxu0 0
      %1600 = vmatpush1.bf16.msra.mxu0 0
      %1601 = vmatprep.subr.bf16.mxu0 0
      %1602 = vmatpush1.bf16.msra.mxu0 0
      %1603 = vmatprep.mubr.bf16.mxu0 0
      %1604 = vmatmul.mubr.bf16.gmra.mrb[0].mxu0 %v1557
      %v1605 = vpop.f32.mrb[0].mxu0
      %v1606 = vadd.f32 0.0, %v1605
      %v1607 = vpop.f32.mrb[0].mxu0
      %v1608 = vpop.f32.mrb[0].mxu0
      %v1609 = vadd.f32 0.0, %v1608
      %v1610 = vpop.f32.mrb[0].mxu0
      %1611 = vmatprep.mubr.bf16.mxu0 0
      %1612 = vmatmul.mubr.bf16.gmra.mrb[0].mxu0 %v1560
      %v1613 = vpop.f32.mrb[0].mxu0
      %v1614 = vadd.f32 0.0, %v1613
      %v1615 = vpop.f32.mrb[0].mxu0
      %v1616 = vpop.f32.mrb[0].mxu0
      %v1617 = vadd.f32 0.0, %v1616
      %v1618 = vpop.f32.mrb[0].mxu0
      %1619 = vmatprep.mubr.bf16.mxu0 0
      %1620 = vmatmul.mubr.bf16.gmra.mrb[0].mxu0 %v1563
      %v1621 = vpop.f32.mrb[0].mxu0
      %v1622 = vadd.f32 0.0, %v1621
      %v1623 = vpop.f32.mrb[0].mxu0
      %v1624 = vpop.f32.mrb[0].mxu0
      %v1625 = vadd.f32 0.0, %v1624
      %v1626 = vpop.f32.mrb[0].mxu0
      %1627 = vmatprep.mubr.bf16.mxu0 0
      %1628 = vmatmul.mubr.bf16.gmra.mrb[0].mxu0 %v1566
      %v1629 = vpop.f32.mrb[0].mxu0
      %v1630 = vadd.f32 0.0, %v1629
      %v1631 = vpop.f32.mrb[0].mxu0
      %v1632 = vpop.f32.mrb[0].mxu0
      %v1633 = vadd.f32 0.0, %v1632
      %v1634 = vpop.f32.mrb[0].mxu0
      %1635 = vdwg.mxu0
      %v1654 = vunpack.c.l.b16 %v1525
      %v1655 = vunpack.c.l.b16 %v1526
      %v1656 = vunpack.c.l.b16 %v1527
      %v1657 = vunpack.c.l.b16 %v1528
      %v1658 = vunpack.c.l.b16 %v1529
      %v1659 = vunpack.c.l.b16 %v1530
      %v1660 = vunpack.c.l.b16 %v1531
      %v1661 = vunpack.c.l.b16 %v1532
      %v1662 = vunpack.c.l.b16 %v1533
      %v1663 = vunpack.c.l.b16 %v1534
      %v1664 = vunpack.c.l.b16 %v1535
      %v1665 = vunpack.c.l.b16 %v1536
      %v1666 = vunpack.c.l.b16 %v1537
      %v1667 = vunpack.c.l.b16 %v1538
      %v1668 = vunpack.c.l.b16 %v1539
      %v1669 = vunpack.c.l.b16 %v1540
      %v1670 = vunpack.c.l.b16 %v1541
      %v1671 = vunpack.c.l.b16 %v1542
      %v1672 = vpack.c.b16 %v1655, %v1654
      %v1673 = vpack.c.b16 %v1657, %v1656
      %v1674 = vpack.c.b16 %v1659, %v1658
      %v1675 = vpack.c.b16 %v1661, %v1660
      %v1676 = vpack.c.b16 %v1663, %v1662
      %v1677 = vpack.c.b16 %v1665, %v1664
      %v1678 = vpack.c.b16 %v1667, %v1666
      %v1679 = vpack.c.b16 %v1669, %v1668
      %v1680 = vpack.c.b16 %v1671, %v1670
      %v1691 = vsel %vm910, %v1518, 0
      %v1694 = vsel %vm910, %v1520, 0
      %v1697 = vsel %vm910, %v1522, 0
      %v1700 = vsel %vm910, %v1524, 0
      %1702 = vmatprep.subr.bf16.mxu0 0
      %1703 = vmatpush1.bf16.msra.mxu0 %v1672
      %1704 = vmatprep.subr.bf16.mxu0 0
      %1705 = vmatpush1.bf16.msra.mxu0 %v1673
      %1706 = vmatprep.subr.bf16.mxu0 0
      %1707 = vmatpush1.bf16.msra.mxu0 %v1674
      %1708 = vmatprep.subr.bf16.mxu0 0
      %1709 = vmatpush1.bf16.msra.mxu0 %v1675
      %1710 = vmatprep.subr.bf16.mxu0 0
      %1711 = vmatpush1.bf16.msra.mxu0 %v1676
      %1712 = vmatprep.subr.bf16.mxu0 0
      %1713 = vmatpush1.bf16.msra.mxu0 %v1677
      %1714 = vmatprep.subr.bf16.mxu0 0
      %1715 = vmatpush1.bf16.msra.mxu0 %v1678
      %1716 = vmatprep.subr.bf16.mxu0 0
      %1717 = vmatpush1.bf16.msra.mxu0 %v1679
      %1718 = vmatprep.subr.bf16.mxu0 0
      %1719 = vmatpush1.bf16.msra.mxu0 %v1680
      %1720 = vmatprep.subr.bf16.mxu0 0
      %1721 = vmatpush1.bf16.msra.mxu0 0
      %1722 = vmatprep.subr.bf16.mxu0 0
      %1723 = vmatpush1.bf16.msra.mxu0 0
      %1724 = vmatprep.subr.bf16.mxu0 0
      %1725 = vmatpush1.bf16.msra.mxu0 0
      %1726 = vmatprep.subr.bf16.mxu0 0
      %1727 = vmatpush1.bf16.msra.mxu0 0
      %1728 = vmatprep.subr.bf16.mxu0 0
      %1729 = vmatpush1.bf16.msra.mxu0 0
      %1730 = vmatprep.subr.bf16.mxu0 0
      %1731 = vmatpush1.bf16.msra.mxu0 0
      %1732 = vmatprep.subr.bf16.mxu0 0
      %1733 = vmatpush1.bf16.msra.mxu0 0
      %1734 = vmatprep.mubr.bf16.mxu0 %v1691
      %1735 = vmatmul.mubr.bf16.gmra.mrb[0].mxu0 %v1517
      %v1736 = vpop.f32.mrb[0].mxu0
      %v1737 = vadd.f32 %v1606, %v1736
      %v1738 = vpop.f32.mrb[0].mxu0
      %v1739 = vpop.f32.mrb[0].mxu0
      %v1740 = vadd.f32 %v1609, %v1739
      %v1741 = vpop.f32.mrb[0].mxu0
      %1742 = vmatprep.mubr.bf16.mxu0 %v1694
      %1743 = vmatmul.mubr.bf16.gmra.mrb[0].mxu0 %v1519
      %v1744 = vpop.f32.mrb[0].mxu0
      %v1745 = vadd.f32 %v1614, %v1744
      %v1746 = vpop.f32.mrb[0].mxu0
      %v1747 = vpop.f32.mrb[0].mxu0
      %v1748 = vadd.f32 %v1617, %v1747
      %v1749 = vpop.f32.mrb[0].mxu0
      %1750 = vmatprep.mubr.bf16.mxu0 %v1697
      %1751 = vmatmul.mubr.bf16.gmra.mrb[0].mxu0 %v1521
      %v1752 = vpop.f32.mrb[0].mxu0
      %v1753 = vadd.f32 %v1622, %v1752
      %v1754 = vpop.f32.mrb[0].mxu0
      %v1755 = vpop.f32.mrb[0].mxu0
      %v1756 = vadd.f32 %v1625, %v1755
      %v1757 = vpop.f32.mrb[0].mxu0
      %1758 = vmatprep.mubr.bf16.mxu0 %v1700
      %1759 = vmatmul.mubr.bf16.gmra.mrb[0].mxu0 %v1523
      %v1760 = vpop.f32.mrb[0].mxu0
      %v1761 = vadd.f32 %v1630, %v1760
      %v1762 = vpop.f32.mrb[0].mxu0
      %v1763 = vpop.f32.mrb[0].mxu0
      %v1764 = vadd.f32 %v1633, %v1763
      %v1765 = vpop.f32.mrb[0].mxu0
      %1766 = vdwg.mxu0
      %1767 = vst.msk [vmem:[%s305] sm:$0xff] %vm910, %v1737
      %1768 = vst.msk [vmem:[%s305 + $0x8] sm:$0xff] %vm910, %v1740
      %1769 = vst.msk [vmem:[%s305 + $0x10] sm:$0xff] %vm910, %v1745
      %1770 = vst.msk [vmem:[%s305 + $0x18] sm:$0xff] %vm910, %v1748
      %1771 = vst.msk [vmem:[%s305 + $0x20] sm:$0xff] %vm910, %v1753
      %1772 = vst.msk [vmem:[%s305 + $0x28] sm:$0xff] %vm910, %v1756
      %1773 = vst.msk [vmem:[%s305 + $0x30] sm:$0xff] %vm910, %v1761
      %1774 = vst.msk [vmem:[%s305 + $0x38] sm:$0xff] %vm910, %v1764
      %p1775 = scmp.lt.s32.totalorder %s19, 1
      %s1776 = scalar_select %p1775, %s19, 1
      %s1777 = smul.addr %s1776, 8
      %s1778 = smul.addr %s1777, 8
      %s1779 = scalar_lea.vmem %s8, %s1778
      // Predicated region
      $region53: #{wrn_network_block.2} parent=51 // pred_check
        %p1780 = pneg %p210
      $region54: #{wrn_network_block.2} parent=51 // pred_check_branch
        %1782 = sbr.rel (%p1780) target = $region56
      $region55: #{wrn_network_block.2} parent=51 // pred_region
        _
      $region56: #{wrn_network_block.2} parent=51 // pred_fallthru
        _
    $region52: #{wrn_network_block.2} parent=5 // pred_fallthru
      _
    %p1783 = scmp.le.s32.totalorder 2, %s14
    // Predicated region
    $region57: #{wrn_network_block.2} parent=5 // pred_check
      %p1784 = pneg %p1783
    $region58: #{wrn_network_block.2} parent=5 // pred_check_branch
      %1786 = sbr.rel (%p1784) target = $region60
    $region59: #{wrn_network_block.2} parent=5 // pred_region
      %s1787 = ssub.s32 %s14, 2
      // Predicated region
      $region61: #{wrn_network_block.2} parent=59 // pred_check
        %p1788 = pneg %p216
      $region62: #{wrn_network_block.2} parent=59 // pred_check_branch
        %1790 = sbr.rel (%p1788) target = $region64
      $region63: #{wrn_network_block.2} parent=59 // pred_region
        %p1791 = scmp.lt.s32.totalorder %s20, 1
        %s1792 = scalar_select %p1791, %s20, 1
        %s1793 = smul.addr %s1792, 8
        %s1794 = smul.addr %s1793, 8
        %s1795 = scalar_lea.vmem %s8, %s1794
      $region64: #{wrn_network_block.2} parent=59 // pred_fallthru
        _
    $region60: #{wrn_network_block.2} parent=5 // pred_fallthru
      _
  $region6: #{wrn_network_block.2} parent=0 // loop_footer
    %s18 = sadd.s32 1, %s14
  $region7: #{wrn_network_block.2} parent=0 // loop_footer_branch
    %13 = sbr.rel target = $region3
  $region8: #{wrn_network_block.2} parent=0 // loop_exit
    _

// kernel: wrn_network_block.3
$region0: #{wrn_network_block.3}
  #allocation0 [shape = 'u32[]', space=smem, size = 0x4, offset = 0x4, fixed_abs, tag = 'smem constant byte address 0x4 - core index']
  #allocation1 [shape = 'u32[144,128]{1,0:T(1,128)}', space=vmem, size = 0x12000, scoped, tag = 'internal scratch']
  #allocation2 [shape = 'f32[10,10,16]{2,1,0:T(8,128)}', space=vmem, size = 0x14000, scoped, tag = 'scratch operand']
  #allocation3 [shape = 'f32[10,10,16]{2,1,0:T(8,128)}', space=vmem, size = 0x14000, scoped, tag = 'scratch operand']
  %s0 = inlined_call_operand.vmem [shape: f32[2,8,8,16], index: 0, kind: input, shape index: {}]
  %s1 = inlined_call_operand.vmem [shape: f32[1,16], index: 1, kind: input, shape index: {}]
  %s2 = inlined_call_operand.vmem [shape: f32[1,16], index: 2, kind: input, shape index: {}]
  %s3 = inlined_call_operand.vmem [shape: bf16[144,16], index: 3, kind: input, shape index: {}]
  %s4 = inlined_call_operand.vmem [shape: f32[1,16], index: 4, kind: input, shape index: {}]
  %s5 = inlined_call_operand.vmem [shape: f32[1,16], index: 5, kind: input, shape index: {}]
  %s6 = inlined_call_operand.vmem [shape: bf16[144,16], index: 6, kind: input, shape index: {}]
  %s7 = inlined_call_operand.hbm [shape: f32[2,8,8,16], index: 7, kind: output, shape index: {}]
  %s8 = sld [smem:[#allocation0]]
  $region61: #{wrn_network_block.3} parent=0
    _
  %s10 = ssub.s32 1, %s8
  %s11 = scalar_select 0, %s10, %s8
  $region1: #{wrn_network_block.3} parent=0
    #allocation4 [shape = 'u8[65536]{0}', space=vmem, size = 0x10000, scoped, tag = 'output window, operand 0']
    #allocation5 [shape = 's32[2]{0}', space=sflag, size = 0x8, scoped, tag = 'scoped memory for wrn_network_block.3']
    %12 = vsyncpa [#allocation5], 0
    %s13 = scalar_lea.sflag [#allocation5], 1
    %14 = vsyncpa %s13, 0
    loop: start=0, step=1, limit=4
    $region2: #{wrn_network_block.3} parent=1 // loop_pre_header
      _
    $region3: #{wrn_network_block.3} parent=1 // loop_header
      %s16 = sphi 0, %s20
      %p17 = scmp.ge.s32.totalorder %s16, 4
      %s26 = sphi 0, %s28
      %s29 = sphi 0, %s26
      %s30 = sphi 0, %s29
      %s46 = sphi 0, %s30
      %s50 = sphi 0, %s50
      %s52 = sphi 0, %s50
      %s53 = sphi 0, %s52
      %s67 = sphi 0, %s53
      %s71 = sphi 0, %s71
      %s73 = sphi 0, %s71
      %s74 = sphi 0, %s73
      %s88 = sphi 0, %s74
      %s92 = sphi 0, %s92
      %s94 = sphi 0, %s92
      %s95 = sphi 0, %s94
      %s109 = sphi 0, %s95
      %s113 = sphi 0, %s113
      %s115 = sphi 0, %s113
      %s116 = sphi 0, %s115
      %s130 = sphi 0, %s116
      %s134 = sphi 0, %s134
      %s136 = sphi 0, %s134
      %s137 = sphi 0, %s136
      %s151 = sphi 0, %s137
      %s155 = sphi 0, %s155
      %s157 = sphi 0, %s155
      %s158 = sphi 0, %s157
      %s172 = sphi 0, %s158
      %s178 = sphi 0, %s180
      %s181 = sphi 0, %s178
      %s182 = sphi 0, %s181
      %s198 = sphi 0, %s182
    $region4: #{wrn_network_block.3} parent=1 // loop_header_branch
      %19 = sbr.rel (%p17) target = $region8
    $region5: #{wrn_network_block.3} parent=1 // loop_body
      %s21 = ssub.s32 %s16, 1
      %s22 = ssub.s32 %s16, 2
      %s23 = sadd.s32 %s16, 1
      %s24 = ssub.s32 %s16, %s23
      %p25 = scmp.eq.s32.totalorder %s24, 0
      %s27 = sadd.s32 %s26, 1
      %s28 = scalar_select %p25, %s26, %s27
      %p31 = pneg %p25
      %p32 = scmp.eq.s32.totalorder %s16, 1
      %p33 = por %p31, %p32
      %p34 = scmp.ne.s32.totalorder %s26, %s29
      %p35 = scmp.eq.s32.totalorder %s16, 0
      %p36 = por %p34, %p35
      %p37 = scmp.ne.s32.totalorder %s26, %s29
      %p38 = scmp.eq.s32.totalorder %s21, 1
      %p39 = por %p37, %p38
      %p40 = scmp.ne.s32.totalorder %s29, %s30
      %p41 = scmp.eq.s32.totalorder %s21, 0
      %p42 = por %p40, %p41
      %p43 = scmp.ne.s32.totalorder %s29, %s30
      %p44 = scmp.eq.s32.totalorder %s22, 1
      %p45 = por %p43, %p44
      %p47 = scmp.ne.s32.totalorder %s30, %s46
      %p48 = scmp.eq.s32.totalorder %s22, 0
      %p49 = por %p47, %p48
      %s51 = sadd.s32 %s50, 1
      %p54 = scmp.eq.s32.totalorder %s16, 1
      %p55 = scmp.ne.s32.totalorder %s50, %s52
      %p56 = scmp.eq.s32.totalorder %s16, 0
      %p57 = por %p55, %p56
      %p58 = scmp.ne.s32.totalorder %s50, %s52
      %p59 = scmp.eq.s32.totalorder %s21, 1
      %p60 = por %p58, %p59
      %p61 = scmp.ne.s32.totalorder %s52, %s53
      %p62 = scmp.eq.s32.totalorder %s21, 0
      %p63 = por %p61, %p62
      %p64 = scmp.ne.s32.totalorder %s52, %s53
      %p65 = scmp.eq.s32.totalorder %s22, 1
      %p66 = por %p64, %p65
      %p68 = scmp.ne.s32.totalorder %s53, %s67
      %p69 = scmp.eq.s32.totalorder %s22, 0
      %p70 = por %p68, %p69
      %s72 = sadd.s32 %s71, 1
      %p75 = scmp.eq.s32.totalorder %s16, 1
      %p76 = scmp.ne.s32.totalorder %s71, %s73
      %p77 = scmp.eq.s32.totalorder %s16, 0
      %p78 = por %p76, %p77
      %p79 = scmp.ne.s32.totalorder %s71, %s73
      %p80 = scmp.eq.s32.totalorder %s21, 1
      %p81 = por %p79, %p80
      %p82 = scmp.ne.s32.totalorder %s73, %s74
      %p83 = scmp.eq.s32.totalorder %s21, 0
      %p84 = por %p82, %p83
      %p85 = scmp.ne.s32.totalorder %s73, %s74
      %p86 = scmp.eq.s32.totalorder %s22, 1
      %p87 = por %p85, %p86
      %p89 = scmp.ne.s32.totalorder %s74, %s88
      %p90 = scmp.eq.s32.totalorder %s22, 0
      %p91 = por %p89, %p90
      %s93 = sadd.s32 %s92, 1
      %p96 = scmp.eq.s32.totalorder %s16, 1
      %p97 = scmp.ne.s32.totalorder %s92, %s94
      %p98 = scmp.eq.s32.totalorder %s16, 0
      %p99 = por %p97, %p98
      %p100 = scmp.ne.s32.totalorder %s92, %s94
      %p101 = scmp.eq.s32.totalorder %s21, 1
      %p102 = por %p100, %p101
      %p103 = scmp.ne.s32.totalorder %s94, %s95
      %p104 = scmp.eq.s32.totalorder %s21, 0
      %p105 = por %p103, %p104
      %p106 = scmp.ne.s32.totalorder %s94, %s95
      %p107 = scmp.eq.s32.totalorder %s22, 1
      %p108 = por %p106, %p107
      %p110 = scmp.ne.s32.totalorder %s95, %s109
      %p111 = scmp.eq.s32.totalorder %s22, 0
      %p112 = por %p110, %p111
      %s114 = sadd.s32 %s113, 1
      %p117 = scmp.eq.s32.totalorder %s16, 1
      %p118 = scmp.ne.s32.totalorder %s113, %s115
      %p119 = scmp.eq.s32.totalorder %s16, 0
      %p120 = por %p118, %p119
      %p121 = scmp.ne.s32.totalorder %s113, %s115
      %p122 = scmp.eq.s32.totalorder %s21, 1
      %p123 = por %p121, %p122
      %p124 = scmp.ne.s32.totalorder %s115, %s116
      %p125 = scmp.eq.s32.totalorder %s21, 0
      %p126 = por %p124, %p125
      %p127 = scmp.ne.s32.totalorder %s115, %s116
      %p128 = scmp.eq.s32.totalorder %s22, 1
      %p129 = por %p127, %p128
      %p131 = scmp.ne.s32.totalorder %s116, %s130
      %p132 = scmp.eq.s32.totalorder %s22, 0
      %p133 = por %p131, %p132
      %s135 = sadd.s32 %s134, 1
      %p138 = scmp.eq.s32.totalorder %s16, 1
      %p139 = scmp.ne.s32.totalorder %s134, %s136
      %p140 = scmp.eq.s32.totalorder %s16, 0
      %p141 = por %p139, %p140
      %p142 = scmp.ne.s32.totalorder %s134, %s136
      %p143 = scmp.eq.s32.totalorder %s21, 1
      %p144 = por %p142, %p143
      %p145 = scmp.ne.s32.totalorder %s136, %s137
      %p146 = scmp.eq.s32.totalorder %s21, 0
      %p147 = por %p145, %p146
      %p148 = scmp.ne.s32.totalorder %s136, %s137
      %p149 = scmp.eq.s32.totalorder %s22, 1
      %p150 = por %p148, %p149
      %p152 = scmp.ne.s32.totalorder %s137, %s151
      %p153 = scmp.eq.s32.totalorder %s22, 0
      %p154 = por %p152, %p153
      %s156 = sadd.s32 %s155, 1
      %p159 = scmp.eq.s32.totalorder %s16, 1
      %p160 = scmp.ne.s32.totalorder %s155, %s157
      %p161 = scmp.eq.s32.totalorder %s16, 0
      %p162 = por %p160, %p161
      %p163 = scmp.ne.s32.totalorder %s155, %s157
      %p164 = scmp.eq.s32.totalorder %s21, 1
      %p165 = por %p163, %p164
      %p166 = scmp.ne.s32.totalorder %s157, %s158
      %p167 = scmp.eq.s32.totalorder %s21, 0
      %p168 = por %p166, %p167
      %p169 = scmp.ne.s32.totalorder %s157, %s158
      %p170 = scmp.eq.s32.totalorder %s22, 1
      %p171 = por %p169, %p170
      %p173 = scmp.ne.s32.totalorder %s158, %s172
      %p174 = scmp.eq.s32.totalorder %s22, 0
      %p175 = por %p173, %p174
      %s176 = ssub.s32 %s16, %s23
      %p177 = scmp.eq.s32.totalorder %s176, 0
      %s179 = sadd.s32 %s178, 1
      %s180 = scalar_select %p177, %s178, %s179
      %p183 = pneg %p177
      %p184 = scmp.eq.s32.totalorder %s16, 1
      %p185 = por %p183, %p184
      %p186 = scmp.ne.s32.totalorder %s178, %s181
      %p187 = scmp.eq.s32.totalorder %s16, 0
      %p188 = por %p186, %p187
      %p189 = scmp.ne.s32.totalorder %s178, %s181
      %p190 = scmp.eq.s32.totalorder %s21, 1
      %p191 = por %p189, %p190
      %p192 = scmp.ne.s32.totalorder %s181, %s182
      %p193 = scmp.eq.s32.totalorder %s21, 0
      %p194 = por %p192, %p193
      %p195 = scmp.ne.s32.totalorder %s181, %s182
      %p196 = scmp.eq.s32.totalorder %s22, 1
      %p197 = por %p195, %p196
      %p199 = scmp.ne.s32.totalorder %s182, %s198
      %p200 = scmp.eq.s32.totalorder %s22, 0
      %p201 = por %p199, %p200
      %p202 = scmp.le.s32.totalorder 1, %s16
      %p203 = scmp.lt.s32.totalorder %s16, 3
      %p204 = pnand %p202, %p203
      %p205 = pneg %p204
      // Predicated region
      $region9: #{wrn_network_block.3} parent=5 // pred_check
        _
      $region10: #{wrn_network_block.3} parent=5 // pred_check_branch
        %207 = sbr.rel (%p204) target = $region12
      $region11: #{wrn_network_block.3} parent=5 // pred_region
        %s208 = ssub.s32 %s16, 1
        // Predicated region
        $region13: #{wrn_network_block.3} parent=11 // pred_check
          %p209 = pneg %p63
        $region14: #{wrn_network_block.3} parent=11 // pred_check_branch
          %211 = sbr.rel (%p209) target = $region16
        $region15: #{wrn_network_block.3} parent=11 // pred_region
          _
        $region16: #{wrn_network_block.3} parent=11 // pred_fallthru
          _
        // Predicated region
        $region17: #{wrn_network_block.3} parent=11 // pred_check
          %p212 = pneg %p84
        $region18: #{wrn_network_block.3} parent=11 // pred_check_branch
          %214 = sbr.rel (%p212) target = $region20
        $region19: #{wrn_network_block.3} parent=11 // pred_region
          _
        $region20: #{wrn_network_block.3} parent=11 // pred_fallthru
          _
        // Predicated region
        $region21: #{wrn_network_block.3} parent=11 // pred_check
          %p215 = pneg %p105
        $region22: #{wrn_network_block.3} parent=11 // pred_check_branch
          %217 = sbr.rel (%p215) target = $region24
        $region23: #{wrn_network_block.3} parent=11 // pred_region
          _
        $region24: #{wrn_network_block.3} parent=11 // pred_fallthru
          _
        // Predicated region
        $region25: #{wrn_network_block.3} parent=11 // pred_check
          %p218 = pneg %p126
        $region26: #{wrn_network_block.3} parent=11 // pred_check_branch
          %220 = sbr.rel (%p218) target = $region28
        $region27: #{wrn_network_block.3} parent=11 // pred_region
          _
        $region28: #{wrn_network_block.3} parent=11 // pred_fallthru
          _
        // Predicated region
        $region29: #{wrn_network_block.3} parent=11 // pred_check
          %p221 = pneg %p147
        $region30: #{wrn_network_block.3} parent=11 // pred_check_branch
          %223 = sbr.rel (%p221) target = $region32
        $region31: #{wrn_network_block.3} parent=11 // pred_region
          _
        $region32: #{wrn_network_block.3} parent=11 // pred_fallthru
          _
        // Predicated region
        $region33: #{wrn_network_block.3} parent=11 // pred_check
          %p224 = pneg %p168
        $region34: #{wrn_network_block.3} parent=11 // pred_check_branch
          %226 = sbr.rel (%p224) target = $region36
        $region35: #{wrn_network_block.3} parent=11 // pred_region
          _
        $region36: #{wrn_network_block.3} parent=11 // pred_fallthru
          _
      $region12: #{wrn_network_block.3} parent=5 // pred_fallthru
        _
      %p227 = scmp.lt.s32.totalorder %s16, 2
      // Predicated region
      $region37: #{wrn_network_block.3} parent=5 // pred_check
        %p228 = pneg %p227
      $region38: #{wrn_network_block.3} parent=5 // pred_check_branch
        %230 = sbr.rel (%p228) target = $region40
      $region39: #{wrn_network_block.3} parent=5 // pred_region
        // Predicated region
        $region41: #{wrn_network_block.3} parent=39 // pred_check
          %p231 = pneg %p36
        $region42: #{wrn_network_block.3} parent=39 // pred_check_branch
          %233 = sbr.rel (%p231) target = $region44
        $region43: #{wrn_network_block.3} parent=39 // pred_region
          %p234 = scmp.lt.s32.totalorder %s16, 1
          %s235 = scalar_select %p234, %s16, 1
          %s236 = smul.addr %s235, 8
          %s237 = smul.addr %s236, 8
          %s238 = scalar_lea.vmem %s0, %s237
        $region44: #{wrn_network_block.3} parent=39 // pred_fallthru
          _
      $region40: #{wrn_network_block.3} parent=5 // pred_fallthru
        _
      %p239 = scmp.le.s32.totalorder 1, %s16
      %p240 = scmp.lt.s32.totalorder %s16, 3
      %p241 = pnand %p239, %p240
      %p242 = pneg %p241
      // Predicated region
      $region45: #{wrn_network_block.3} parent=5 // pred_check
        _
      $region46: #{wrn_network_block.3} parent=5 // pred_check_branch
        %244 = sbr.rel (%p241) target = $region48
      $region47: #{wrn_network_block.3} parent=5 // pred_region
        %s245 = ssub.s32 %s16, 1
        %p246 = scmp.lt.s32.totalorder %s21, 1
        %s247 = scalar_select %p246, %s21, 1
        %s248 = smul.addr %s247, 8
        %s249 = smul.addr %s248, 8
        %s250 = scalar_lea.vmem %s0, %s249
        %p251 = pneg %p42
        %p252 = pneg %p39
        %p253 = pneg %p63
        %p254 = pneg %p60
        %p255 = pneg %p84
        %p256 = pneg %p81
        %p257 = pneg %p105
        %p258 = pneg %p102
        %p259 = pneg %p126
        %p260 = pneg %p123
        %p261 = pneg %p147
        %p262 = pneg %p144
        %p263 = pneg %p168
        %p264 = pneg %p165
        %p265 = pneg %p194
        %p266 = pneg %p191
        %s267 = sand.u32 %s181, 1
        %s268 = scalar_lea.sflag [#allocation5], %s267
        %s269 = sand.u32 %s181, 1
        %s270 = smul.addr %s269, 64
        %s271 = scalar_lea.vmem [#allocation4], %s270
        %p272 = scmp.lt.s32.totalorder %s21, 1
        %s273 = scalar_select %p272, %s21, 1
        %s274 = smul.addr %s273, 8
        %s275 = smul.addr %s274, 8
        %s276 = scalar_lea.vmem %s0, %s275
        %v278 = vld [vmem:[%s1] sm:$0x1]
        %v279 = vld [vmem:[%s2] sm:$0x1]
        %v280 = vld [vmem:[%s4] sm:$0x1]
        %v281 = vld [vmem:[%s5] sm:$0x1]
        %vm282 = vcmask 130048
        %283 = vst.msk [vmem:[#allocation2] sm:$0xff] %vm282, 0.0
        %vm284 = vcmask 123904
        %285 = vst.msk [vmem:[#allocation2 + $0x8] sm:$0x3] %vm284, 0.0
        %286 = vst.msk [vmem:[#allocation2 + $0x10] sm:$0xff] %vm282, 0.0
        %287 = vst.msk [vmem:[#allocation2 + $0x18] sm:$0x3] %vm284, 0.0
        %288 = vst.msk [vmem:[#allocation2 + $0x20] sm:$0xff] %vm282, 0.0
        %289 = vst.msk [vmem:[#allocation2 + $0x28] sm:$0x3] %vm284, 0.0
        %290 = vst.msk [vmem:[#allocation2 + $0x30] sm:$0xff] %vm282, 0.0
        %291 = vst.msk [vmem:[#allocation2 + $0x38] sm:$0x3] %vm284, 0.0
        %292 = vst.msk [vmem:[#allocation2 + $0x40] sm:$0xff] %vm282, 0.0
        %293 = vst.msk [vmem:[#allocation2 + $0x48] sm:$0x3] %vm284, 0.0
        %294 = vst.msk [vmem:[#allocation2 + $0x50] sm:$0xff] %vm282, 0.0
        %295 = vst.msk [vmem:[#allocation2 + $0x58] sm:$0x3] %vm284, 0.0
        %296 = vst.msk [vmem:[#allocation2 + $0x60] sm:$0xff] %vm282, 0.0
        %297 = vst.msk [vmem:[#allocation2 + $0x68] sm:$0x3] %vm284, 0.0
        %298 = vst.msk [vmem:[#allocation2 + $0x70] sm:$0xff] %vm282, 0.0
        %299 = vst.msk [vmem:[#allocation2 + $0x78] sm:$0x3] %vm284, 0.0
        %300 = vst.msk [vmem:[#allocation2 + $0x80] sm:$0xff] %vm282, 0.0
        %301 = vst.msk [vmem:[#allocation2 + $0x88] sm:$0x3] %vm284, 0.0
        %302 = vst.msk [vmem:[#allocation2 + $0x90] sm:$0xff] %vm282, 0.0
        %303 = vst.msk [vmem:[#allocation2 + $0x98] sm:$0x3] %vm284, 0.0
        %v304 = vld [vmem:[%s276] sm:$0xff]
        %v305 = vld [vmem:[%s276 + $0x8] sm:$0xff]
        %v306 = vld [vmem:[%s276 + $0x10] sm:$0xff]
        %v307 = vld [vmem:[%s276 + $0x18] sm:$0xff]
        %v308 = vld [vmem:[%s276 + $0x20] sm:$0xff]
        %v309 = vld [vmem:[%s276 + $0x28] sm:$0xff]
        %v310 = vld [vmem:[%s276 + $0x30] sm:$0xff]
        %v311 = vld [vmem:[%s276 + $0x38] sm:$0xff]
        %v313 = vlaneseq
        %v314 = vshrl.u32 %v313, 7
        %v315 = vsub.s32 0, %v314
        %v316 = vrot.slane %v278, %v315
        %v318 = vmul.f32 %v304, %v316
        %v319 = vmul.f32 %v305, %v316
        %v320 = vmul.f32 %v306, %v316
        %v321 = vmul.f32 %v307, %v316
        %v322 = vmul.f32 %v308, %v316
        %v323 = vmul.f32 %v309, %v316
        %v324 = vmul.f32 %v310, %v316
        %v325 = vmul.f32 %v311, %v316
        %v327 = vlaneseq
        %v328 = vshrl.u32 %v327, 7
        %v329 = vsub.s32 0, %v328
        %v330 = vrot.slane %v279, %v329
        %v332 = vadd.f32 %v318, %v330
        %v333 = vadd.f32 %v319, %v330
        %v334 = vadd.f32 %v320, %v330
        %v335 = vadd.f32 %v321, %v330
        %v336 = vadd.f32 %v322, %v330
        %v337 = vadd.f32 %v323, %v330
        %v338 = vadd.f32 %v324, %v330
        %v339 = vadd.f32 %v325, %v330
        %v340 = vmax.f32 %v332, 0.0
        %v341 = vmax.f32 %v333, 0.0
        %v342 = vmax.f32 %v334, 0.0
        %v343 = vmax.f32 %v335, 0.0
        %v344 = vmax.f32 %v336, 0.0
        %v345 = vmax.f32 %v337, 0.0
        %v346 = vmax.f32 %v338, 0.0
        %v347 = vmax.f32 %v339, 0.0
        %s348 = scalar_lea.vmem [#allocation2], 16
        %349 = vst.msk [vmem:[%s348 + $0x1] sm:$0xff] %vm282, %v340
        %350 = vst.msk [vmem:[%s348 + $0x11] sm:$0xff] %vm282, %v341
        %351 = vst.msk [vmem:[%s348 + $0x21] sm:$0xff] %vm282, %v342
        %352 = vst.msk [vmem:[%s348 + $0x31] sm:$0xff] %vm282, %v343
        %353 = vst.msk [vmem:[%s348 + $0x41] sm:$0xff] %vm282, %v344
        %354 = vst.msk [vmem:[%s348 + $0x51] sm:$0xff] %vm282, %v345
        %355 = vst.msk [vmem:[%s348 + $0x61] sm:$0xff] %vm282, %v346
        %356 = vst.msk [vmem:[%s348 + $0x71] sm:$0xff] %vm282, %v347
        %v357 = vld [vmem:[#allocation2] sm:$0xff]
        %v358 = vld [vmem:[#allocation2 + $0x10] sm:$0xff]
        %v359 = vld [vmem:[#allocation2 + $0x20] sm:$0xff]
        %v360 = vld [vmem:[#allocation2 + $0x30] sm:$0xff]
        %v361 = vld [vmem:[#allocation2 + $0x40] sm:$0xff]
        %v362 = vld [vmem:[#allocation2 + $0x50] sm:$0xff]
        %v363 = vld [vmem:[#allocation2 + $0x60] sm:$0xff]
        %v364 = vld [vmem:[#allocation2 + $0x70] sm:$0xff]
        %v365 = vld [vmem:[#allocation2 + $0x1] sm:$0xff]
        %v366 = vld [vmem:[#allocation2 + $0x11] sm:$0xff]
        %v367 = vld [vmem:[#allocation2 + $0x21] sm:$0xff]
        %v368 = vld [vmem:[#allocation2 + $0x31] sm:$0xff]
        %v369 = vld [vmem:[#allocation2 + $0x41] sm:$0xff]
        %v370 = vld [vmem:[#allocation2 + $0x51] sm:$0xff]
        %v371 = vld [vmem:[#allocation2 + $0x61] sm:$0xff]
        %v372 = vld [vmem:[#allocation2 + $0x71] sm:$0xff]
        %v373 = vld [vmem:[#allocation2 + $0x2] sm:$0xff]
        %v374 = vld [vmem:[#allocation2 + $0x12] sm:$0xff]
        %v375 = vld [vmem:[#allocation2 + $0x22] sm:$0xff]
        %v376 = vld [vmem:[#allocation2 + $0x32] sm:$0xff]
        %v377 = vld [vmem:[#allocation2 + $0x42] sm:$0xff]
        %v378 = vld [vmem:[#allocation2 + $0x52] sm:$0xff]
        %v379 = vld [vmem:[#allocation2 + $0x62] sm:$0xff]
        %v380 = vld [vmem:[#allocation2 + $0x72] sm:$0xff]
        %v381 = vld [vmem:[%s348] sm:$0xff]
        %v382 = vld [vmem:[%s348 + $0x10] sm:$0xff]
        %v383 = vld [vmem:[%s348 + $0x20] sm:$0xff]
        %v384 = vld [vmem:[%s348 + $0x30] sm:$0xff]
        %v385 = vld [vmem:[%s348 + $0x40] sm:$0xff]
        %v386 = vld [vmem:[%s348 + $0x50] sm:$0xff]
        %v387 = vld [vmem:[%s348 + $0x60] sm:$0xff]
        %v388 = vld [vmem:[%s348 + $0x70] sm:$0xff]
        %v389 = vld [vmem:[%s348 + $0x1] sm:$0xff]
        %v390 = vld [vmem:[%s348 + $0x11] sm:$0xff]
        %v391 = vld [vmem:[%s348 + $0x21] sm:$0xff]
        %v392 = vld [vmem:[%s348 + $0x31] sm:$0xff]
        %v393 = vld [vmem:[%s348 + $0x41] sm:$0xff]
        %v394 = vld [vmem:[%s348 + $0x51] sm:$0xff]
        %v395 = vld [vmem:[%s348 + $0x61] sm:$0xff]
        %v396 = vld [vmem:[%s348 + $0x71] sm:$0xff]
        %v397 = vld [vmem:[%s348 + $0x2] sm:$0xff]
        %v398 = vld [vmem:[%s348 + $0x12] sm:$0xff]
        %v399 = vld [vmem:[%s348 + $0x22] sm:$0xff]
        %v400 = vld [vmem:[%s348 + $0x32] sm:$0xff]
        %v401 = vld [vmem:[%s348 + $0x42] sm:$0xff]
        %v402 = vld [vmem:[%s348 + $0x52] sm:$0xff]
        %v403 = vld [vmem:[%s348 + $0x62] sm:$0xff]
        %v404 = vld [vmem:[%s348 + $0x72] sm:$0xff]
        %s405 = scalar_lea.vmem [#allocation2], 32
        %v406 = vld [vmem:[%s405] sm:$0xff]
        %v407 = vld [vmem:[%s405 + $0x10] sm:$0xff]
        %v408 = vld [vmem:[%s405 + $0x20] sm:$0xff]
        %v409 = vld [vmem:[%s405 + $0x30] sm:$0xff]
        %v410 = vld [vmem:[%s405 + $0x40] sm:$0xff]
        %v411 = vld [vmem:[%s405 + $0x50] sm:$0xff]
        %v412 = vld [vmem:[%s405 + $0x60] sm:$0xff]
        %v413 = vld [vmem:[%s405 + $0x70] sm:$0xff]
        %v414 = vld [vmem:[%s405 + $0x1] sm:$0xff]
        %v415 = vld [vmem:[%s405 + $0x11] sm:$0xff]
        %v416 = vld [vmem:[%s405 + $0x21] sm:$0xff]
        %v417 = vld [vmem:[%s405 + $0x31] sm:$0xff]
        %v418 = vld [vmem:[%s405 + $0x41] sm:$0xff]
        %v419 = vld [vmem:[%s405 + $0x51] sm:$0xff]
        %v420 = vld [vmem:[%s405 + $0x61] sm:$0xff]
        %v421 = vld [vmem:[%s405 + $0x71] sm:$0xff]
        %v422 = vld [vmem:[%s405 + $0x2] sm:$0xff]
        %v423 = vld [vmem:[%s405 + $0x12] sm:$0xff]
        %v424 = vld [vmem:[%s405 + $0x22] sm:$0xff]
        %v425 = vld [vmem:[%s405 + $0x32] sm:$0xff]
        %v426 = vld [vmem:[%s405 + $0x42] sm:$0xff]
        %v427 = vld [vmem:[%s405 + $0x52] sm:$0xff]
        %v428 = vld [vmem:[%s405 + $0x62] sm:$0xff]
        %v429 = vld [vmem:[%s405 + $0x72] sm:$0xff]
        %438 = vrot.lane.b32.xlu0 %v365, 16
        %v439 = vpop.permute.xlu0 %438
        %440 = vrot.lane.b32.xlu0 %v366, 16
        %v441 = vpop.permute.xlu0 %440
        %442 = vrot.lane.b32.xlu0 %v367, 16
        %v443 = vpop.permute.xlu0 %442
        %444 = vrot.lane.b32.xlu0 %v368, 16
        %v445 = vpop.permute.xlu0 %444
        %446 = vrot.lane.b32.xlu0 %v369, 16
        %v447 = vpop.permute.xlu0 %446
        %448 = vrot.lane.b32.xlu0 %v370, 16
        %v449 = vpop.permute.xlu0 %448
        %450 = vrot.lane.b32.xlu0 %v371, 16
        %v451 = vpop.permute.xlu0 %450
        %452 = vrot.lane.b32.xlu0 %v372, 16
        %v453 = vpop.permute.xlu0 %452
        %470 = vrot.lane.b32.xlu0 %v373, 32
        %v471 = vpop.permute.xlu0 %470
        %472 = vrot.lane.b32.xlu0 %v374, 32
        %v473 = vpop.permute.xlu0 %472
        %474 = vrot.lane.b32.xlu0 %v375, 32
        %v475 = vpop.permute.xlu0 %474
        %476 = vrot.lane.b32.xlu0 %v376, 32
        %v477 = vpop.permute.xlu0 %476
        %478 = vrot.lane.b32.xlu0 %v377, 32
        %v479 = vpop.permute.xlu0 %478
        %480 = vrot.lane.b32.xlu0 %v378, 32
        %v481 = vpop.permute.xlu0 %480
        %482 = vrot.lane.b32.xlu0 %v379, 32
        %v483 = vpop.permute.xlu0 %482
        %484 = vrot.lane.b32.xlu0 %v380, 32
        %v485 = vpop.permute.xlu0 %484
        %502 = vrot.lane.b32.xlu0 %v381, 48
        %v503 = vpop.permute.xlu0 %502
        %504 = vrot.lane.b32.xlu0 %v382, 48
        %v505 = vpop.permute.xlu0 %504
        %506 = vrot.lane.b32.xlu0 %v383, 48
        %v507 = vpop.permute.xlu0 %506
        %508 = vrot.lane.b32.xlu0 %v384, 48
        %v509 = vpop.permute.xlu0 %508
        %510 = vrot.lane.b32.xlu0 %v385, 48
        %v511 = vpop.permute.xlu0 %510
        %512 = vrot.lane.b32.xlu0 %v386, 48
        %v513 = vpop.permute.xlu0 %512
        %514 = vrot.lane.b32.xlu0 %v387, 48
        %v515 = vpop.permute.xlu0 %514
        %516 = vrot.lane.b32.xlu0 %v388, 48
        %v517 = vpop.permute.xlu0 %516
        %534 = vrot.lane.b32.xlu0 %v389, 64
        %v535 = vpop.permute.xlu0 %534
        %536 = vrot.lane.b32.xlu0 %v390, 64
        %v537 = vpop.permute.xlu0 %536
        %538 = vrot.lane.b32.xlu0 %v391, 64
        %v539 = vpop.permute.xlu0 %538
        %540 = vrot.lane.b32.xlu0 %v392, 64
        %v541 = vpop.permute.xlu0 %540
        %542 = vrot.lane.b32.xlu0 %v393, 64
        %v543 = vpop.permute.xlu0 %542
        %544 = vrot.lane.b32.xlu0 %v394, 64
        %v545 = vpop.permute.xlu0 %544
        %546 = vrot.lane.b32.xlu0 %v395, 64
        %v547 = vpop.permute.xlu0 %546
        %548 = vrot.lane.b32.xlu0 %v396, 64
        %v549 = vpop.permute.xlu0 %548
        %566 = vrot.lane.b32.xlu0 %v397, 80
        %v567 = vpop.permute.xlu0 %566
        %568 = vrot.lane.b32.xlu0 %v398, 80
        %v569 = vpop.permute.xlu0 %568
        %570 = vrot.lane.b32.xlu0 %v399, 80
        %v571 = vpop.permute.xlu0 %570
        %572 = vrot.lane.b32.xlu0 %v400, 80
        %v573 = vpop.permute.xlu0 %572
        %574 = vrot.lane.b32.xlu0 %v401, 80
        %v575 = vpop.permute.xlu0 %574
        %576 = vrot.lane.b32.xlu0 %v402, 80
        %v577 = vpop.permute.xlu0 %576
        %578 = vrot.lane.b32.xlu0 %v403, 80
        %v579 = vpop.permute.xlu0 %578
        %580 = vrot.lane.b32.xlu0 %v404, 80
        %v581 = vpop.permute.xlu0 %580
        %598 = vrot.lane.b32.xlu0 %v406, 96
        %v599 = vpop.permute.xlu0 %598
        %600 = vrot.lane.b32.xlu0 %v407, 96
        %v601 = vpop.permute.xlu0 %600
        %602 = vrot.lane.b32.xlu0 %v408, 96
        %v603 = vpop.permute.xlu0 %602
        %604 = vrot.lane.b32.xlu0 %v409, 96
        %v605 = vpop.permute.xlu0 %604
        %606 = vrot.lane.b32.xlu0 %v410, 96
        %v607 = vpop.permute.xlu0 %606
        %608 = vrot.lane.b32.xlu0 %v411, 96
        %v609 = vpop.permute.xlu0 %608
        %610 = vrot.lane.b32.xlu0 %v412, 96
        %v611 = vpop.permute.xlu0 %610
        %612 = vrot.lane.b32.xlu0 %v413, 96
        %v613 = vpop.permute.xlu0 %612
        %630 = vrot.lane.b32.xlu0 %v414, 112
        %v631 = vpop.permute.xlu0 %630
        %632 = vrot.lane.b32.xlu0 %v415, 112
        %v633 = vpop.permute.xlu0 %632
        %634 = vrot.lane.b32.xlu0 %v416, 112
        %v635 = vpop.permute.xlu0 %634
        %636 = vrot.lane.b32.xlu0 %v417, 112
        %v637 = vpop.permute.xlu0 %636
        %638 = vrot.lane.b32.xlu0 %v418, 112
        %v639 = vpop.permute.xlu0 %638
        %640 = vrot.lane.b32.xlu0 %v419, 112
        %v641 = vpop.permute.xlu0 %640
        %642 = vrot.lane.b32.xlu0 %v420, 112
        %v643 = vpop.permute.xlu0 %642
        %644 = vrot.lane.b32.xlu0 %v421, 112
        %v645 = vpop.permute.xlu0 %644
        %v654 = vsel %vm282, %v357, %v439
        %v655 = vsel %vm282, %v358, %v441
        %v656 = vsel %vm282, %v359, %v443
        %v657 = vsel %vm282, %v360, %v445
        %v658 = vsel %vm282, %v361, %v447
        %v659 = vsel %vm282, %v362, %v449
        %v660 = vsel %vm282, %v363, %v451
        %v661 = vsel %vm282, %v364, %v453
        %vm662 = vcmask 261120
        %v663 = vsel %vm662, %v654, %v471
        %v664 = vsel %vm662, %v655, %v473
        %v665 = vsel %vm662, %v656, %v475
        %v666 = vsel %vm662, %v657, %v477
        %v667 = vsel %vm662, %v658, %v479
        %v668 = vsel %vm662, %v659, %v481
        %v669 = vsel %vm662, %v660, %v483
        %v670 = vsel %vm662, %v661, %v485
        %vm671 = vcmask 392192
        %v672 = vsel %vm671, %v663, %v503
        %v673 = vsel %vm671, %v664, %v505
        %v674 = vsel %vm671, %v665, %v507
        %v675 = vsel %vm671, %v666, %v509
        %v676 = vsel %vm671, %v667, %v511
        %v677 = vsel %vm671, %v668, %v513
        %v678 = vsel %vm671, %v669, %v515
        %v679 = vsel %vm671, %v670, %v517
        %vm680 = vcmask 523264
        %v681 = vsel %vm680, %v672, %v535
        %v682 = vsel %vm680, %v673, %v537
        %v683 = vsel %vm680, %v674, %v539
        %v684 = vsel %vm680, %v675, %v541
        %v685 = vsel %vm680, %v676, %v543
        %v686 = vsel %vm680, %v677, %v545
        %v687 = vsel %vm680, %v678, %v547
        %v688 = vsel %vm680, %v679, %v549
        %vm689 = vcmask 654336
        %v690 = vsel %vm689, %v681, %v567
        %v691 = vsel %vm689, %v682, %v569
        %v692 = vsel %vm689, %v683, %v571
        %v693 = vsel %vm689, %v684, %v573
        %v694 = vsel %vm689, %v685, %v575
        %v695 = vsel %vm689, %v686, %v577
        %v696 = vsel %vm689, %v687, %v579
        %v697 = vsel %vm689, %v688, %v581
        %vm698 = vcmask 785408
        %v699 = vsel %vm698, %v690, %v599
        %v700 = vsel %vm698, %v691, %v601
        %v701 = vsel %vm698, %v692, %v603
        %v702 = vsel %vm698, %v693, %v605
        %v703 = vsel %vm698, %v694, %v607
        %v704 = vsel %vm698, %v695, %v609
        %v705 = vsel %vm698, %v696, %v611
        %v706 = vsel %vm698, %v697, %v613
        %vm707 = vcmask 916480
        %v708 = vsel %vm707, %v699, %v631
        %v709 = vsel %vm707, %v700, %v633
        %v710 = vsel %vm707, %v701, %v635
        %v711 = vsel %vm707, %v702, %v637
        %v712 = vsel %vm707, %v703, %v639
        %v713 = vsel %vm707, %v704, %v641
        %v714 = vsel %vm707, %v705, %v643
        %v715 = vsel %vm707, %v706, %v645
        %v716 = vpack.c.bf16 %v709, %v708
        %v717 = vpack.c.bf16 %v423, %v422
        %v718 = vpack.c.bf16 %v711, %v710
        %v719 = vpack.c.bf16 %v425, %v424
        %v720 = vpack.c.bf16 %v713, %v712
        %v721 = vpack.c.bf16 %v427, %v426
        %v722 = vpack.c.bf16 %v715, %v714
        %v723 = vpack.c.bf16 %v429, %v428
        %v724 = vld [vmem:[%s3] sm:$0xf]
        %v725 = vld [vmem:[%s3 + $0x4] sm:$0xf]
        %v726 = vld [vmem:[%s3 + $0x8] sm:$0xf]
        %v727 = vld [vmem:[%s3 + $0xc] sm:$0xf]
        %v728 = vld [vmem:[%s3 + $0x10] sm:$0xf]
        %v729 = vld [vmem:[%s3 + $0x14] sm:$0xf]
        %v730 = vld [vmem:[%s3 + $0x18] sm:$0xf]
        %v731 = vld [vmem:[%s3 + $0x1c] sm:$0xf]
        %v732 = vld [vmem:[%s3 + $0x20] sm:$0xf]
        %v733 = vld [vmem:[%s3 + $0x24] sm:$0xf]
        %v734 = vld [vmem:[%s3 + $0x28] sm:$0xf]
        %v735 = vld [vmem:[%s3 + $0x2c] sm:$0xf]
        %v736 = vld [vmem:[%s3 + $0x30] sm:$0xf]
        %v737 = vld [vmem:[%s3 + $0x34] sm:$0xf]
        %v738 = vld [vmem:[%s3 + $0x38] sm:$0xf]
        %v739 = vld [vmem:[%s3 + $0x3c] sm:$0xf]
        %v740 = vld [vmem:[%s3 + $0x40] sm:$0xf]
        %v741 = vld [vmem:[%s3 + $0x44] sm:$0xf]
        %v760 = vunpack.c.l.b16 %v724
        %v761 = vunpack.c.l.b16 %v725
        %v762 = vunpack.c.l.b16 %v726
        %v763 = vunpack.c.l.b16 %v727
        %v764 = vunpack.c.l.b16 %v728
        %v765 = vunpack.c.l.b16 %v729
        %v766 = vunpack.c.l.b16 %v730
        %v767 = vunpack.c.l.b16 %v731
        %v768 = vunpack.c.l.b16 %v732
        %v769 = vunpack.c.l.b16 %v733
        %v770 = vunpack.c.l.b16 %v734
        %v771 = vunpack.c.l.b16 %v735
        %v772 = vunpack.c.l.b16 %v736
        %v773 = vunpack.c.l.b16 %v737
        %v774 = vunpack.c.l.b16 %v738
        %v775 = vunpack.c.l.b16 %v739
        %v776 = vunpack.c.l.b16 %v740
        %v777 = vunpack.c.l.b16 %v741
        %v778 = vpack.c.b16 %v761, %v760
        %v779 = vpack.c.b16 %v763, %v762
        %v780 = vpack.c.b16 %v765, %v764
        %v781 = vpack.c.b16 %v767, %v766
        %v782 = vpack.c.b16 %v769, %v768
        %v783 = vpack.c.b16 %v771, %v770
        %v784 = vpack.c.b16 %v773, %v772
        %v785 = vpack.c.b16 %v775, %v774
        %v786 = vpack.c.b16 %v777, %v776
        %v797 = vsel %vm282, %v717, 0
        %v800 = vsel %vm282, %v719, 0
        %v803 = vsel %vm282, %v721, 0
        %v806 = vsel %vm282, %v723, 0
        %808 = vmatprep.subr.bf16.mxu0 0
        %809 = vmatpush1.bf16.msra.mxu0 %v778
        %810 = vmatprep.subr.bf16.mxu0 0
        %811 = vmatpush1.bf16.msra.mxu0 %v779
        %812 = vmatprep.subr.bf16.mxu0 0
        %813 = vmatpush1.bf16.msra.mxu0 %v780
        %814 = vmatprep.subr.bf16.mxu0 0
        %815 = vmatpush1.bf16.msra.mxu0 %v781
        %816 = vmatprep.subr.bf16.mxu0 0
        %817 = vmatpush1.bf16.msra.mxu0 %v782
        %818 = vmatprep.subr.bf16.mxu0 0
        %819 = vmatpush1.bf16.msra.mxu0 %v783
        %820 = vmatprep.subr.bf16.mxu0 0
        %821 = vmatpush1.bf16.msra.mxu0 %v784
        %822 = vmatprep.subr.bf16.mxu0 0
        %823 = vmatpush1.bf16.msra.mxu0 %v785
        %824 = vmatprep.subr.bf16.mxu0 0
        %825 = vmatpush1.bf16.msra.mxu0 %v786
        %826 = vmatprep.subr.bf16.mxu0 0
        %827 = vmatpush1.bf16.msra.mxu0 0
        %828 = vmatprep.subr.bf16.mxu0 0
        %829 = vmatpush1.bf16.msra.mxu0 0
        %830 = vmatprep.subr.bf16.mxu0 0
        %831 = vmatpush1.bf16.msra.mxu0 0
        %832 = vmatprep.subr.bf16.mxu0 0
        %833 = vmatpush1.bf16.msra.mxu0 0
        %834 = vmatprep.subr.bf16.mxu0 0
        %835 = vmatpush1.bf16.msra.mxu0 0
        %836 = vmatprep.subr.bf16.mxu0 0
        %837 = vmatpush1.bf16.msra.mxu0 0
        %838 = vmatprep.subr.bf16.mxu0 0
        %839 = vmatpush1.bf16.msra.mxu0 0
        %840 = vmatprep.mubr.bf16.mxu0 %v797
        %841 = vmatmul.mubr.bf16.gmra.mrb[0].mxu0 %v716
        %v842 = vpop.f32.mrb[0].mxu0
        %v843 = vadd.f32 0.0, %v842
        %v844 = vpop.f32.mrb[0].mxu0
        %v845 = vpop.f32.mrb[0].mxu0
        %v846 = vadd.f32 0.0, %v845
        %v847 = vpop.f32.mrb[0].mxu0
        %848 = vmatprep.mubr.bf16.mxu0 %v800
        %849 = vmatmul.mubr.bf16.gmra.mrb[0].mxu0 %v718
        %v850 = vpop.f32.mrb[0].mxu0
        %v851 = vadd.f32 0.0, %v850
        %v852 = vpop.f32.mrb[0].mxu0
        %v853 = vpop.f32.mrb[0].mxu0
        %v854 = vadd.f32 0.0, %v853
        %v855 = vpop.f32.mrb[0].mxu0
        %856 = vmatprep.mubr.bf16.mxu0 %v803
        %857 = vmatmul.mubr.bf16.gmra.mrb[0].mxu0 %v720
        %v858 = vpop.f32.mrb[0].mxu0
        %v859 = vadd.f32 0.0, %v858
        %v860 = vpop.f32.mrb[0].mxu0
        %v861 = vpop.f32.mrb[0].mxu0
        %v862 = vadd.f32 0.0, %v861
        %v863 = vpop.f32.mrb[0].mxu0
        %864 = vmatprep.mubr.bf16.mxu0 %v806
        %865 = vmatmul.mubr.bf16.gmra.mrb[0].mxu0 %v722
        %v866 = vpop.f32.mrb[0].mxu0
        %v867 = vadd.f32 0.0, %v866
        %v868 = vpop.f32.mrb[0].mxu0
        %v869 = vpop.f32.mrb[0].mxu0
        %v870 = vadd.f32 0.0, %v869
        %v871 = vpop.f32.mrb[0].mxu0
        %872 = vdwg.mxu0
        %v874 = vlaneseq
        %v875 = vshrl.u32 %v874, 7
        %v876 = vsub.s32 0, %v875
        %v877 = vrot.slane %v280, %v876
        %v879 = vmul.f32 %v843, %v877
        %v880 = vmul.f32 %v846, %v877
        %v881 = vmul.f32 %v851, %v877
        %v882 = vmul.f32 %v854, %v877
        %v883 = vmul.f32 %v859, %v877
        %v884 = vmul.f32 %v862, %v877
        %v885 = vmul.f32 %v867, %v877
        %v886 = vmul.f32 %v870, %v877
        %v888 = vlaneseq
        %v889 = vshrl.u32 %v888, 7
        %v890 = vsub.s32 0, %v889
        %v891 = vrot.slane %v281, %v890
        %v893 = vadd.f32 %v879, %v891
        %v894 = vadd.f32 %v880, %v891
        %v895 = vadd.f32 %v881, %v891
        %v896 = vadd.f32 %v882, %v891
        %v897 = vadd.f32 %v883, %v891
        %v898 = vadd.f32 %v884, %v891
        %v899 = vadd.f32 %v885, %v891
        %v900 = vadd.f32 %v886, %v891
        %v901 = vmax.f32 %v893, 0.0
        %v902 = vmax.f32 %v894, 0.0
        %v903 = vmax.f32 %v895, 0.0
        %v904 = vmax.f32 %v896, 0.0
        %v905 = vmax.f32 %v897, 0.0
        %v906 = vmax.f32 %v898, 0.0
        %v907 = vmax.f32 %v899, 0.0
        %v908 = vmax.f32 %v900, 0.0
        %909 = vst.msk [vmem:[#allocation3] sm:$0xff] %vm282, 0.0
        %910 = vst.msk [vmem:[#allocation3 + $0x8] sm:$0x3] %vm284, 0.0
        %911 = vst.msk [vmem:[#allocation3 + $0x10] sm:$0xff] %vm282, 0.0
        %912 = vst.msk [vmem:[#allocation3 + $0x18] sm:$0x3] %vm284, 0.0
        %913 = vst.msk [vmem:[#allocation3 + $0x20] sm:$0xff] %vm282, 0.0
        %914 = vst.msk [vmem:[#allocation3 + $0x28] sm:$0x3] %vm284, 0.0
        %915 = vst.msk [vmem:[#allocation3 + $0x30] sm:$0xff] %vm282, 0.0
        %916 = vst.msk [vmem:[#allocation3 + $0x38] sm:$0x3] %vm284, 0.0
        %917 = vst.msk [vmem:[#allocation3 + $0x40] sm:$0xff] %vm282, 0.0
        %918 = vst.msk [vmem:[#allocation3 + $0x48] sm:$0x3] %vm284, 0.0
        %919 = vst.msk [vmem:[#allocation3 + $0x50] sm:$0xff] %vm282, 0.0
        %920 = vst.msk [vmem:[#allocation3 + $0x58] sm:$0x3] %vm284, 0.0
        %921 = vst.msk [vmem:[#allocation3 + $0x60] sm:$0xff] %vm282, 0.0
        %922 = vst.msk [vmem:[#allocation3 + $0x68] sm:$0x3] %vm284, 0.0
        %923 = vst.msk [vmem:[#allocation3 + $0x70] sm:$0xff] %vm282, 0.0
        %924 = vst.msk [vmem:[#allocation3 + $0x78] sm:$0x3] %vm284, 0.0
        %925 = vst.msk [vmem:[#allocation3 + $0x80] sm:$0xff] %vm282, 0.0
        %926 = vst.msk [vmem:[#allocation3 + $0x88] sm:$0x3] %vm284, 0.0
        %927 = vst.msk [vmem:[#allocation3 + $0x90] sm:$0xff] %vm282, 0.0
        %928 = vst.msk [vmem:[#allocation3 + $0x98] sm:$0x3] %vm284, 0.0
        %s929 = scalar_lea.vmem [#allocation3], 16
        %930 = vst.msk [vmem:[%s929 + $0x1] sm:$0xff] %vm282, %v901
        %931 = vst.msk [vmem:[%s929 + $0x11] sm:$0xff] %vm282, %v902
        %932 = vst.msk [vmem:[%s929 + $0x21] sm:$0xff] %vm282, %v903
        %933 = vst.msk [vmem:[%s929 + $0x31] sm:$0xff] %vm282, %v904
        %934 = vst.msk [vmem:[%s929 + $0x41] sm:$0xff] %vm282, %v905
        %935 = vst.msk [vmem:[%s929 + $0x51] sm:$0xff] %vm282, %v906
        %936 = vst.msk [vmem:[%s929 + $0x61] sm:$0xff] %vm282, %v907
        %937 = vst.msk [vmem:[%s929 + $0x71] sm:$0xff] %vm282, %v908
        %v938 = vld [vmem:[#allocation3] sm:$0xff]
        %v939 = vld [vmem:[#allocation3 + $0x10] sm:$0xff]
        %v940 = vld [vmem:[#allocation3 + $0x20] sm:$0xff]
        %v941 = vld [vmem:[#allocation3 + $0x30] sm:$0xff]
        %v942 = vld [vmem:[#allocation3 + $0x40] sm:$0xff]
        %v943 = vld [vmem:[#allocation3 + $0x50] sm:$0xff]
        %v944 = vld [vmem:[#allocation3 + $0x60] sm:$0xff]
        %v945 = vld [vmem:[#allocation3 + $0x70] sm:$0xff]
        %v946 = vld [vmem:[#allocation3 + $0x1] sm:$0xff]
        %v947 = vld [vmem:[#allocation3 + $0x11] sm:$0xff]
        %v948 = vld [vmem:[#allocation3 + $0x21] sm:$0xff]
        %v949 = vld [vmem:[#allocation3 + $0x31] sm:$0xff]
        %v950 = vld [vmem:[#allocation3 + $0x41] sm:$0xff]
        %v951 = vld [vmem:[#allocation3 + $0x51] sm:$0xff]
        %v952 = vld [vmem:[#allocation3 + $0x61] sm:$0xff]
        %v953 = vld [vmem:[#allocation3 + $0x71] sm:$0xff]
        %v954 = vld [vmem:[#allocation3 + $0x2] sm:$0xff]
        %v955 = vld [vmem:[#allocation3 + $0x12] sm:$0xff]
        %v956 = vld [vmem:[#allocation3 + $0x22] sm:$0xff]
        %v957 = vld [vmem:[#allocation3 + $0x32] sm:$0xff]
        %v958 = vld [vmem:[#allocation3 + $0x42] sm:$0xff]
        %v959 = vld [vmem:[#allocation3 + $0x52] sm:$0xff]
        %v960 = vld [vmem:[#allocation3 + $0x62] sm:$0xff]
        %v961 = vld [vmem:[#allocation3 + $0x72] sm:$0xff]
        %v962 = vld [vmem:[%s929] sm:$0xff]
        %v963 = vld [vmem:[%s929 + $0x10] sm:$0xff]
        %v964 = vld [vmem:[%s929 + $0x20] sm:$0xff]
        %v965 = vld [vmem:[%s929 + $0x30] sm:$0xff]
        %v966 = vld [vmem:[%s929 + $0x40] sm:$0xff]
        %v967 = vld [vmem:[%s929 + $0x50] sm:$0xff]
        %v968 = vld [vmem:[%s929 + $0x60] sm:$0xff]
        %v969 = vld [vmem:[%s929 + $0x70] sm:$0xff]
        %v970 = vld [vmem:[%s929 + $0x1] sm:$0xff]
        %v971 = vld [vmem:[%s929 + $0x11] sm:$0xff]
        %v972 = vld [vmem:[%s929 + $0x21] sm:$0xff]
        %v973 = vld [vmem:[%s929 + $0x31] sm:$0xff]
        %v974 = vld [vmem:[%s929 + $0x41] sm:$0xff]
        %v975 = vld [vmem:[%s929 + $0x51] sm:$0xff]
        %v976 = vld [vmem:[%s929 + $0x61] sm:$0xff]
        %v977 = vld [vmem:[%s929 + $0x71] sm:$0xff]
        %v978 = vld [vmem:[%s929 + $0x2] sm:$0xff]
        %v979 = vld [vmem:[%s929 + $0x12] sm:$0xff]
        %v980 = vld [vmem:[%s929 + $0x22] sm:$0xff]
        %v981 = vld [vmem:[%s929 + $0x32] sm:$0xff]
        %v982 = vld [vmem:[%s929 + $0x42] sm:$0xff]
        %v983 = vld [vmem:[%s929 + $0x52] sm:$0xff]
        %v984 = vld [vmem:[%s929 + $0x62] sm:$0xff]
        %v985 = vld [vmem:[%s929 + $0x72] sm:$0xff]
        %s986 = scalar_lea.vmem [#allocation3], 32
        %v987 = vld [vmem:[%s986] sm:$0xff]
        %v988 = vld [vmem:[%s986 + $0x10] sm:$0xff]
        %v989 = vld [vmem:[%s986 + $0x20] sm:$0xff]
        %v990 = vld [vmem:[%s986 + $0x30] sm:$0xff]
        %v991 = vld [vmem:[%s986 + $0x40] sm:$0xff]
        %v992 = vld [vmem:[%s986 + $0x50] sm:$0xff]
        %v993 = vld [vmem:[%s986 + $0x60] sm:$0xff]
        %v994 = vld [vmem:[%s986 + $0x70] sm:$0xff]
        %v995 = vld [vmem:[%s986 + $0x1] sm:$0xff]
        %v996 = vld [vmem:[%s986 + $0x11] sm:$0xff]
        %v997 = vld [vmem:[%s986 + $0x21] sm:$0xff]
        %v998 = vld [vmem:[%s986 + $0x31] sm:$0xff]
        %v999 = vld [vmem:[%s986 + $0x41] sm:$0xff]
        %v1000 = vld [vmem:[%s986 + $0x51] sm:$0xff]
        %v1001 = vld [vmem:[%s986 + $0x61] sm:$0xff]
        %v1002 = vld [vmem:[%s986 + $0x71] sm:$0xff]
        %v1003 = vld [vmem:[%s986 + $0x2] sm:$0xff]
        %v1004 = vld [vmem:[%s986 + $0x12] sm:$0xff]
        %v1005 = vld [vmem:[%s986 + $0x22] sm:$0xff]
        %v1006 = vld [vmem:[%s986 + $0x32] sm:$0xff]
        %v1007 = vld [vmem:[%s986 + $0x42] sm:$0xff]
        %v1008 = vld [vmem:[%s986 + $0x52] sm:$0xff]
        %v1009 = vld [vmem:[%s986 + $0x62] sm:$0xff]
        %v1010 = vld [vmem:[%s986 + $0x72] sm:$0xff]
        %1019 = vrot.lane.b32.xlu0 %v946, 16
        %v1020 = vpop.permute.xlu0 %1019
        %1021 = vrot.lane.b32.xlu0 %v947, 16
        %v1022 = vpop.permute.xlu0 %1021
        %1023 = vrot.lane.b32.xlu0 %v948, 16
        %v1024 = vpop.permute.xlu0 %1023
        %1025 = vrot.lane.b32.xlu0 %v949, 16
        %v1026 = vpop.permute.xlu0 %1025
        %1027 = vrot.lane.b32.xlu0 %v950, 16
        %v1028 = vpop.permute.xlu0 %1027
        %1029 = vrot.lane.b32.xlu0 %v951, 16
        %v1030 = vpop.permute.xlu0 %1029
        %1031 = vrot.lane.b32.xlu0 %v952, 16
        %v1032 = vpop.permute.xlu0 %1031
        %1033 = vrot.lane.b32.xlu0 %v953, 16
        %v1034 = vpop.permute.xlu0 %1033
        %1051 = vrot.lane.b32.xlu0 %v954, 32
        %v1052 = vpop.permute.xlu0 %1051
        %1053 = vrot.lane.b32.xlu0 %v955, 32
        %v1054 = vpop.permute.xlu0 %1053
        %1055 = vrot.lane.b32.xlu0 %v956, 32
        %v1056 = vpop.permute.xlu0 %1055
        %1057 = vrot.lane.b32.xlu0 %v957, 32
        %v1058 = vpop.permute.xlu0 %1057
        %1059 = vrot.lane.b32.xlu0 %v958, 32
        %v1060 = vpop.permute.xlu0 %1059
        %1061 = vrot.lane.b32.xlu0 %v959, 32
        %v1062 = vpop.permute.xlu0 %1061
        %1063 = vrot.lane.b32.xlu0 %v960, 32
        %v1064 = vpop.permute.xlu0 %1063
        %1065 = vrot.lane.b32.xlu0 %v961, 32
        %v1066 = vpop.permute.xlu0 %1065
        %1083 = vrot.lane.b32.xlu0 %v962, 48
        %v1084 = vpop.permute.xlu0 %1083
        %1085 = vrot.lane.b32.xlu0 %v963, 48
        %v1086 = vpop.permute.xlu0 %1085
        %1087 = vrot.lane.b32.xlu0 %v964, 48
        %v1088 = vpop.permute.xlu0 %1087
        %1089 = vrot.lane.b32.xlu0 %v965, 48
        %v1090 = vpop.permute.xlu0 %1089
        %1091 = vrot.lane.b32.xlu0 %v966, 48
        %v1092 = vpop.permute.xlu0 %1091
        %1093 = vrot.lane.b32.xlu0 %v967, 48
        %v1094 = vpop.permute.xlu0 %1093
        %1095 = vrot.lane.b32.xlu0 %v968, 48
        %v1096 = vpop.permute.xlu0 %1095
        %1097 = vrot.lane.b32.xlu0 %v969, 48
        %v1098 = vpop.permute.xlu0 %1097
        %1115 = vrot.lane.b32.xlu0 %v970, 64
        %v1116 = vpop.permute.xlu0 %1115
        %1117 = vrot.lane.b32.xlu0 %v971, 64
        %v1118 = vpop.permute.xlu0 %1117
        %1119 = vrot.lane.b32.xlu0 %v972, 64
        %v1120 = vpop.permute.xlu0 %1119
        %1121 = vrot.lane.b32.xlu0 %v973, 64
        %v1122 = vpop.permute.xlu0 %1121
        %1123 = vrot.lane.b32.xlu0 %v974, 64
        %v1124 = vpop.permute.xlu0 %1123
        %1125 = vrot.lane.b32.xlu0 %v975, 64
        %v1126 = vpop.permute.xlu0 %1125
        %1127 = vrot.lane.b32.xlu0 %v976, 64
        %v1128 = vpop.permute.xlu0 %1127
        %1129 = vrot.lane.b32.xlu0 %v977, 64
        %v1130 = vpop.permute.xlu0 %1129
        %1147 = vrot.lane.b32.xlu0 %v978, 80
        %v1148 = vpop.permute.xlu0 %1147
        %1149 = vrot.lane.b32.xlu0 %v979, 80
        %v1150 = vpop.permute.xlu0 %1149
        %1151 = vrot.lane.b32.xlu0 %v980, 80
        %v1152 = vpop.permute.xlu0 %1151
        %1153 = vrot.lane.b32.xlu0 %v981, 80
        %v1154 = vpop.permute.xlu0 %1153
        %1155 = vrot.lane.b32.xlu0 %v982, 80
        %v1156 = vpop.permute.xlu0 %1155
        %1157 = vrot.lane.b32.xlu0 %v983, 80
        %v1158 = vpop.permute.xlu0 %1157
        %1159 = vrot.lane.b32.xlu0 %v984, 80
        %v1160 = vpop.permute.xlu0 %1159
        %1161 = vrot.lane.b32.xlu0 %v985, 80
        %v1162 = vpop.permute.xlu0 %1161
        %1179 = vrot.lane.b32.xlu0 %v987, 96
        %v1180 = vpop.permute.xlu0 %1179
        %1181 = vrot.lane.b32.xlu0 %v988, 96
        %v1182 = vpop.permute.xlu0 %1181
        %1183 = vrot.lane.b32.xlu0 %v989, 96
        %v1184 = vpop.permute.xlu0 %1183
        %1185 = vrot.lane.b32.xlu0 %v990, 96
        %v1186 = vpop.permute.xlu0 %1185
        %1187 = vrot.lane.b32.xlu0 %v991, 96
        %v1188 = vpop.permute.xlu0 %1187
        %1189 = vrot.lane.b32.xlu0 %v992, 96
        %v1190 = vpop.permute.xlu0 %1189
        %1191 = vrot.lane.b32.xlu0 %v993, 96
        %v1192 = vpop.permute.xlu0 %1191
        %1193 = vrot.lane.b32.xlu0 %v994, 96
        %v1194 = vpop.permute.xlu0 %1193
        %1211 = vrot.lane.b32.xlu0 %v995, 112
        %v1212 = vpop.permute.xlu0 %1211
        %1213 = vrot.lane.b32.xlu0 %v996, 112
        %v1214 = vpop.permute.xlu0 %1213
        %1215 = vrot.lane.b32.xlu0 %v997, 112
        %v1216 = vpop.permute.xlu0 %1215
        %1217 = vrot.lane.b32.xlu0 %v998, 112
        %v1218 = vpop.permute.xlu0 %1217
        %1219 = vrot.lane.b32.xlu0 %v999, 112
        %v1220 = vpop.permute.xlu0 %1219
        %1221 = vrot.lane.b32.xlu0 %v1000, 112
        %v1222 = vpop.permute.xlu0 %1221
        %1223 = vrot.lane.b32.xlu0 %v1001, 112
        %v1224 = vpop.permute.xlu0 %1223
        %1225 = vrot.lane.b32.xlu0 %v1002, 112
        %v1226 = vpop.permute.xlu0 %1225
        %v1235 = vsel %vm282, %v938, %v1020
        %v1236 = vsel %vm282, %v939, %v1022
        %v1237 = vsel %vm282, %v940, %v1024
        %v1238 = vsel %vm282, %v941, %v1026
        %v1239 = vsel %vm282, %v942, %v1028
        %v1240 = vsel %vm282, %v943, %v1030
        %v1241 = vsel %vm282, %v944, %v1032
        %v1242 = vsel %vm282, %v945, %v1034
        %v1243 = vsel %vm662, %v1235, %v1052
        %v1244 = vsel %vm662, %v1236, %v1054
        %v1245 = vsel %vm662, %v1237, %v1056
        %v1246 = vsel %vm662, %v1238, %v1058
        %v1247 = vsel %vm662, %v1239, %v1060
        %v1248 = vsel %vm662, %v1240, %v1062
        %v1249 = vsel %vm662, %v1241, %v1064
        %v1250 = vsel %vm662, %v1242, %v1066
        %v1251 = vsel %vm671, %v1243, %v1084
        %v1252 = vsel %vm671, %v1244, %v1086
        %v1253 = vsel %vm671, %v1245, %v1088
        %v1254 = vsel %vm671, %v1246, %v1090
        %v1255 = vsel %vm671, %v1247, %v1092
        %v1256 = vsel %vm671, %v1248, %v1094
        %v1257 = vsel %vm671, %v1249, %v1096
        %v1258 = vsel %vm671, %v1250, %v1098
        %v1259 = vsel %vm680, %v1251, %v1116
        %v1260 = vsel %vm680, %v1252, %v1118
        %v1261 = vsel %vm680, %v1253, %v1120
        %v1262 = vsel %vm680, %v1254, %v1122
        %v1263 = vsel %vm680, %v1255, %v1124
        %v1264 = vsel %vm680, %v1256, %v1126
        %v1265 = vsel %vm680, %v1257, %v1128
        %v1266 = vsel %vm680, %v1258, %v1130
        %v1267 = vsel %vm689, %v1259, %v1148
        %v1268 = vsel %vm689, %v1260, %v1150
        %v1269 = vsel %vm689, %v1261, %v1152
        %v1270 = vsel %vm689, %v1262, %v1154
        %v1271 = vsel %vm689, %v1263, %v1156
        %v1272 = vsel %vm689, %v1264, %v1158
        %v1273 = vsel %vm689, %v1265, %v1160
        %v1274 = vsel %vm689, %v1266, %v1162
        %v1275 = vsel %vm698, %v1267, %v1180
        %v1276 = vsel %vm698, %v1268, %v1182
        %v1277 = vsel %vm698, %v1269, %v1184
        %v1278 = vsel %vm698, %v1270, %v1186
        %v1279 = vsel %vm698, %v1271, %v1188
        %v1280 = vsel %vm698, %v1272, %v1190
        %v1281 = vsel %vm698, %v1273, %v1192
        %v1282 = vsel %vm698, %v1274, %v1194
        %v1283 = vsel %vm707, %v1275, %v1212
        %v1284 = vsel %vm707, %v1276, %v1214
        %v1285 = vsel %vm707, %v1277, %v1216
        %v1286 = vsel %vm707, %v1278, %v1218
        %v1287 = vsel %vm707, %v1279, %v1220
        %v1288 = vsel %vm707, %v1280, %v1222
        %v1289 = vsel %vm707, %v1281, %v1224
        %v1290 = vsel %vm707, %v1282, %v1226
        %v1291 = vpack.c.bf16 %v1284, %v1283
        %v1292 = vpack.c.bf16 %v1004, %v1003
        %v1293 = vpack.c.bf16 %v1286, %v1285
        %v1294 = vpack.c.bf16 %v1006, %v1005
        %v1295 = vpack.c.bf16 %v1288, %v1287
        %v1296 = vpack.c.bf16 %v1008, %v1007
        %v1297 = vpack.c.bf16 %v1290, %v1289
        %v1298 = vpack.c.bf16 %v1010, %v1009
        %v1299 = vld [vmem:[%s6] sm:$0xf]
        %v1300 = vld [vmem:[%s6 + $0x4] sm:$0xf]
        %v1301 = vld [vmem:[%s6 + $0x8] sm:$0xf]
        %v1302 = vld [vmem:[%s6 + $0xc] sm:$0xf]
        %v1303 = vld [vmem:[%s6 + $0x10] sm:$0xf]
        %v1304 = vld [vmem:[%s6 + $0x14] sm:$0xf]
        %v1305 = vld [vmem:[%s6 + $0x18] sm:$0xf]
        %v1306 = vld [vmem:[%s6 + $0x1c] sm:$0xf]
        %v1307 = vld [vmem:[%s6 + $0x20] sm:$0xf]
        %v1308 = vld [vmem:[%s6 + $0x24] sm:$0xf]
        %v1309 = vld [vmem:[%s6 + $0x28] sm:$0xf]
        %v1310 = vld [vmem:[%s6 + $0x2c] sm:$0xf]
        %v1311 = vld [vmem:[%s6 + $0x30] sm:$0xf]
        %v1312 = vld [vmem:[%s6 + $0x34] sm:$0xf]
        %v1313 = vld [vmem:[%s6 + $0x38] sm:$0xf]
        %v1314 = vld [vmem:[%s6 + $0x3c] sm:$0xf]
        %v1315 = vld [vmem:[%s6 + $0x40] sm:$0xf]
        %v1316 = vld [vmem:[%s6 + $0x44] sm:$0xf]
        %v1317 = vld [vmem:[%s276] sm:$0xff]
        %v1318 = vld [vmem:[%s276 + $0x8] sm:$0xff]
        %v1319 = vld [vmem:[%s276 + $0x10] sm:$0xff]
        %v1320 = vld [vmem:[%s276 + $0x18] sm:$0xff]
        %v1321 = vld [vmem:[%s276 + $0x20] sm:$0xff]
        %v1322 = vld [vmem:[%s276 + $0x28] sm:$0xff]
        %v1323 = vld [vmem:[%s276 + $0x30] sm:$0xff]
        %v1324 = vld [vmem:[%s276 + $0x38] sm:$0xff]
        %v1343 = vunpack.c.l.b16 %v1299
        %v1344 = vunpack.c.l.b16 %v1300
        %v1345 = vunpack.c.l.b16 %v1301
        %v1346 = vunpack.c.l.b16 %v1302
        %v1347 = vunpack.c.l.b16 %v1303
        %v1348 = vunpack.c.l.b16 %v1304
        %v1349 = vunpack.c.l.b16 %v1305
        %v1350 = vunpack.c.l.b16 %v1306
        %v1351 = vunpack.c.l.b16 %v1307
        %v1352 = vunpack.c.l.b16 %v1308
        %v1353 = vunpack.c.l.b16 %v1309
        %v1354 = vunpack.c.l.b16 %v1310
        %v1355 = vunpack.c.l.b16 %v1311
        %v1356 = vunpack.c.l.b16 %v1312
        %v1357 = vunpack.c.l.b16 %v1313
        %v1358 = vunpack.c.l.b16 %v1314
        %v1359 = vunpack.c.l.b16 %v1315
        %v1360 = vunpack.c.l.b16 %v1316
        %v1361 = vpack.c.b16 %v1344, %v1343
        %v1362 = vpack.c.b16 %v1346, %v1345
        %v1363 = vpack.c.b16 %v1348, %v1347
        %v1364 = vpack.c.b16 %v1350, %v1349
        %v1365 = vpack.c.b16 %v1352, %v1351
        %v1366 = vpack.c.b16 %v1354, %v1353
        %v1367 = vpack.c.b16 %v1356, %v1355
        %v1368 = vpack.c.b16 %v1358, %v1357
        %v1369 = vpack.c.b16 %v1360, %v1359
        %v1380 = vsel %vm282, %v1292, 0
        %v1383 = vsel %vm282, %v1294, 0
        %v1386 = vsel %vm282, %v1296, 0
        %v1389 = vsel %vm282, %v1298, 0
        %1391 = vmatprep.subr.bf16.mxu0 0
        %1392 = vmatpush1.bf16.msra.mxu0 %v1361
        %1393 = vmatprep.subr.bf16.mxu0 0
        %1394 = vmatpush1.bf16.msra.mxu0 %v1362
        %1395 = vmatprep.subr.bf16.mxu0 0
        %1396 = vmatpush1.bf16.msra.mxu0 %v1363
        %1397 = vmatprep.subr.bf16.mxu0 0
        %1398 = vmatpush1.bf16.msra.mxu0 %v1364
        %1399 = vmatprep.subr.bf16.mxu0 0
        %1400 = vmatpush1.bf16.msra.mxu0 %v1365
        %1401 = vmatprep.subr.bf16.mxu0 0
        %1402 = vmatpush1.bf16.msra.mxu0 %v1366
        %1403 = vmatprep.subr.bf16.mxu0 0
        %1404 = vmatpush1.bf16.msra.mxu0 %v1367
        %1405 = vmatprep.subr.bf16.mxu0 0
        %1406 = vmatpush1.bf16.msra.mxu0 %v1368
        %1407 = vmatprep.subr.bf16.mxu0 0
        %1408 = vmatpush1.bf16.msra.mxu0 %v1369
        %1409 = vmatprep.subr.bf16.mxu0 0
        %1410 = vmatpush1.bf16.msra.mxu0 0
        %1411 = vmatprep.subr.bf16.mxu0 0
        %1412 = vmatpush1.bf16.msra.mxu0 0
        %1413 = vmatprep.subr.bf16.mxu0 0
        %1414 = vmatpush1.bf16.msra.mxu0 0
        %1415 = vmatprep.subr.bf16.mxu0 0
        %1416 = vmatpush1.bf16.msra.mxu0 0
        %1417 = vmatprep.subr.bf16.mxu0 0
        %1418 = vmatpush1.bf16.msra.mxu0 0
        %1419 = vmatprep.subr.bf16.mxu0 0
        %1420 = vmatpush1.bf16.msra.mxu0 0
        %1421 = vmatprep.subr.bf16.mxu0 0
        %1422 = vmatpush1.bf16.msra.mxu0 0
        %1423 = vmatprep.mubr.bf16.mxu0 %v1380
        %1424 = vmatmul.mubr.bf16.gmra.mrb[0].mxu0 %v1291
        %v1425 = vpop.f32.mrb[0].mxu0
        %v1426 = vadd.f32 %v1317, %v1425
        %v1427 = vpop.f32.mrb[0].mxu0
        %v1428 = vpop.f32.mrb[0].mxu0
        %v1429 = vadd.f32 %v1318, %v1428
        %v1430 = vpop.f32.mrb[0].mxu0
        %1431 = vmatprep.mubr.bf16.mxu0 %v1383
        %1432 = vmatmul.mubr.bf16.gmra.mrb[0].mxu0 %v1293
        %v1433 = vpop.f32.mrb[0].mxu0
        %v1434 = vadd.f32 %v1319, %v1433
        %v1435 = vpop.f32.mrb[0].mxu0
        %v1436 = vpop.f32.mrb[0].mxu0
        %v1437 = vadd.f32 %v1320, %v1436
        %v1438 = vpop.f32.mrb[0].mxu0
        %1439 = vmatprep.mubr.bf16.mxu0 %v1386
        %1440 = vmatmul.mubr.bf16.gmra.mrb[0].mxu0 %v1295
        %v1441 = vpop.f32.mrb[0].mxu0
        %v1442 = vadd.f32 %v1321, %v1441
        %v1443 = vpop.f32.mrb[0].mxu0
        %v1444 = vpop.f32.mrb[0].mxu0
        %v1445 = vadd.f32 %v1322, %v1444
        %v1446 = vpop.f32.mrb[0].mxu0
        %1447 = vmatprep.mubr.bf16.mxu0 %v1389
        %1448 = vmatmul.mubr.bf16.gmra.mrb[0].mxu0 %v1297
        %v1449 = vpop.f32.mrb[0].mxu0
        %v1450 = vadd.f32 %v1323, %v1449
        %v1451 = vpop.f32.mrb[0].mxu0
        %v1452 = vpop.f32.mrb[0].mxu0
        %v1453 = vadd.f32 %v1324, %v1452
        %v1454 = vpop.f32.mrb[0].mxu0
        %1455 = vdwg.mxu0
        %1456 = vst.msk [vmem:[%s271] sm:$0xff] %vm282, %v1426
        %1457 = vst.msk [vmem:[%s271 + $0x8] sm:$0xff] %vm282, %v1429
        %1458 = vst.msk [vmem:[%s271 + $0x10] sm:$0xff] %vm282, %v1434
        %1459 = vst.msk [vmem:[%s271 + $0x18] sm:$0xff] %vm282, %v1437
        %1460 = vst.msk [vmem:[%s271 + $0x20] sm:$0xff] %vm282, %v1442
        %1461 = vst.msk [vmem:[%s271 + $0x28] sm:$0xff] %vm282, %v1445
        %1462 = vst.msk [vmem:[%s271 + $0x30] sm:$0xff] %vm282, %v1450
        %1463 = vst.msk [vmem:[%s271 + $0x38] sm:$0xff] %vm282, %v1453
        %s1464 = sand.u32 %s181, 1
        %s1465 = scalar_lea.sflag [#allocation5], %s1464
        %s1466 = sand.u32 %s181, 1
        %s1467 = smul.addr %s1466, 64
        %s1468 = scalar_lea.vmem [#allocation4], %s1467
        // Predicated region
        $region49: #{wrn_network_block.3} parent=47 // pred_check
          %p1469 = pneg %p191
        $region50: #{wrn_network_block.3} parent=47 // pred_check_branch
          %1471 = sbr.rel (%p1469) target = $region52
        $region51: #{wrn_network_block.3} parent=47 // pred_region
          %s1473 = ssub.s32 1024, 1024
          %1474 = vsyncadd %s1465, %s1473
          %s1475 = smul.addr %s21, 8
          %s1476 = smul.addr %s1475, 128
          %s1477 = scalar_lea.hbm %s7, %s1476
          %s1478 = sshll.u32 %s1468, 4
          %s1479 = int_to_ptr.vmem [resolvable:$true] %s1478
          %1484 = dma.vmem_to_hbm [thread:$0]  %s1479, 1024, %s1477, %s1465, 128, 128, 8
        $region52: #{wrn_network_block.3} parent=47 // pred_fallthru
          _
      $region48: #{wrn_network_block.3} parent=5 // pred_fallthru
        _
      %p1485 = scmp.le.s32.totalorder 2, %s16
      // Predicated region
      $region53: #{wrn_network_block.3} parent=5 // pred_check
        %p1486 = pneg %p1485
      $region54: #{wrn_network_block.3} parent=5 // pred_check_branch
        %1488 = sbr.rel (%p1486) target = $region56
      $region55: #{wrn_network_block.3} parent=5 // pred_region
        %s1489 = ssub.s32 %s16, 2
        // Predicated region
        $region57: #{wrn_network_block.3} parent=55 // pred_check
          %p1490 = pneg %p197
        $region58: #{wrn_network_block.3} parent=55 // pred_check_branch
          %1492 = sbr.rel (%p1490) target = $region60
        $region59: #{wrn_network_block.3} parent=55 // pred_region
          %s1493 = sand.u32 %s182, 1
          %s1494 = scalar_lea.sflag [#allocation5], %s1493
          %s1495 = sand.u32 %s182, 1
          %s1496 = smul.addr %s1495, 64
          %s1497 = scalar_lea.vmem [#allocation4], %s1496
          %1498 = dma.done %s1494, 1024
        $region60: #{wrn_network_block.3} parent=55 // pred_fallthru
          _
      $region56: #{wrn_network_block.3} parent=5 // pred_fallthru
        _
    $region6: #{wrn_network_block.3} parent=1 // loop_footer
      %s20 = sadd.s32 1, %s16
    $region7: #{wrn_network_block.3} parent=1 // loop_footer_branch
      %15 = sbr.rel target = $region3
    $region8: #{wrn_network_block.3} parent=1 // loop_exit
      _
    %1499 = vsyncpa [#allocation5], 1
    %s1500 = scalar_lea.sflag [#allocation5], 1
    %1501 = vsyncpa %s1500, 1

</llo_original>
